<compile_context>
chip_gen: v6e
topology: v6e:2x2x1
jax: 0.10.0
libtpu: 0.0.40
codegen_flags: <defaults>
</compile_context>

<pallas_src>
import functools

import jax
import jax.numpy as jnp
from jax.experimental import pallas as pl
from jax.experimental.pallas import tpu as pltpu


LANE = 128  # TPU lane width: keep every matmul dim a multiple of this.


def _round_up(x, m):
    return ((x + m - 1) // m) * m


def _pad_axis(a, axis, target):
    pad = target - a.shape[axis]
    if pad == 0:
        return a
    widths = [(0, 0)] * a.ndim
    widths[axis] = (0, pad)
    return jnp.pad(a, widths)


def autoencoder_kernel(x_ref,
                       w1_ref, b1_ref, w2_ref, b2_ref, w3_ref, b3_ref,
                       w4_ref, b4_ref, w5_ref, b5_ref, w6_ref, b6_ref,
                       out_ref):
    """Fused MLP autoencoder forward for one batch tile.

    encoder: Linear(dim_in,512) -> ReLU -> Linear(512,256) -> ReLU
             -> Linear(256,dim_latent)
    decoder: Linear(dim_latent,256) -> ReLU -> Linear(256,512) -> ReLU
             -> Linear(512,dim_in)

    Weights are bf16 (MXU-native); accumulation, bias add and ReLU stay f32.
    Bias+ReLU stay fused in one expression so they co-issue as VPU filler
    under the MXU.
    """

    def dense(h, w_ref, b_ref, relu):
        # bf16 operands, f32 accumulation on the MXU.
        y = jnp.dot(h.astype(jnp.bfloat16), w_ref[...],
                    preferred_element_type=jnp.float32)
        y = y + b_ref[...]           # (1, out) bias broadcasts over the tile
        if relu:
            y = jnp.maximum(y, 0.0)
        return y                     # f32

    x = x_ref[...]                                   # (tm, d_in_p) f32
    # encoder
    h = dense(x, w1_ref, b1_ref, relu=True)          # (tm, 512)
    h = dense(h, w2_ref, b2_ref, relu=True)          # (tm, 256)
    z = dense(h, w3_ref, b3_ref, relu=False)         # (tm, lat_p)
    # decoder
    h = dense(z, w4_ref, b4_ref, relu=True)          # (tm, 256)
    h = dense(h, w5_ref, b5_ref, relu=True)          # (tm, 512)
    y = dense(h, w6_ref, b6_ref, relu=False)         # (tm, d_in_p)

    out_ref[...] = y.astype(out_ref.dtype)


@functools.partial(jax.jit, static_argnames=("tm",))
def autoencoder_forward(x, params, *, tm=256):
    """x: (B, dim_in) float32.  params: (in,out) bf16 weights, (1,out) f32 biases."""
    B, dim_in = x.shape
    dim_latent = params["w3"].shape[1]

    d_in_p = _round_up(dim_in, LANE)        # lane-dense input/output features
    lat_p = _round_up(dim_latent, LANE)     # lane-dense latent (e.g. 32 -> 128)
    # Clamp the batch tile for small batches so we don't compute on padding,
    # then pad the batch up to a whole number of tiles.
    tm = max(LANE, _round_up(min(tm, _round_up(B, LANE)), LANE))
    B_pad = _round_up(max(B, tm), tm)

    # Zero-padding is mathematically exact: padded input columns hit zero
    # rows of w1, padded latent columns are exactly zero (zero weight cols +
    # zero bias) and multiply zero rows of w4, and padded output columns
    # (zero cols of w6 + zero bias) are sliced off below.
    xp = _pad_axis(_pad_axis(x, 1, d_in_p), 0, B_pad)

    w1 = _pad_axis(params["w1"], 0, d_in_p)
    b1 = params["b1"]
    w2, b2 = params["w2"], params["b2"]
    w3 = _pad_axis(params["w3"], 1, lat_p)
    b3 = _pad_axis(params["b3"], 1, lat_p)
    w4 = _pad_axis(params["w4"], 0, lat_p)
    b4 = params["b4"]
    w5, b5 = params["w5"], params["b5"]
    w6 = _pad_axis(params["w6"], 1, d_in_p)
    b6 = _pad_axis(params["b6"], 1, d_in_p)

    weights_and_biases = (w1, b1, w2, b2, w3, b3, w4, b4, w5, b5, w6, b6)

    def resident(arr):
        # Whole array resident in VMEM; constant index_map -> DMA'd once and
        # reused across every batch tile of the grid.
        return pl.BlockSpec(arr.shape, lambda i: (0, 0))

    grid_spec = pltpu.PrefetchScalarGridSpec(
        num_scalar_prefetch=0,
        grid=(B_pad // tm,),
        in_specs=[pl.BlockSpec((tm, d_in_p), lambda i: (i, 0))]     # x tile
                 + [resident(a) for a in weights_and_biases],
        out_specs=pl.BlockSpec((tm, d_in_p), lambda i: (i, 0)),
    )

    out = pl.pallas_call(
        autoencoder_kernel,
        out_shape=jax.ShapeDtypeStruct((B_pad, d_in_p), x.dtype),
        grid_spec=grid_spec,
        compiler_params=pltpu.CompilerParams(
            dimension_semantics=("parallel",)),   # batch tiles shard across TCs
    )(xp, *weights_and_biases)

    return out[:B, :dim_in]


def init_params(key, dim_in, dim_latent):
    """Init mimicking nn.Linear's U(-1/sqrt(fan_in), 1/sqrt(fan_in)).

    Weights stored as (in, out) bf16 (MXU-native); biases as (1, out) f32.
    """
    dims = [
        (dim_in, 512), (512, 256), (256, dim_latent),      # encoder
        (dim_latent, 256), (256, 512), (512, dim_in),      # decoder
    ]
    params = {}
    for idx, (fan_in, fan_out) in enumerate(dims, start=1):
        key, kw, kb = jax.random.split(key, 3)
        bound = 1.0 / (fan_in ** 0.5)
        params[f"w{idx}"] = jax.random.uniform(
            kw, (fan_in, fan_out), jnp.float32, -bound, bound
        ).astype(jnp.bfloat16)
        params[f"b{idx}"] = jax.random.uniform(
            kb, (1, fan_out), jnp.float32, -bound, bound)
    return params


def autoencoder_ref(x, params):
    """Pure-JAX reference mirroring the kernel's bf16-operand / f32-acc math."""
    def dense(h, w, b, relu):
        y = jnp.dot(h.astype(jnp.bfloat16), w.astype(jnp.bfloat16),
                    preferred_element_type=jnp.float32) + b
        return jnp.maximum(y, 0.0) if relu else y

    h = dense(x, params["w1"], params["b1"], True)
    h = dense(h, params["w2"], params["b2"], True)
    z = dense(h, params["w3"], params["b3"], False)
    h = dense(z, params["w4"], params["b4"], True)
    h = dense(h, params["w5"], params["b5"], True)
    return dense(h, params["w6"], params["b6"], False)


if __name__ == "__main__":
    dim_in = 128
    dim_latent = 32

    key = jax.random.PRNGKey(0)
    key, kx1, kx2 = jax.random.split(key, 3)
    params = init_params(key, dim_in, dim_latent)

    # Case 1: multi-step grid (2 batch tiles of 256) -> exercises pipelining
    # and keeps both v7x TensorCores busy.
    x1 = jax.random.normal(kx1, (512, dim_in), jnp.float32)
    out1 = jax.block_until_ready(autoencoder_forward(x1, params, tm=256))
    ref1 = autoencoder_ref(x1, params)
    assert out1.shape == x1.shape
    assert jnp.allclose(out1, ref1, atol=2e-2, rtol=2e-2), "mismatch (case 1)"

    # Case 2: ragged small batch -> exercises the batch-padding path
    # (tile clamps down to 128 rows instead of padding to 256).
    x2 = jax.random.normal(kx2, (100, dim_in), jnp.float32)
    out2 = jax.block_until_ready(autoencoder_forward(x2, params, tm=256))
    ref2 = autoencoder_ref(x2, params)
    assert out2.shape == x2.shape
    assert jnp.allclose(out2, ref2, atol=2e-2, rtol=2e-2), "mismatch (case 2)"

    print("KERNEL_OK")
</pallas_src>

<mosaic_0001>
module attributes {stable_mosaic.version = 11 : i64} {
  func.func @autoencoder_kernel(%arg0: i32, %arg1: memref<256x128xf32, #tpu.memory_space<vmem>>, %arg2: memref<128x512xbf16, #tpu.memory_space<vmem>>, %arg3: memref<1x512xf32, #tpu.memory_space<vmem>>, %arg4: memref<512x256xbf16, #tpu.memory_space<vmem>>, %arg5: memref<1x256xf32, #tpu.memory_space<vmem>>, %arg6: memref<256x128xbf16, #tpu.memory_space<vmem>>, %arg7: memref<1x128xf32, #tpu.memory_space<vmem>>, %arg8: memref<128x256xbf16, #tpu.memory_space<vmem>>, %arg9: memref<1x256xf32, #tpu.memory_space<vmem>>, %arg10: memref<256x512xbf16, #tpu.memory_space<vmem>>, %arg11: memref<1x512xf32, #tpu.memory_space<vmem>>, %arg12: memref<512x128xbf16, #tpu.memory_space<vmem>>, %arg13: memref<1x128xf32, #tpu.memory_space<vmem>>, %arg14: memref<256x128xf32, #tpu.memory_space<vmem>>) attributes {dimension_semantics = [#tpu.dimension_semantics<parallel>], iteration_bounds = array<i64: 2>, scalar_prefetch = 0 : i64, scratch_operands = 0 : i64, tpu.core_type = #tpu.core_type<tc>, window_params = [{transform_indices = @transform_0, window_bounds = array<i64: 256, 128>}, {pipeline_mode = #tpu.pipeline_mode<synchronous>, transform_indices = @transform_1, window_bounds = array<i64: 128, 512>}, {pipeline_mode = #tpu.pipeline_mode<synchronous>, transform_indices = @transform_2, window_bounds = array<i64: 1, 512>}, {pipeline_mode = #tpu.pipeline_mode<synchronous>, transform_indices = @transform_3, window_bounds = array<i64: 512, 256>}, {pipeline_mode = #tpu.pipeline_mode<synchronous>, transform_indices = @transform_4, window_bounds = array<i64: 1, 256>}, {pipeline_mode = #tpu.pipeline_mode<synchronous>, transform_indices = @transform_5, window_bounds = array<i64: 256, 128>}, {pipeline_mode = #tpu.pipeline_mode<synchronous>, transform_indices = @transform_6, window_bounds = array<i64: 1, 128>}, {pipeline_mode = #tpu.pipeline_mode<synchronous>, transform_indices = @transform_7, window_bounds = array<i64: 128, 256>}, {pipeline_mode = #tpu.pipeline_mode<synchronous>, transform_indices = @transform_8, window_bounds = array<i64: 1, 256>}, {pipeline_mode = #tpu.pipeline_mode<synchronous>, transform_indices = @transform_9, window_bounds = array<i64: 256, 512>}, {pipeline_mode = #tpu.pipeline_mode<synchronous>, transform_indices = @transform_10, window_bounds = array<i64: 1, 512>}, {pipeline_mode = #tpu.pipeline_mode<synchronous>, transform_indices = @transform_11, window_bounds = array<i64: 512, 128>}, {pipeline_mode = #tpu.pipeline_mode<synchronous>, transform_indices = @transform_12, window_bounds = array<i64: 1, 128>}, {transform_indices = @transform_13, window_bounds = array<i64: 256, 128>}]} {
    %c0 = arith.constant 0 : index
    %c0_0 = arith.constant 0 : index
    %0 = vector.load %arg1[%c0, %c0_0] : memref<256x128xf32, #tpu.memory_space<vmem>>, vector<256x128xf32>
    %1 = arith.truncf %0 : vector<256x128xf32> to vector<256x128xbf16>
    %c0_1 = arith.constant 0 : index
    %c0_2 = arith.constant 0 : index
    %2 = vector.load %arg2[%c0_1, %c0_2] : memref<128x512xbf16, #tpu.memory_space<vmem>>, vector<128x512xbf16>
    %cst = arith.constant dense<0.000000e+00> : vector<256x512xf32>
    %3 = tpu.matmul %1, %2, %cst {dimension_numbers = #tpu.dot_dimension_numbers<[1], [0], [0], [1], [0, 0, 1, 1], [], []>} : vector<256x128xbf16>, vector<128x512xbf16>, vector<256x512xf32> -> vector<256x512xf32>
    %c0_3 = arith.constant 0 : index
    %c0_4 = arith.constant 0 : index
    %4 = vector.load %arg3[%c0_3, %c0_4] : memref<1x512xf32, #tpu.memory_space<vmem>>, vector<1x512xf32>
    %5 = vector.broadcast %4 : vector<1x512xf32> to vector<256x512xf32>
    %6 = arith.addf %3, %5 : vector<256x512xf32>
    %cst_5 = arith.constant 0.000000e+00 : f32
    %7 = vector.broadcast %cst_5 : f32 to vector<256x512xf32>
    %8 = arith.maximumf %6, %7 : vector<256x512xf32>
    %9 = arith.truncf %8 : vector<256x512xf32> to vector<256x512xbf16>
    %c0_6 = arith.constant 0 : index
    %c0_7 = arith.constant 0 : index
    %10 = vector.load %arg4[%c0_6, %c0_7] : memref<512x256xbf16, #tpu.memory_space<vmem>>, vector<512x256xbf16>
    %cst_8 = arith.constant dense<0.000000e+00> : vector<256x256xf32>
    %11 = tpu.matmul %9, %10, %cst_8 {dimension_numbers = #tpu.dot_dimension_numbers<[1], [0], [0], [1], [0, 0, 1, 1], [], []>} : vector<256x512xbf16>, vector<512x256xbf16>, vector<256x256xf32> -> vector<256x256xf32>
    %c0_9 = arith.constant 0 : index
    %c0_10 = arith.constant 0 : index
    %12 = vector.load %arg5[%c0_9, %c0_10] : memref<1x256xf32, #tpu.memory_space<vmem>>, vector<1x256xf32>
    %13 = vector.broadcast %12 : vector<1x256xf32> to vector<256x256xf32>
    %14 = arith.addf %11, %13 : vector<256x256xf32>
    %cst_11 = arith.constant 0.000000e+00 : f32
    %15 = vector.broadcast %cst_11 : f32 to vector<256x256xf32>
    %16 = arith.maximumf %14, %15 : vector<256x256xf32>
    %17 = arith.truncf %16 : vector<256x256xf32> to vector<256x256xbf16>
    %c0_12 = arith.constant 0 : index
    %c0_13 = arith.constant 0 : index
    %18 = vector.load %arg6[%c0_12, %c0_13] : memref<256x128xbf16, #tpu.memory_space<vmem>>, vector<256x128xbf16>
    %cst_14 = arith.constant dense<0.000000e+00> : vector<256x128xf32>
    %19 = tpu.matmul %17, %18, %cst_14 {dimension_numbers = #tpu.dot_dimension_numbers<[1], [0], [0], [1], [0, 0, 1, 1], [], []>} : vector<256x256xbf16>, vector<256x128xbf16>, vector<256x128xf32> -> vector<256x128xf32>
    %c0_15 = arith.constant 0 : index
    %c0_16 = arith.constant 0 : index
    %20 = vector.load %arg7[%c0_15, %c0_16] : memref<1x128xf32, #tpu.memory_space<vmem>>, vector<1x128xf32>
    %21 = vector.broadcast %20 : vector<1x128xf32> to vector<256x128xf32>
    %22 = arith.addf %19, %21 : vector<256x128xf32>
    %23 = arith.truncf %22 : vector<256x128xf32> to vector<256x128xbf16>
    %c0_17 = arith.constant 0 : index
    %c0_18 = arith.constant 0 : index
    %24 = vector.load %arg8[%c0_17, %c0_18] : memref<128x256xbf16, #tpu.memory_space<vmem>>, vector<128x256xbf16>
    %cst_19 = arith.constant dense<0.000000e+00> : vector<256x256xf32>
    %25 = tpu.matmul %23, %24, %cst_19 {dimension_numbers = #tpu.dot_dimension_numbers<[1], [0], [0], [1], [0, 0, 1, 1], [], []>} : vector<256x128xbf16>, vector<128x256xbf16>, vector<256x256xf32> -> vector<256x256xf32>
    %c0_20 = arith.constant 0 : index
    %c0_21 = arith.constant 0 : index
    %26 = vector.load %arg9[%c0_20, %c0_21] : memref<1x256xf32, #tpu.memory_space<vmem>>, vector<1x256xf32>
    %27 = vector.broadcast %26 : vector<1x256xf32> to vector<256x256xf32>
    %28 = arith.addf %25, %27 : vector<256x256xf32>
    %cst_22 = arith.constant 0.000000e+00 : f32
    %29 = vector.broadcast %cst_22 : f32 to vector<256x256xf32>
    %30 = arith.maximumf %28, %29 : vector<256x256xf32>
    %31 = arith.truncf %30 : vector<256x256xf32> to vector<256x256xbf16>
    %c0_23 = arith.constant 0 : index
    %c0_24 = arith.constant 0 : index
    %32 = vector.load %arg10[%c0_23, %c0_24] : memref<256x512xbf16, #tpu.memory_space<vmem>>, vector<256x512xbf16>
    %cst_25 = arith.constant dense<0.000000e+00> : vector<256x512xf32>
    %33 = tpu.matmul %31, %32, %cst_25 {dimension_numbers = #tpu.dot_dimension_numbers<[1], [0], [0], [1], [0, 0, 1, 1], [], []>} : vector<256x256xbf16>, vector<256x512xbf16>, vector<256x512xf32> -> vector<256x512xf32>
    %c0_26 = arith.constant 0 : index
    %c0_27 = arith.constant 0 : index
    %34 = vector.load %arg11[%c0_26, %c0_27] : memref<1x512xf32, #tpu.memory_space<vmem>>, vector<1x512xf32>
    %35 = vector.broadcast %34 : vector<1x512xf32> to vector<256x512xf32>
    %36 = arith.addf %33, %35 : vector<256x512xf32>
    %cst_28 = arith.constant 0.000000e+00 : f32
    %37 = vector.broadcast %cst_28 : f32 to vector<256x512xf32>
    %38 = arith.maximumf %36, %37 : vector<256x512xf32>
    %39 = arith.truncf %38 : vector<256x512xf32> to vector<256x512xbf16>
    %c0_29 = arith.constant 0 : index
    %c0_30 = arith.constant 0 : index
    %40 = vector.load %arg12[%c0_29, %c0_30] : memref<512x128xbf16, #tpu.memory_space<vmem>>, vector<512x128xbf16>
    %cst_31 = arith.constant dense<0.000000e+00> : vector<256x128xf32>
    %41 = tpu.matmul %39, %40, %cst_31 {dimension_numbers = #tpu.dot_dimension_numbers<[1], [0], [0], [1], [0, 0, 1, 1], [], []>} : vector<256x512xbf16>, vector<512x128xbf16>, vector<256x128xf32> -> vector<256x128xf32>
    %c0_32 = arith.constant 0 : index
    %c0_33 = arith.constant 0 : index
    %42 = vector.load %arg13[%c0_32, %c0_33] : memref<1x128xf32, #tpu.memory_space<vmem>>, vector<1x128xf32>
    %43 = vector.broadcast %42 : vector<1x128xf32> to vector<256x128xf32>
    %44 = arith.addf %41, %43 : vector<256x128xf32>
    %c0_34 = arith.constant 0 : index
    %c0_35 = arith.constant 0 : index
    %45 = vector.load %arg14[%c0_34, %c0_35] : memref<256x128xf32, #tpu.memory_space<vmem>>, vector<256x128xf32>
    tpu.vector_store %arg14[%c0_34, %c0_35], %44 {strides = array<i32>} : memref<256x128xf32, #tpu.memory_space<vmem>>, vector<256x128xf32>,
    return
  }
  func.func @transform_0(%arg0: i32) -> (i32, i32) {
    %c0_i32 = arith.constant 0 : i32
    %c0_i32_0 = arith.constant 0 : i32
    return %arg0, %c0_i32 : i32, i32
  }
  func.func @transform_1(%arg0: i32) -> (i32, i32) {
    %c0_i32 = arith.constant 0 : i32
    %c0_i32_0 = arith.constant 0 : i32
    %c0_i32_1 = arith.constant 0 : i32
    return %c0_i32, %c0_i32_0 : i32, i32
  }
  func.func @transform_2(%arg0: i32) -> (i32, i32) {
    %c0_i32 = arith.constant 0 : i32
    %c0_i32_0 = arith.constant 0 : i32
    %c0_i32_1 = arith.constant 0 : i32
    return %c0_i32, %c0_i32_0 : i32, i32
  }
  func.func @transform_3(%arg0: i32) -> (i32, i32) {
    %c0_i32 = arith.constant 0 : i32
    %c0_i32_0 = arith.constant 0 : i32
    %c0_i32_1 = arith.constant 0 : i32
    return %c0_i32, %c0_i32_0 : i32, i32
  }
  func.func @transform_4(%arg0: i32) -> (i32, i32) {
    %c0_i32 = arith.constant 0 : i32
    %c0_i32_0 = arith.constant 0 : i32
    %c0_i32_1 = arith.constant 0 : i32
    return %c0_i32, %c0_i32_0 : i32, i32
  }
  func.func @transform_5(%arg0: i32) -> (i32, i32) {
    %c0_i32 = arith.constant 0 : i32
    %c0_i32_0 = arith.constant 0 : i32
    %c0_i32_1 = arith.constant 0 : i32
    return %c0_i32, %c0_i32_0 : i32, i32
  }
  func.func @transform_6(%arg0: i32) -> (i32, i32) {
    %c0_i32 = arith.constant 0 : i32
    %c0_i32_0 = arith.constant 0 : i32
    %c0_i32_1 = arith.constant 0 : i32
    return %c0_i32, %c0_i32_0 : i32, i32
  }
  func.func @transform_7(%arg0: i32) -> (i32, i32) {
    %c0_i32 = arith.constant 0 : i32
    %c0_i32_0 = arith.constant 0 : i32
    %c0_i32_1 = arith.constant 0 : i32
    return %c0_i32, %c0_i32_0 : i32, i32
  }
  func.func @transform_8(%arg0: i32) -> (i32, i32) {
    %c0_i32 = arith.constant 0 : i32
    %c0_i32_0 = arith.constant 0 : i32
    %c0_i32_1 = arith.constant 0 : i32
    return %c0_i32, %c0_i32_0 : i32, i32
  }
  func.func @transform_9(%arg0: i32) -> (i32, i32) {
    %c0_i32 = arith.constant 0 : i32
    %c0_i32_0 = arith.constant 0 : i32
    %c0_i32_1 = arith.constant 0 : i32
    return %c0_i32, %c0_i32_0 : i32, i32
  }
  func.func @transform_10(%arg0: i32) -> (i32, i32) {
    %c0_i32 = arith.constant 0 : i32
    %c0_i32_0 = arith.constant 0 : i32
    %c0_i32_1 = arith.constant 0 : i32
    return %c0_i32, %c0_i32_0 : i32, i32
  }
  func.func @transform_11(%arg0: i32) -> (i32, i32) {
    %c0_i32 = arith.constant 0 : i32
    %c0_i32_0 = arith.constant 0 : i32
    %c0_i32_1 = arith.constant 0 : i32
    return %c0_i32, %c0_i32_0 : i32, i32
  }
  func.func @transform_12(%arg0: i32) -> (i32, i32) {
    %c0_i32 = arith.constant 0 : i32
    %c0_i32_0 = arith.constant 0 : i32
    %c0_i32_1 = arith.constant 0 : i32
    return %c0_i32, %c0_i32_0 : i32, i32
  }
  func.func @transform_13(%arg0: i32) -> (i32, i32) {
    %c0_i32 = arith.constant 0 : i32
    %c0_i32_0 = arith.constant 0 : i32
    return %arg0, %c0_i32 : i32, i32
  }
}

</mosaic_0001>

<llo_original>
// kernel: autoencoder_forward.1
$region0: #{autoencoder_forward.1}
  #allocation0 [shape = 'u32[]', space=smem, size = 0x4, offset = 0x4, fixed_abs, tag = 'smem constant byte address 0x4 - core index']
  #allocation1 [shape = 'u32[144,128]{1,0:T(1,128)}', space=vmem, size = 0x12000, scoped, tag = 'internal scratch']
  %s0 = inlined_call_operand.vmem [shape: f32[512,128], index: 0, kind: input, shape index: {}]
  %s1 = inlined_call_operand.hbm [shape: bf16[128,512], index: 1, kind: input, shape index: {}]
  %s2 = inlined_call_operand.vmem [shape: f32[1,512], index: 2, kind: input, shape index: {}]
  %s3 = inlined_call_operand.hbm [shape: bf16[512,256], index: 3, kind: input, shape index: {}]
  %s4 = inlined_call_operand.vmem [shape: f32[1,256], index: 4, kind: input, shape index: {}]
  %s5 = inlined_call_operand.vmem [shape: bf16[256,128], index: 5, kind: input, shape index: {}]
  %s6 = inlined_call_operand.vmem [shape: f32[1,128], index: 6, kind: input, shape index: {}]
  %s7 = inlined_call_operand.vmem [shape: bf16[128,256], index: 7, kind: input, shape index: {}]
  %s8 = inlined_call_operand.vmem [shape: f32[1,256], index: 8, kind: input, shape index: {}]
  %s9 = inlined_call_operand.hbm [shape: bf16[256,512], index: 9, kind: input, shape index: {}]
  %s10 = inlined_call_operand.vmem [shape: f32[1,512], index: 10, kind: input, shape index: {}]
  %s11 = inlined_call_operand.hbm [shape: bf16[512,128], index: 11, kind: input, shape index: {}]
  %s12 = inlined_call_operand.vmem [shape: f32[1,128], index: 12, kind: input, shape index: {}]
  %s13 = inlined_call_operand.hbm [shape: f32[512,128], index: 13, kind: output, shape index: {}]
  %s14 = sld [smem:[#allocation0]]
  $region101: #{autoencoder_forward.1} parent=0
    _
  %s16 = ssub.s32 1, %s14
  %s17 = scalar_select 0, %s16, %s14
  $region1: #{autoencoder_forward.1} parent=0
    #allocation2 [shape = 'u8[131072]{0}', space=vmem, size = 0x20000, scoped, tag = 'input window, operand 1, single buffered']
    #allocation3 [shape = 's32[2]{0}', space=sflag, size = 0x8, scoped, tag = 'scoped memory for autoencoder_forward.1']
    #allocation4 [shape = 's32[2]{0}', space=sflag, size = 0x8, scoped, tag = 'scoped memory for autoencoder_forward.1']
    #allocation5 [shape = 'u8[262144]{0}', space=vmem, size = 0x40000, scoped, tag = 'input window, operand 3, single buffered']
    #allocation6 [shape = 's32[1]{0}', space=sflag, size = 0x4, scoped, tag = 'scoped memory for autoencoder_forward.1']
    #allocation7 [shape = 'u8[262144]{0}', space=vmem, size = 0x40000, scoped, tag = 'input window, operand 9, single buffered']
    #allocation8 [shape = 'u8[131072]{0}', space=vmem, size = 0x20000, scoped, tag = 'input window, operand 11, single buffered']
    #allocation9 [shape = 's32[1]{0}', space=sflag, size = 0x4, scoped, tag = 'scoped memory for autoencoder_forward.1']
    #allocation10 [shape = 'u8[262144]{0}', space=vmem, size = 0x40000, scoped, tag = 'output window, operand 0']
    %18 = vsyncpa [#allocation3], 0
    %19 = vsyncpa [#allocation6], 0
    %20 = vsyncpa [#allocation9], 0
    %21 = vsyncpa [#allocation4], 0
    %s22 = scalar_lea.sflag [#allocation4], 1
    %23 = vsyncpa %s22, 0
    loop: start=0, step=1, limit=4
    $region2: #{autoencoder_forward.1} parent=1 // loop_pre_header
      _
    $region3: #{autoencoder_forward.1} parent=1 // loop_header
      %s25 = sphi 0, %s29
      %p26 = scmp.ge.s32.totalorder %s25, 4
      %s35 = sphi 0, %s37
      %s38 = sphi 0, %s35
      %s39 = sphi 0, %s38
      %s55 = sphi 0, %s39
      %s59 = sphi 0, %s59
      %s61 = sphi 0, %s59
      %s62 = sphi 0, %s61
      %s76 = sphi 0, %s62
      %s80 = sphi 0, %s80
      %s82 = sphi 0, %s80
      %s83 = sphi 0, %s82
      %s97 = sphi 0, %s83
      %s101 = sphi 0, %s101
      %s103 = sphi 0, %s101
      %s104 = sphi 0, %s103
      %s118 = sphi 0, %s104
      %s122 = sphi 0, %s122
      %s124 = sphi 0, %s122
      %s125 = sphi 0, %s124
      %s139 = sphi 0, %s125
      %s143 = sphi 0, %s143
      %s145 = sphi 0, %s143
      %s146 = sphi 0, %s145
      %s160 = sphi 0, %s146
      %s164 = sphi 0, %s164
      %s166 = sphi 0, %s164
      %s167 = sphi 0, %s166
      %s181 = sphi 0, %s167
      %s185 = sphi 0, %s185
      %s187 = sphi 0, %s185
      %s188 = sphi 0, %s187
      %s202 = sphi 0, %s188
      %s206 = sphi 0, %s206
      %s208 = sphi 0, %s206
      %s209 = sphi 0, %s208
      %s223 = sphi 0, %s209
      %s227 = sphi 0, %s227
      %s229 = sphi 0, %s227
      %s230 = sphi 0, %s229
      %s244 = sphi 0, %s230
      %s248 = sphi 0, %s248
      %s250 = sphi 0, %s248
      %s251 = sphi 0, %s250
      %s265 = sphi 0, %s251
      %s269 = sphi 0, %s269
      %s271 = sphi 0, %s269
      %s272 = sphi 0, %s271
      %s286 = sphi 0, %s272
      %s290 = sphi 0, %s290
      %s292 = sphi 0, %s290
      %s293 = sphi 0, %s292
      %s307 = sphi 0, %s293
      %s313 = sphi 0, %s315
      %s316 = sphi 0, %s313
      %s317 = sphi 0, %s316
      %s333 = sphi 0, %s317
    $region4: #{autoencoder_forward.1} parent=1 // loop_header_branch
      %28 = sbr.rel (%p26) target = $region8
    $region5: #{autoencoder_forward.1} parent=1 // loop_body
      %s30 = ssub.s32 %s25, 1
      %s31 = ssub.s32 %s25, 2
      %s32 = sadd.s32 %s25, 1
      %s33 = ssub.s32 %s25, %s32
      %p34 = scmp.eq.s32.totalorder %s33, 0
      %s36 = sadd.s32 %s35, 1
      %s37 = scalar_select %p34, %s35, %s36
      %p40 = pneg %p34
      %p41 = scmp.eq.s32.totalorder %s25, 1
      %p42 = por %p40, %p41
      %p43 = scmp.ne.s32.totalorder %s35, %s38
      %p44 = scmp.eq.s32.totalorder %s25, 0
      %p45 = por %p43, %p44
      %p46 = scmp.ne.s32.totalorder %s35, %s38
      %p47 = scmp.eq.s32.totalorder %s30, 1
      %p48 = por %p46, %p47
      %p49 = scmp.ne.s32.totalorder %s38, %s39
      %p50 = scmp.eq.s32.totalorder %s30, 0
      %p51 = por %p49, %p50
      %p52 = scmp.ne.s32.totalorder %s38, %s39
      %p53 = scmp.eq.s32.totalorder %s31, 1
      %p54 = por %p52, %p53
      %p56 = scmp.ne.s32.totalorder %s39, %s55
      %p57 = scmp.eq.s32.totalorder %s31, 0
      %p58 = por %p56, %p57
      %s60 = sadd.s32 %s59, 1
      %p63 = scmp.eq.s32.totalorder %s25, 1
      %p64 = scmp.ne.s32.totalorder %s59, %s61
      %p65 = scmp.eq.s32.totalorder %s25, 0
      %p66 = por %p64, %p65
      %p67 = scmp.ne.s32.totalorder %s59, %s61
      %p68 = scmp.eq.s32.totalorder %s30, 1
      %p69 = por %p67, %p68
      %p70 = scmp.ne.s32.totalorder %s61, %s62
      %p71 = scmp.eq.s32.totalorder %s30, 0
      %p72 = por %p70, %p71
      %p73 = scmp.ne.s32.totalorder %s61, %s62
      %p74 = scmp.eq.s32.totalorder %s31, 1
      %p75 = por %p73, %p74
      %p77 = scmp.ne.s32.totalorder %s62, %s76
      %p78 = scmp.eq.s32.totalorder %s31, 0
      %p79 = por %p77, %p78
      %s81 = sadd.s32 %s80, 1
      %p84 = scmp.eq.s32.totalorder %s25, 1
      %p85 = scmp.ne.s32.totalorder %s80, %s82
      %p86 = scmp.eq.s32.totalorder %s25, 0
      %p87 = por %p85, %p86
      %p88 = scmp.ne.s32.totalorder %s80, %s82
      %p89 = scmp.eq.s32.totalorder %s30, 1
      %p90 = por %p88, %p89
      %p91 = scmp.ne.s32.totalorder %s82, %s83
      %p92 = scmp.eq.s32.totalorder %s30, 0
      %p93 = por %p91, %p92
      %p94 = scmp.ne.s32.totalorder %s82, %s83
      %p95 = scmp.eq.s32.totalorder %s31, 1
      %p96 = por %p94, %p95
      %p98 = scmp.ne.s32.totalorder %s83, %s97
      %p99 = scmp.eq.s32.totalorder %s31, 0
      %p100 = por %p98, %p99
      %s102 = sadd.s32 %s101, 1
      %p105 = scmp.eq.s32.totalorder %s25, 1
      %p106 = scmp.ne.s32.totalorder %s101, %s103
      %p107 = scmp.eq.s32.totalorder %s25, 0
      %p108 = por %p106, %p107
      %p109 = scmp.ne.s32.totalorder %s101, %s103
      %p110 = scmp.eq.s32.totalorder %s30, 1
      %p111 = por %p109, %p110
      %p112 = scmp.ne.s32.totalorder %s103, %s104
      %p113 = scmp.eq.s32.totalorder %s30, 0
      %p114 = por %p112, %p113
      %p115 = scmp.ne.s32.totalorder %s103, %s104
      %p116 = scmp.eq.s32.totalorder %s31, 1
      %p117 = por %p115, %p116
      %p119 = scmp.ne.s32.totalorder %s104, %s118
      %p120 = scmp.eq.s32.totalorder %s31, 0
      %p121 = por %p119, %p120
      %s123 = sadd.s32 %s122, 1
      %p126 = scmp.eq.s32.totalorder %s25, 1
      %p127 = scmp.ne.s32.totalorder %s122, %s124
      %p128 = scmp.eq.s32.totalorder %s25, 0
      %p129 = por %p127, %p128
      %p130 = scmp.ne.s32.totalorder %s122, %s124
      %p131 = scmp.eq.s32.totalorder %s30, 1
      %p132 = por %p130, %p131
      %p133 = scmp.ne.s32.totalorder %s124, %s125
      %p134 = scmp.eq.s32.totalorder %s30, 0
      %p135 = por %p133, %p134
      %p136 = scmp.ne.s32.totalorder %s124, %s125
      %p137 = scmp.eq.s32.totalorder %s31, 1
      %p138 = por %p136, %p137
      %p140 = scmp.ne.s32.totalorder %s125, %s139
      %p141 = scmp.eq.s32.totalorder %s31, 0
      %p142 = por %p140, %p141
      %s144 = sadd.s32 %s143, 1
      %p147 = scmp.eq.s32.totalorder %s25, 1
      %p148 = scmp.ne.s32.totalorder %s143, %s145
      %p149 = scmp.eq.s32.totalorder %s25, 0
      %p150 = por %p148, %p149
      %p151 = scmp.ne.s32.totalorder %s143, %s145
      %p152 = scmp.eq.s32.totalorder %s30, 1
      %p153 = por %p151, %p152
      %p154 = scmp.ne.s32.totalorder %s145, %s146
      %p155 = scmp.eq.s32.totalorder %s30, 0
      %p156 = por %p154, %p155
      %p157 = scmp.ne.s32.totalorder %s145, %s146
      %p158 = scmp.eq.s32.totalorder %s31, 1
      %p159 = por %p157, %p158
      %p161 = scmp.ne.s32.totalorder %s146, %s160
      %p162 = scmp.eq.s32.totalorder %s31, 0
      %p163 = por %p161, %p162
      %s165 = sadd.s32 %s164, 1
      %p168 = scmp.eq.s32.totalorder %s25, 1
      %p169 = scmp.ne.s32.totalorder %s164, %s166
      %p170 = scmp.eq.s32.totalorder %s25, 0
      %p171 = por %p169, %p170
      %p172 = scmp.ne.s32.totalorder %s164, %s166
      %p173 = scmp.eq.s32.totalorder %s30, 1
      %p174 = por %p172, %p173
      %p175 = scmp.ne.s32.totalorder %s166, %s167
      %p176 = scmp.eq.s32.totalorder %s30, 0
      %p177 = por %p175, %p176
      %p178 = scmp.ne.s32.totalorder %s166, %s167
      %p179 = scmp.eq.s32.totalorder %s31, 1
      %p180 = por %p178, %p179
      %p182 = scmp.ne.s32.totalorder %s167, %s181
      %p183 = scmp.eq.s32.totalorder %s31, 0
      %p184 = por %p182, %p183
      %s186 = sadd.s32 %s185, 1
      %p189 = scmp.eq.s32.totalorder %s25, 1
      %p190 = scmp.ne.s32.totalorder %s185, %s187
      %p191 = scmp.eq.s32.totalorder %s25, 0
      %p192 = por %p190, %p191
      %p193 = scmp.ne.s32.totalorder %s185, %s187
      %p194 = scmp.eq.s32.totalorder %s30, 1
      %p195 = por %p193, %p194
      %p196 = scmp.ne.s32.totalorder %s187, %s188
      %p197 = scmp.eq.s32.totalorder %s30, 0
      %p198 = por %p196, %p197
      %p199 = scmp.ne.s32.totalorder %s187, %s188
      %p200 = scmp.eq.s32.totalorder %s31, 1
      %p201 = por %p199, %p200
      %p203 = scmp.ne.s32.totalorder %s188, %s202
      %p204 = scmp.eq.s32.totalorder %s31, 0
      %p205 = por %p203, %p204
      %s207 = sadd.s32 %s206, 1
      %p210 = scmp.eq.s32.totalorder %s25, 1
      %p211 = scmp.ne.s32.totalorder %s206, %s208
      %p212 = scmp.eq.s32.totalorder %s25, 0
      %p213 = por %p211, %p212
      %p214 = scmp.ne.s32.totalorder %s206, %s208
      %p215 = scmp.eq.s32.totalorder %s30, 1
      %p216 = por %p214, %p215
      %p217 = scmp.ne.s32.totalorder %s208, %s209
      %p218 = scmp.eq.s32.totalorder %s30, 0
      %p219 = por %p217, %p218
      %p220 = scmp.ne.s32.totalorder %s208, %s209
      %p221 = scmp.eq.s32.totalorder %s31, 1
      %p222 = por %p220, %p221
      %p224 = scmp.ne.s32.totalorder %s209, %s223
      %p225 = scmp.eq.s32.totalorder %s31, 0
      %p226 = por %p224, %p225
      %s228 = sadd.s32 %s227, 1
      %p231 = scmp.eq.s32.totalorder %s25, 1
      %p232 = scmp.ne.s32.totalorder %s227, %s229
      %p233 = scmp.eq.s32.totalorder %s25, 0
      %p234 = por %p232, %p233
      %p235 = scmp.ne.s32.totalorder %s227, %s229
      %p236 = scmp.eq.s32.totalorder %s30, 1
      %p237 = por %p235, %p236
      %p238 = scmp.ne.s32.totalorder %s229, %s230
      %p239 = scmp.eq.s32.totalorder %s30, 0
      %p240 = por %p238, %p239
      %p241 = scmp.ne.s32.totalorder %s229, %s230
      %p242 = scmp.eq.s32.totalorder %s31, 1
      %p243 = por %p241, %p242
      %p245 = scmp.ne.s32.totalorder %s230, %s244
      %p246 = scmp.eq.s32.totalorder %s31, 0
      %p247 = por %p245, %p246
      %s249 = sadd.s32 %s248, 1
      %p252 = scmp.eq.s32.totalorder %s25, 1
      %p253 = scmp.ne.s32.totalorder %s248, %s250
      %p254 = scmp.eq.s32.totalorder %s25, 0
      %p255 = por %p253, %p254
      %p256 = scmp.ne.s32.totalorder %s248, %s250
      %p257 = scmp.eq.s32.totalorder %s30, 1
      %p258 = por %p256, %p257
      %p259 = scmp.ne.s32.totalorder %s250, %s251
      %p260 = scmp.eq.s32.totalorder %s30, 0
      %p261 = por %p259, %p260
      %p262 = scmp.ne.s32.totalorder %s250, %s251
      %p263 = scmp.eq.s32.totalorder %s31, 1
      %p264 = por %p262, %p263
      %p266 = scmp.ne.s32.totalorder %s251, %s265
      %p267 = scmp.eq.s32.totalorder %s31, 0
      %p268 = por %p266, %p267
      %s270 = sadd.s32 %s269, 1
      %p273 = scmp.eq.s32.totalorder %s25, 1
      %p274 = scmp.ne.s32.totalorder %s269, %s271
      %p275 = scmp.eq.s32.totalorder %s25, 0
      %p276 = por %p274, %p275
      %p277 = scmp.ne.s32.totalorder %s269, %s271
      %p278 = scmp.eq.s32.totalorder %s30, 1
      %p279 = por %p277, %p278
      %p280 = scmp.ne.s32.totalorder %s271, %s272
      %p281 = scmp.eq.s32.totalorder %s30, 0
      %p282 = por %p280, %p281
      %p283 = scmp.ne.s32.totalorder %s271, %s272
      %p284 = scmp.eq.s32.totalorder %s31, 1
      %p285 = por %p283, %p284
      %p287 = scmp.ne.s32.totalorder %s272, %s286
      %p288 = scmp.eq.s32.totalorder %s31, 0
      %p289 = por %p287, %p288
      %s291 = sadd.s32 %s290, 1
      %p294 = scmp.eq.s32.totalorder %s25, 1
      %p295 = scmp.ne.s32.totalorder %s290, %s292
      %p296 = scmp.eq.s32.totalorder %s25, 0
      %p297 = por %p295, %p296
      %p298 = scmp.ne.s32.totalorder %s290, %s292
      %p299 = scmp.eq.s32.totalorder %s30, 1
      %p300 = por %p298, %p299
      %p301 = scmp.ne.s32.totalorder %s292, %s293
      %p302 = scmp.eq.s32.totalorder %s30, 0
      %p303 = por %p301, %p302
      %p304 = scmp.ne.s32.totalorder %s292, %s293
      %p305 = scmp.eq.s32.totalorder %s31, 1
      %p306 = por %p304, %p305
      %p308 = scmp.ne.s32.totalorder %s293, %s307
      %p309 = scmp.eq.s32.totalorder %s31, 0
      %p310 = por %p308, %p309
      %s311 = ssub.s32 %s25, %s32
      %p312 = scmp.eq.s32.totalorder %s311, 0
      %s314 = sadd.s32 %s313, 1
      %s315 = scalar_select %p312, %s313, %s314
      %p318 = pneg %p312
      %p319 = scmp.eq.s32.totalorder %s25, 1
      %p320 = por %p318, %p319
      %p321 = scmp.ne.s32.totalorder %s313, %s316
      %p322 = scmp.eq.s32.totalorder %s25, 0
      %p323 = por %p321, %p322
      %p324 = scmp.ne.s32.totalorder %s313, %s316
      %p325 = scmp.eq.s32.totalorder %s30, 1
      %p326 = por %p324, %p325
      %p327 = scmp.ne.s32.totalorder %s316, %s317
      %p328 = scmp.eq.s32.totalorder %s30, 0
      %p329 = por %p327, %p328
      %p330 = scmp.ne.s32.totalorder %s316, %s317
      %p331 = scmp.eq.s32.totalorder %s31, 1
      %p332 = por %p330, %p331
      %p334 = scmp.ne.s32.totalorder %s317, %s333
      %p335 = scmp.eq.s32.totalorder %s31, 0
      %p336 = por %p334, %p335
      %p337 = scmp.le.s32.totalorder 1, %s25
      %p338 = scmp.lt.s32.totalorder %s25, 3
      %p339 = pnand %p337, %p338
      %p340 = pneg %p339
      // Predicated region
      $region9: #{autoencoder_forward.1} parent=5 // pred_check
        _
      $region10: #{autoencoder_forward.1} parent=5 // pred_check_branch
        %342 = sbr.rel (%p339) target = $region12
      $region11: #{autoencoder_forward.1} parent=5 // pred_region
        %s343 = ssub.s32 %s25, 1
        // Predicated region
        $region13: #{autoencoder_forward.1} parent=11 // pred_check
          %p344 = pneg %p72
        $region14: #{autoencoder_forward.1} parent=11 // pred_check_branch
          %346 = sbr.rel (%p344) target = $region16
        $region15: #{autoencoder_forward.1} parent=11 // pred_region
          %s348 = ssub.s32 4096, 4096
          %349 = vsyncadd [#allocation3], %s348
          %s350 = sshll.u32 [#allocation2], 4
          %s351 = int_to_ptr.vmem [resolvable:$true] %s350
          %356 = dma.hbm_to_vmem [thread:$0]  %s1, 4096, %s351, [#allocation3], 256, 256, 16
        $region16: #{autoencoder_forward.1} parent=11 // pred_fallthru
          _
        // Predicated region
        $region17: #{autoencoder_forward.1} parent=11 // pred_check
          %p357 = pneg %p93
        $region18: #{autoencoder_forward.1} parent=11 // pred_check_branch
          %359 = sbr.rel (%p357) target = $region20
        $region19: #{autoencoder_forward.1} parent=11 // pred_region
          _
        $region20: #{autoencoder_forward.1} parent=11 // pred_fallthru
          _
        // Predicated region
        $region21: #{autoencoder_forward.1} parent=11 // pred_check
          %p360 = pneg %p114
        $region22: #{autoencoder_forward.1} parent=11 // pred_check_branch
          %362 = sbr.rel (%p360) target = $region24
        $region23: #{autoencoder_forward.1} parent=11 // pred_region
          %s364 = ssub.s32 8192, 8192
          %365 = vsyncadd [#allocation6], %s364
          %s366 = sshll.u32 [#allocation5], 4
          %s367 = int_to_ptr.vmem [resolvable:$true] %s366
          %372 = dma.hbm_to_vmem [thread:$0]  %s3, 8192, %s367, [#allocation6], 128, 128, 8
        $region24: #{autoencoder_forward.1} parent=11 // pred_fallthru
          _
        // Predicated region
        $region25: #{autoencoder_forward.1} parent=11 // pred_check
          %p373 = pneg %p135
        $region26: #{autoencoder_forward.1} parent=11 // pred_check_branch
          %375 = sbr.rel (%p373) target = $region28
        $region27: #{autoencoder_forward.1} parent=11 // pred_region
          _
        $region28: #{autoencoder_forward.1} parent=11 // pred_fallthru
          _
        // Predicated region
        $region29: #{autoencoder_forward.1} parent=11 // pred_check
          %p376 = pneg %p156
        $region30: #{autoencoder_forward.1} parent=11 // pred_check_branch
          %378 = sbr.rel (%p376) target = $region32
        $region31: #{autoencoder_forward.1} parent=11 // pred_region
          _
        $region32: #{autoencoder_forward.1} parent=11 // pred_fallthru
          _
        // Predicated region
        $region33: #{autoencoder_forward.1} parent=11 // pred_check
          %p379 = pneg %p177
        $region34: #{autoencoder_forward.1} parent=11 // pred_check_branch
          %381 = sbr.rel (%p379) target = $region36
        $region35: #{autoencoder_forward.1} parent=11 // pred_region
          _
        $region36: #{autoencoder_forward.1} parent=11 // pred_fallthru
          _
        // Predicated region
        $region37: #{autoencoder_forward.1} parent=11 // pred_check
          %p382 = pneg %p198
        $region38: #{autoencoder_forward.1} parent=11 // pred_check_branch
          %384 = sbr.rel (%p382) target = $region40
        $region39: #{autoencoder_forward.1} parent=11 // pred_region
          _
        $region40: #{autoencoder_forward.1} parent=11 // pred_fallthru
          _
        // Predicated region
        $region41: #{autoencoder_forward.1} parent=11 // pred_check
          %p385 = pneg %p219
        $region42: #{autoencoder_forward.1} parent=11 // pred_check_branch
          %387 = sbr.rel (%p385) target = $region44
        $region43: #{autoencoder_forward.1} parent=11 // pred_region
          _
        $region44: #{autoencoder_forward.1} parent=11 // pred_fallthru
          _
        // Predicated region
        $region45: #{autoencoder_forward.1} parent=11 // pred_check
          %p388 = pneg %p240
        $region46: #{autoencoder_forward.1} parent=11 // pred_check_branch
          %390 = sbr.rel (%p388) target = $region48
        $region47: #{autoencoder_forward.1} parent=11 // pred_region
          %s392 = ssub.s32 8192, 8192
          %393 = vsyncadd [#allocation6], %s392
          %s394 = sshll.u32 [#allocation7], 4
          %s395 = int_to_ptr.vmem [resolvable:$true] %s394
          %400 = dma.hbm_to_vmem [thread:$0]  %s9, 8192, %s395, [#allocation6], 256, 256, 16
        $region48: #{autoencoder_forward.1} parent=11 // pred_fallthru
          _
        // Predicated region
        $region49: #{autoencoder_forward.1} parent=11 // pred_check
          %p401 = pneg %p261
        $region50: #{autoencoder_forward.1} parent=11 // pred_check_branch
          %403 = sbr.rel (%p401) target = $region52
        $region51: #{autoencoder_forward.1} parent=11 // pred_region
          _
        $region52: #{autoencoder_forward.1} parent=11 // pred_fallthru
          _
        // Predicated region
        $region53: #{autoencoder_forward.1} parent=11 // pred_check
          %p404 = pneg %p282
        $region54: #{autoencoder_forward.1} parent=11 // pred_check_branch
          %406 = sbr.rel (%p404) target = $region56
        $region55: #{autoencoder_forward.1} parent=11 // pred_region
          %s408 = ssub.s32 4096, 4096
          %409 = vsyncadd [#allocation9], %s408
          %s410 = sshll.u32 [#allocation8], 4
          %s411 = int_to_ptr.vmem [resolvable:$true] %s410
          %416 = dma.hbm_to_vmem [thread:$0]  %s11, 4096, %s411, [#allocation9], 64, 64, 4
        $region56: #{autoencoder_forward.1} parent=11 // pred_fallthru
          _
        // Predicated region
        $region57: #{autoencoder_forward.1} parent=11 // pred_check
          %p417 = pneg %p303
        $region58: #{autoencoder_forward.1} parent=11 // pred_check_branch
          %419 = sbr.rel (%p417) target = $region60
        $region59: #{autoencoder_forward.1} parent=11 // pred_region
          _
        $region60: #{autoencoder_forward.1} parent=11 // pred_fallthru
          _
      $region12: #{autoencoder_forward.1} parent=5 // pred_fallthru
        _
      %p420 = scmp.lt.s32.totalorder %s25, 2
      // Predicated region
      $region61: #{autoencoder_forward.1} parent=5 // pred_check
        %p421 = pneg %p420
      $region62: #{autoencoder_forward.1} parent=5 // pred_check_branch
        %423 = sbr.rel (%p421) target = $region64
      $region63: #{autoencoder_forward.1} parent=5 // pred_region
        // Predicated region
        $region65: #{autoencoder_forward.1} parent=63 // pred_check
          %p424 = pneg %p45
        $region66: #{autoencoder_forward.1} parent=63 // pred_check_branch
          %426 = sbr.rel (%p424) target = $region68
        $region67: #{autoencoder_forward.1} parent=63 // pred_region
          %s427 = smul.u32 32, %s25
          %p428 = scmp.lt.s32.totalorder %s427, 63
          %s429 = scalar_select %p428, %s427, 63
          %s430 = smul.addr %s429, 8
          %s431 = scalar_lea.vmem %s0, %s430
          %s432 = smul.u32 32, %s25
        $region68: #{autoencoder_forward.1} parent=63 // pred_fallthru
          _
      $region64: #{autoencoder_forward.1} parent=5 // pred_fallthru
        _
      %p433 = scmp.le.s32.totalorder 1, %s25
      %p434 = scmp.lt.s32.totalorder %s25, 3
      %p435 = pnand %p433, %p434
      %p436 = pneg %p435
      // Predicated region
      $region69: #{autoencoder_forward.1} parent=5 // pred_check
        _
      $region70: #{autoencoder_forward.1} parent=5 // pred_check_branch
        %438 = sbr.rel (%p435) target = $region72
      $region71: #{autoencoder_forward.1} parent=5 // pred_region
        %s439 = ssub.s32 %s25, 1
        // Predicated region
        $region73: #{autoencoder_forward.1} parent=71 // pred_check
          %p440 = pneg %p72
        $region74: #{autoencoder_forward.1} parent=71 // pred_check_branch
          %442 = sbr.rel (%p440) target = $region76
        $region75: #{autoencoder_forward.1} parent=71 // pred_region
          %443 = dma.done [#allocation3], 4096
        $region76: #{autoencoder_forward.1} parent=71 // pred_fallthru
          _
        // Predicated region
        $region77: #{autoencoder_forward.1} parent=71 // pred_check
          %p444 = pneg %p114
        $region78: #{autoencoder_forward.1} parent=71 // pred_check_branch
          %446 = sbr.rel (%p444) target = $region80
        $region79: #{autoencoder_forward.1} parent=71 // pred_region
          %447 = dma.done [#allocation6], 8192
        $region80: #{autoencoder_forward.1} parent=71 // pred_fallthru
          _
        // Predicated region
        $region81: #{autoencoder_forward.1} parent=71 // pred_check
          %p448 = pneg %p240
        $region82: #{autoencoder_forward.1} parent=71 // pred_check_branch
          %450 = sbr.rel (%p448) target = $region84
        $region83: #{autoencoder_forward.1} parent=71 // pred_region
          %451 = dma.done [#allocation6], 8192
        $region84: #{autoencoder_forward.1} parent=71 // pred_fallthru
          _
        // Predicated region
        $region85: #{autoencoder_forward.1} parent=71 // pred_check
          %p452 = pneg %p282
        $region86: #{autoencoder_forward.1} parent=71 // pred_check_branch
          %454 = sbr.rel (%p452) target = $region88
        $region87: #{autoencoder_forward.1} parent=71 // pred_region
          %455 = dma.done [#allocation9], 4096
        $region88: #{autoencoder_forward.1} parent=71 // pred_fallthru
          _
        %s456 = smul.u32 32, %s30
        %p457 = scmp.lt.s32.totalorder %s456, 63
        %s458 = scalar_select %p457, %s456, 63
        %s459 = smul.addr %s458, 8
        %s460 = scalar_lea.vmem %s0, %s459
        %p461 = pneg %p51
        %p462 = pneg %p48
        %p463 = pneg %p72
        %p464 = pneg %p69
        %p465 = pneg %p93
        %p466 = pneg %p90
        %p467 = pneg %p114
        %p468 = pneg %p111
        %p469 = pneg %p135
        %p470 = pneg %p132
        %p471 = pneg %p156
        %p472 = pneg %p153
        %p473 = pneg %p177
        %p474 = pneg %p174
        %p475 = pneg %p198
        %p476 = pneg %p195
        %p477 = pneg %p219
        %p478 = pneg %p216
        %p479 = pneg %p240
        %p480 = pneg %p237
        %p481 = pneg %p261
        %p482 = pneg %p258
        %p483 = pneg %p282
        %p484 = pneg %p279
        %p485 = pneg %p303
        %p486 = pneg %p300
        %p487 = pneg %p329
        %p488 = pneg %p326
        %s489 = sand.u32 %s316, 1
        %s490 = scalar_lea.sflag [#allocation4], %s489
        %s491 = sand.u32 %s316, 1
        %s492 = smul.addr %s491, 256
        %s493 = scalar_lea.vmem [#allocation10], %s492
        %s494 = smul.u32 32, %s30
        %p495 = scmp.lt.s32.totalorder %s494, 63
        %s496 = scalar_select %p495, %s494, 63
        %s497 = smul.addr %s496, 8
        %s498 = scalar_lea.vmem %s0, %s497
        %s499 = smul.u32 32, %s30
        %s500 = smul.u32 32, %s30
        %v502 = vld [vmem:[%s498] sm:$0xff]
        %v503 = vld [vmem:[%s498 + $0x8] sm:$0xff]
        %v504 = vld [vmem:[%s498 + $0x10] sm:$0xff]
        %v505 = vld [vmem:[%s498 + $0x18] sm:$0xff]
        %v506 = vld [vmem:[%s498 + $0x20] sm:$0xff]
        %v507 = vld [vmem:[%s498 + $0x28] sm:$0xff]
        %v508 = vld [vmem:[%s498 + $0x30] sm:$0xff]
        %v509 = vld [vmem:[%s498 + $0x38] sm:$0xff]
        %v510 = vld [vmem:[%s498 + $0x40] sm:$0xff]
        %v511 = vld [vmem:[%s498 + $0x48] sm:$0xff]
        %v512 = vld [vmem:[%s498 + $0x50] sm:$0xff]
        %v513 = vld [vmem:[%s498 + $0x58] sm:$0xff]
        %v514 = vld [vmem:[%s498 + $0x60] sm:$0xff]
        %v515 = vld [vmem:[%s498 + $0x68] sm:$0xff]
        %v516 = vld [vmem:[%s498 + $0x70] sm:$0xff]
        %v517 = vld [vmem:[%s498 + $0x78] sm:$0xff]
        %v518 = vld [vmem:[%s498 + $0x80] sm:$0xff]
        %v519 = vld [vmem:[%s498 + $0x88] sm:$0xff]
        %v520 = vld [vmem:[%s498 + $0x90] sm:$0xff]
        %v521 = vld [vmem:[%s498 + $0x98] sm:$0xff]
        %v522 = vld [vmem:[%s498 + $0xa0] sm:$0xff]
        %v523 = vld [vmem:[%s498 + $0xa8] sm:$0xff]
        %v524 = vld [vmem:[%s498 + $0xb0] sm:$0xff]
        %v525 = vld [vmem:[%s498 + $0xb8] sm:$0xff]
        %v526 = vld [vmem:[%s498 + $0xc0] sm:$0xff]
        %v527 = vld [vmem:[%s498 + $0xc8] sm:$0xff]
        %v528 = vld [vmem:[%s498 + $0xd0] sm:$0xff]
        %v529 = vld [vmem:[%s498 + $0xd8] sm:$0xff]
        %v530 = vld [vmem:[%s498 + $0xe0] sm:$0xff]
        %v531 = vld [vmem:[%s498 + $0xe8] sm:$0xff]
        %v532 = vld [vmem:[%s498 + $0xf0] sm:$0xff]
        %v533 = vld [vmem:[%s498 + $0xf8] sm:$0xff]
        %v534 = vpack.c.bf16 %v503, %v502
        %v535 = vpack.c.bf16 %v505, %v504
        %v536 = vpack.c.bf16 %v507, %v506
        %v537 = vpack.c.bf16 %v509, %v508
        %v538 = vpack.c.bf16 %v511, %v510
        %v539 = vpack.c.bf16 %v513, %v512
        %v540 = vpack.c.bf16 %v515, %v514
        %v541 = vpack.c.bf16 %v517, %v516
        %v542 = vpack.c.bf16 %v519, %v518
        %v543 = vpack.c.bf16 %v521, %v520
        %v544 = vpack.c.bf16 %v523, %v522
        %v545 = vpack.c.bf16 %v525, %v524
        %v546 = vpack.c.bf16 %v527, %v526
        %v547 = vpack.c.bf16 %v529, %v528
        %v548 = vpack.c.bf16 %v531, %v530
        %v549 = vpack.c.bf16 %v533, %v532
        %v550 = vld [vmem:[#allocation2] sm:$0xff]
        %v551 = vld [vmem:[#allocation2 + $0x8] sm:$0xff]
        %v552 = vld [vmem:[#allocation2 + $0x10] sm:$0xff]
        %v553 = vld [vmem:[#allocation2 + $0x18] sm:$0xff]
        %v554 = vld [vmem:[#allocation2 + $0x20] sm:$0xff]
        %v555 = vld [vmem:[#allocation2 + $0x28] sm:$0xff]
        %v556 = vld [vmem:[#allocation2 + $0x30] sm:$0xff]
        %v557 = vld [vmem:[#allocation2 + $0x38] sm:$0xff]
        %v558 = vld [vmem:[#allocation2 + $0x40] sm:$0xff]
        %v559 = vld [vmem:[#allocation2 + $0x48] sm:$0xff]
        %v560 = vld [vmem:[#allocation2 + $0x50] sm:$0xff]
        %v561 = vld [vmem:[#allocation2 + $0x58] sm:$0xff]
        %v562 = vld [vmem:[#allocation2 + $0x60] sm:$0xff]
        %v563 = vld [vmem:[#allocation2 + $0x68] sm:$0xff]
        %v564 = vld [vmem:[#allocation2 + $0x70] sm:$0xff]
        %v565 = vld [vmem:[#allocation2 + $0x78] sm:$0xff]
        %v566 = vld [vmem:[#allocation2 + $0x80] sm:$0xff]
        %v567 = vld [vmem:[#allocation2 + $0x88] sm:$0xff]
        %v568 = vld [vmem:[#allocation2 + $0x90] sm:$0xff]
        %v569 = vld [vmem:[#allocation2 + $0x98] sm:$0xff]
        %v570 = vld [vmem:[#allocation2 + $0xa0] sm:$0xff]
        %v571 = vld [vmem:[#allocation2 + $0xa8] sm:$0xff]
        %v572 = vld [vmem:[#allocation2 + $0xb0] sm:$0xff]
        %v573 = vld [vmem:[#allocation2 + $0xb8] sm:$0xff]
        %v574 = vld [vmem:[#allocation2 + $0xc0] sm:$0xff]
        %v575 = vld [vmem:[#allocation2 + $0xc8] sm:$0xff]
        %v576 = vld [vmem:[#allocation2 + $0xd0] sm:$0xff]
        %v577 = vld [vmem:[#allocation2 + $0xd8] sm:$0xff]
        %v578 = vld [vmem:[#allocation2 + $0xe0] sm:$0xff]
        %v579 = vld [vmem:[#allocation2 + $0xe8] sm:$0xff]
        %v580 = vld [vmem:[#allocation2 + $0xf0] sm:$0xff]
        %v581 = vld [vmem:[#allocation2 + $0xf8] sm:$0xff]
        %v582 = vld [vmem:[%s2] sm:$0xf]
        %v584 = vlaneseq
        %v585 = vshrl.u32 %v584, 7
        %v586 = vsub.s32 0, %v585
        %v587 = vrot.slane %v582, %v586
        %v588 = vlaneseq
        %v589 = vshrl.u32 %v588, 7
        %v590 = vsub.s32 1, %v589
        %v591 = vrot.slane %v582, %v590
        %v592 = vlaneseq
        %v593 = vshrl.u32 %v592, 7
        %v594 = vsub.s32 2, %v593
        %v595 = vrot.slane %v582, %v594
        %v596 = vlaneseq
        %v597 = vshrl.u32 %v596, 7
        %v598 = vsub.s32 3, %v597
        %v599 = vrot.slane %v582, %v598
        %v636 = vunpack.c.l.b16 %v550
        %v637 = vunpack.c.h.b16 %v550
        %v638 = vunpack.c.l.b16 %v551
        %v639 = vunpack.c.h.b16 %v551
        %v640 = vunpack.c.l.b16 %v552
        %v641 = vunpack.c.h.b16 %v552
        %v642 = vunpack.c.l.b16 %v553
        %v643 = vunpack.c.h.b16 %v553
        %v644 = vunpack.c.l.b16 %v554
        %v645 = vunpack.c.h.b16 %v554
        %v646 = vunpack.c.l.b16 %v555
        %v647 = vunpack.c.h.b16 %v555
        %v648 = vunpack.c.l.b16 %v556
        %v649 = vunpack.c.h.b16 %v556
        %v650 = vunpack.c.l.b16 %v557
        %v651 = vunpack.c.h.b16 %v557
        %v652 = vunpack.c.l.b16 %v558
        %v653 = vunpack.c.h.b16 %v558
        %v654 = vunpack.c.l.b16 %v559
        %v655 = vunpack.c.h.b16 %v559
        %v656 = vunpack.c.l.b16 %v560
        %v657 = vunpack.c.h.b16 %v560
        %v658 = vunpack.c.l.b16 %v561
        %v659 = vunpack.c.h.b16 %v561
        %v660 = vunpack.c.l.b16 %v562
        %v661 = vunpack.c.h.b16 %v562
        %v662 = vunpack.c.l.b16 %v563
        %v663 = vunpack.c.h.b16 %v563
        %v664 = vunpack.c.l.b16 %v564
        %v665 = vunpack.c.h.b16 %v564
        %v666 = vunpack.c.l.b16 %v565
        %v667 = vunpack.c.h.b16 %v565
        %v668 = vunpack.c.l.b16 %v566
        %v669 = vunpack.c.h.b16 %v566
        %v670 = vunpack.c.l.b16 %v567
        %v671 = vunpack.c.h.b16 %v567
        %v672 = vunpack.c.l.b16 %v568
        %v673 = vunpack.c.h.b16 %v568
        %v674 = vunpack.c.l.b16 %v569
        %v675 = vunpack.c.h.b16 %v569
        %v676 = vunpack.c.l.b16 %v570
        %v677 = vunpack.c.h.b16 %v570
        %v678 = vunpack.c.l.b16 %v571
        %v679 = vunpack.c.h.b16 %v571
        %v680 = vunpack.c.l.b16 %v572
        %v681 = vunpack.c.h.b16 %v572
        %v682 = vunpack.c.l.b16 %v573
        %v683 = vunpack.c.h.b16 %v573
        %v684 = vunpack.c.l.b16 %v574
        %v685 = vunpack.c.h.b16 %v574
        %v686 = vunpack.c.l.b16 %v575
        %v687 = vunpack.c.h.b16 %v575
        %v688 = vunpack.c.l.b16 %v576
        %v689 = vunpack.c.h.b16 %v576
        %v690 = vunpack.c.l.b16 %v577
        %v691 = vunpack.c.h.b16 %v577
        %v692 = vunpack.c.l.b16 %v578
        %v693 = vunpack.c.h.b16 %v578
        %v694 = vunpack.c.l.b16 %v579
        %v695 = vunpack.c.h.b16 %v579
        %v696 = vunpack.c.l.b16 %v580
        %v697 = vunpack.c.h.b16 %v580
        %v698 = vunpack.c.l.b16 %v581
        %v699 = vunpack.c.h.b16 %v581
        %v700 = vpack.c.b16 %v640, %v636
        %v701 = vpack.c.b16 %v641, %v637
        %v702 = vpack.c.b16 %v642, %v638
        %v703 = vpack.c.b16 %v643, %v639
        %v704 = vpack.c.b16 %v648, %v644
        %v705 = vpack.c.b16 %v649, %v645
        %v706 = vpack.c.b16 %v650, %v646
        %v707 = vpack.c.b16 %v651, %v647
        %v708 = vpack.c.b16 %v656, %v652
        %v709 = vpack.c.b16 %v657, %v653
        %v710 = vpack.c.b16 %v658, %v654
        %v711 = vpack.c.b16 %v659, %v655
        %v712 = vpack.c.b16 %v664, %v660
        %v713 = vpack.c.b16 %v665, %v661
        %v714 = vpack.c.b16 %v666, %v662
        %v715 = vpack.c.b16 %v667, %v663
        %v716 = vpack.c.b16 %v672, %v668
        %v717 = vpack.c.b16 %v673, %v669
        %v718 = vpack.c.b16 %v674, %v670
        %v719 = vpack.c.b16 %v675, %v671
        %v720 = vpack.c.b16 %v680, %v676
        %v721 = vpack.c.b16 %v681, %v677
        %v722 = vpack.c.b16 %v682, %v678
        %v723 = vpack.c.b16 %v683, %v679
        %v724 = vpack.c.b16 %v688, %v684
        %v725 = vpack.c.b16 %v689, %v685
        %v726 = vpack.c.b16 %v690, %v686
        %v727 = vpack.c.b16 %v691, %v687
        %v728 = vpack.c.b16 %v696, %v692
        %v729 = vpack.c.b16 %v697, %v693
        %v730 = vpack.c.b16 %v698, %v694
        %v731 = vpack.c.b16 %v699, %v695
        %764 = vmatprep.subr.bf16.mxu0 %v729
        %765 = vmatpush1.bf16.msra.mxu0 %v728
        %766 = vmatprep.subr.bf16.mxu0 %v725
        %767 = vmatpush1.bf16.msra.mxu0 %v724
        %768 = vmatprep.subr.bf16.mxu0 %v721
        %769 = vmatpush1.bf16.msra.mxu0 %v720
        %770 = vmatprep.subr.bf16.mxu0 %v717
        %771 = vmatpush1.bf16.msra.mxu0 %v716
        %772 = vmatprep.subr.bf16.mxu0 %v713
        %773 = vmatpush1.bf16.msra.mxu0 %v712
        %774 = vmatprep.subr.bf16.mxu0 %v709
        %775 = vmatpush1.bf16.msra.mxu0 %v708
        %776 = vmatprep.subr.bf16.mxu0 %v705
        %777 = vmatpush1.bf16.msra.mxu0 %v704
        %778 = vmatprep.subr.bf16.mxu0 %v701
        %779 = vmatpush1.bf16.msra.mxu0 %v700
        %780 = vmatprep.subr.bf16.mxu0 0
        %781 = vmatpush2.bf16.msra.mxu0 0
        %782 = vmatprep.subr.bf16.mxu0 0
        %783 = vmatpush2.bf16.msra.mxu0 0
        %784 = vmatprep.subr.bf16.mxu0 0
        %785 = vmatpush2.bf16.msra.mxu0 0
        %786 = vmatprep.subr.bf16.mxu0 0
        %787 = vmatpush2.bf16.msra.mxu0 0
        %788 = vmatprep.subr.bf16.mxu0 0
        %789 = vmatpush2.bf16.msra.mxu0 0
        %790 = vmatprep.subr.bf16.mxu0 0
        %791 = vmatpush2.bf16.msra.mxu0 0
        %792 = vmatprep.subr.bf16.mxu0 0
        %793 = vmatpush2.bf16.msra.mxu0 0
        %794 = vmatprep.subr.bf16.mxu0 0
        %795 = vmatpush2.bf16.msra.mxu0 0
        %796 = vmatprep.mubr.bf16.mxu0 0
        %797 = vmatmul.mubr.bf16.gmra.mxu0 %v534
        %v798 = vpop.f32.mrf.mxu0
        %v799 = vadd.f32 %v587, %v798
        %v800 = vpop.f32.mrf.mxu0
        %v801 = vadd.f32 %v591, %v800
        %v802 = vpop.f32.mrf.mxu0
        %v803 = vadd.f32 %v587, %v802
        %v804 = vpop.f32.mrf.mxu0
        %v805 = vadd.f32 %v591, %v804
        %806 = vmatprep.mubr.bf16.mxu0 0
        %807 = vmatmul.mubr.bf16.gmra.mxu0 %v535
        %v808 = vpop.f32.mrf.mxu0
        %v809 = vadd.f32 %v587, %v808
        %v810 = vpop.f32.mrf.mxu0
        %v811 = vadd.f32 %v591, %v810
        %v812 = vpop.f32.mrf.mxu0
        %v813 = vadd.f32 %v587, %v812
        %v814 = vpop.f32.mrf.mxu0
        %v815 = vadd.f32 %v591, %v814
        %816 = vmatprep.mubr.bf16.mxu0 0
        %817 = vmatmul.mubr.bf16.gmra.mxu0 %v536
        %v818 = vpop.f32.mrf.mxu0
        %v819 = vadd.f32 %v587, %v818
        %v820 = vpop.f32.mrf.mxu0
        %v821 = vadd.f32 %v591, %v820
        %v822 = vpop.f32.mrf.mxu0
        %v823 = vadd.f32 %v587, %v822
        %v824 = vpop.f32.mrf.mxu0
        %v825 = vadd.f32 %v591, %v824
        %826 = vmatprep.mubr.bf16.mxu0 0
        %827 = vmatmul.mubr.bf16.gmra.mxu0 %v537
        %v828 = vpop.f32.mrf.mxu0
        %v829 = vadd.f32 %v587, %v828
        %v830 = vpop.f32.mrf.mxu0
        %v831 = vadd.f32 %v591, %v830
        %v832 = vpop.f32.mrf.mxu0
        %v833 = vadd.f32 %v587, %v832
        %v834 = vpop.f32.mrf.mxu0
        %v835 = vadd.f32 %v591, %v834
        %836 = vmatprep.mubr.bf16.mxu0 0
        %837 = vmatmul.mubr.bf16.gmra.mxu0 %v538
        %v838 = vpop.f32.mrf.mxu0
        %v839 = vadd.f32 %v587, %v838
        %v840 = vpop.f32.mrf.mxu0
        %v841 = vadd.f32 %v591, %v840
        %v842 = vpop.f32.mrf.mxu0
        %v843 = vadd.f32 %v587, %v842
        %v844 = vpop.f32.mrf.mxu0
        %v845 = vadd.f32 %v591, %v844
        %846 = vmatprep.mubr.bf16.mxu0 0
        %847 = vmatmul.mubr.bf16.gmra.mxu0 %v539
        %v848 = vpop.f32.mrf.mxu0
        %v849 = vadd.f32 %v587, %v848
        %v850 = vpop.f32.mrf.mxu0
        %v851 = vadd.f32 %v591, %v850
        %v852 = vpop.f32.mrf.mxu0
        %v853 = vadd.f32 %v587, %v852
        %v854 = vpop.f32.mrf.mxu0
        %v855 = vadd.f32 %v591, %v854
        %856 = vmatprep.mubr.bf16.mxu0 0
        %857 = vmatmul.mubr.bf16.gmra.mxu0 %v540
        %v858 = vpop.f32.mrf.mxu0
        %v859 = vadd.f32 %v587, %v858
        %v860 = vpop.f32.mrf.mxu0
        %v861 = vadd.f32 %v591, %v860
        %v862 = vpop.f32.mrf.mxu0
        %v863 = vadd.f32 %v587, %v862
        %v864 = vpop.f32.mrf.mxu0
        %v865 = vadd.f32 %v591, %v864
        %866 = vmatprep.mubr.bf16.mxu0 0
        %867 = vmatmul.mubr.bf16.gmra.mxu0 %v541
        %v868 = vpop.f32.mrf.mxu0
        %v869 = vadd.f32 %v587, %v868
        %v870 = vpop.f32.mrf.mxu0
        %v871 = vadd.f32 %v591, %v870
        %v872 = vpop.f32.mrf.mxu0
        %v873 = vadd.f32 %v587, %v872
        %v874 = vpop.f32.mrf.mxu0
        %v875 = vadd.f32 %v591, %v874
        %876 = vmatprep.mubr.bf16.mxu0 0
        %877 = vmatmul.mubr.bf16.gmra.mxu0 %v542
        %v878 = vpop.f32.mrf.mxu0
        %v879 = vadd.f32 %v587, %v878
        %v880 = vpop.f32.mrf.mxu0
        %v881 = vadd.f32 %v591, %v880
        %v882 = vpop.f32.mrf.mxu0
        %v883 = vadd.f32 %v587, %v882
        %v884 = vpop.f32.mrf.mxu0
        %v885 = vadd.f32 %v591, %v884
        %886 = vmatprep.mubr.bf16.mxu0 0
        %887 = vmatmul.mubr.bf16.gmra.mxu0 %v543
        %v888 = vpop.f32.mrf.mxu0
        %v889 = vadd.f32 %v587, %v888
        %v890 = vpop.f32.mrf.mxu0
        %v891 = vadd.f32 %v591, %v890
        %v892 = vpop.f32.mrf.mxu0
        %v893 = vadd.f32 %v587, %v892
        %v894 = vpop.f32.mrf.mxu0
        %v895 = vadd.f32 %v591, %v894
        %896 = vmatprep.mubr.bf16.mxu0 0
        %897 = vmatmul.mubr.bf16.gmra.mxu0 %v544
        %v898 = vpop.f32.mrf.mxu0
        %v899 = vadd.f32 %v587, %v898
        %v900 = vpop.f32.mrf.mxu0
        %v901 = vadd.f32 %v591, %v900
        %v902 = vpop.f32.mrf.mxu0
        %v903 = vadd.f32 %v587, %v902
        %v904 = vpop.f32.mrf.mxu0
        %v905 = vadd.f32 %v591, %v904
        %906 = vmatprep.mubr.bf16.mxu0 0
        %907 = vmatmul.mubr.bf16.gmra.mxu0 %v545
        %v908 = vpop.f32.mrf.mxu0
        %v909 = vadd.f32 %v587, %v908
        %v910 = vpop.f32.mrf.mxu0
        %v911 = vadd.f32 %v591, %v910
        %v912 = vpop.f32.mrf.mxu0
        %v913 = vadd.f32 %v587, %v912
        %v914 = vpop.f32.mrf.mxu0
        %v915 = vadd.f32 %v591, %v914
        %916 = vmatprep.mubr.bf16.mxu0 0
        %917 = vmatmul.mubr.bf16.gmra.mxu0 %v546
        %v918 = vpop.f32.mrf.mxu0
        %v919 = vadd.f32 %v587, %v918
        %v920 = vpop.f32.mrf.mxu0
        %v921 = vadd.f32 %v591, %v920
        %v922 = vpop.f32.mrf.mxu0
        %v923 = vadd.f32 %v587, %v922
        %v924 = vpop.f32.mrf.mxu0
        %v925 = vadd.f32 %v591, %v924
        %926 = vmatprep.mubr.bf16.mxu0 0
        %927 = vmatmul.mubr.bf16.gmra.mxu0 %v547
        %v928 = vpop.f32.mrf.mxu0
        %v929 = vadd.f32 %v587, %v928
        %v930 = vpop.f32.mrf.mxu0
        %v931 = vadd.f32 %v591, %v930
        %v932 = vpop.f32.mrf.mxu0
        %v933 = vadd.f32 %v587, %v932
        %v934 = vpop.f32.mrf.mxu0
        %v935 = vadd.f32 %v591, %v934
        %936 = vmatprep.mubr.bf16.mxu0 0
        %937 = vmatmul.mubr.bf16.gmra.mxu0 %v548
        %v938 = vpop.f32.mrf.mxu0
        %v939 = vadd.f32 %v587, %v938
        %v940 = vpop.f32.mrf.mxu0
        %v941 = vadd.f32 %v591, %v940
        %v942 = vpop.f32.mrf.mxu0
        %v943 = vadd.f32 %v587, %v942
        %v944 = vpop.f32.mrf.mxu0
        %v945 = vadd.f32 %v591, %v944
        %946 = vmatprep.mubr.bf16.mxu0 0
        %947 = vmatmul.mubr.bf16.gmra.mxu0 %v549
        %v948 = vpop.f32.mrf.mxu0
        %v949 = vadd.f32 %v587, %v948
        %v950 = vpop.f32.mrf.mxu0
        %v951 = vadd.f32 %v591, %v950
        %v952 = vpop.f32.mrf.mxu0
        %v953 = vadd.f32 %v587, %v952
        %v954 = vpop.f32.mrf.mxu0
        %v955 = vadd.f32 %v591, %v954
        %956 = vdwg.mxu0
        %957 = vmatprep.subr.bf16.mxu0 %v731
        %958 = vmatpush1.bf16.msra.mxu0 %v730
        %959 = vmatprep.subr.bf16.mxu0 %v727
        %960 = vmatpush1.bf16.msra.mxu0 %v726
        %961 = vmatprep.subr.bf16.mxu0 %v723
        %962 = vmatpush1.bf16.msra.mxu0 %v722
        %963 = vmatprep.subr.bf16.mxu0 %v719
        %964 = vmatpush1.bf16.msra.mxu0 %v718
        %965 = vmatprep.subr.bf16.mxu0 %v715
        %966 = vmatpush1.bf16.msra.mxu0 %v714
        %967 = vmatprep.subr.bf16.mxu0 %v711
        %968 = vmatpush1.bf16.msra.mxu0 %v710
        %969 = vmatprep.subr.bf16.mxu0 %v707
        %970 = vmatpush1.bf16.msra.mxu0 %v706
        %971 = vmatprep.subr.bf16.mxu0 %v703
        %972 = vmatpush1.bf16.msra.mxu0 %v702
        %973 = vmatprep.subr.bf16.mxu0 0
        %974 = vmatpush2.bf16.msra.mxu0 0
        %975 = vmatprep.subr.bf16.mxu0 0
        %976 = vmatpush2.bf16.msra.mxu0 0
        %977 = vmatprep.subr.bf16.mxu0 0
        %978 = vmatpush2.bf16.msra.mxu0 0
        %979 = vmatprep.subr.bf16.mxu0 0
        %980 = vmatpush2.bf16.msra.mxu0 0
        %981 = vmatprep.subr.bf16.mxu0 0
        %982 = vmatpush2.bf16.msra.mxu0 0
        %983 = vmatprep.subr.bf16.mxu0 0
        %984 = vmatpush2.bf16.msra.mxu0 0
        %985 = vmatprep.subr.bf16.mxu0 0
        %986 = vmatpush2.bf16.msra.mxu0 0
        %987 = vmatprep.subr.bf16.mxu0 0
        %988 = vmatpush2.bf16.msra.mxu0 0
        %989 = vmatprep.mubr.bf16.mxu0 0
        %990 = vmatmul.mubr.bf16.gmra.mxu0 %v534
        %v991 = vpop.f32.mrf.mxu0
        %v992 = vadd.f32 %v595, %v991
        %v993 = vpop.f32.mrf.mxu0
        %v994 = vadd.f32 %v599, %v993
        %v995 = vpop.f32.mrf.mxu0
        %v996 = vadd.f32 %v595, %v995
        %v997 = vpop.f32.mrf.mxu0
        %v998 = vadd.f32 %v599, %v997
        %999 = vmatprep.mubr.bf16.mxu0 0
        %1000 = vmatmul.mubr.bf16.gmra.mxu0 %v535
        %v1001 = vpop.f32.mrf.mxu0
        %v1002 = vadd.f32 %v595, %v1001
        %v1003 = vpop.f32.mrf.mxu0
        %v1004 = vadd.f32 %v599, %v1003
        %v1005 = vpop.f32.mrf.mxu0
        %v1006 = vadd.f32 %v595, %v1005
        %v1007 = vpop.f32.mrf.mxu0
        %v1008 = vadd.f32 %v599, %v1007
        %1009 = vmatprep.mubr.bf16.mxu0 0
        %1010 = vmatmul.mubr.bf16.gmra.mxu0 %v536
        %v1011 = vpop.f32.mrf.mxu0
        %v1012 = vadd.f32 %v595, %v1011
        %v1013 = vpop.f32.mrf.mxu0
        %v1014 = vadd.f32 %v599, %v1013
        %v1015 = vpop.f32.mrf.mxu0
        %v1016 = vadd.f32 %v595, %v1015
        %v1017 = vpop.f32.mrf.mxu0
        %v1018 = vadd.f32 %v599, %v1017
        %1019 = vmatprep.mubr.bf16.mxu0 0
        %1020 = vmatmul.mubr.bf16.gmra.mxu0 %v537
        %v1021 = vpop.f32.mrf.mxu0
        %v1022 = vadd.f32 %v595, %v1021
        %v1023 = vpop.f32.mrf.mxu0
        %v1024 = vadd.f32 %v599, %v1023
        %v1025 = vpop.f32.mrf.mxu0
        %v1026 = vadd.f32 %v595, %v1025
        %v1027 = vpop.f32.mrf.mxu0
        %v1028 = vadd.f32 %v599, %v1027
        %1029 = vmatprep.mubr.bf16.mxu0 0
        %1030 = vmatmul.mubr.bf16.gmra.mxu0 %v538
        %v1031 = vpop.f32.mrf.mxu0
        %v1032 = vadd.f32 %v595, %v1031
        %v1033 = vpop.f32.mrf.mxu0
        %v1034 = vadd.f32 %v599, %v1033
        %v1035 = vpop.f32.mrf.mxu0
        %v1036 = vadd.f32 %v595, %v1035
        %v1037 = vpop.f32.mrf.mxu0
        %v1038 = vadd.f32 %v599, %v1037
        %1039 = vmatprep.mubr.bf16.mxu0 0
        %1040 = vmatmul.mubr.bf16.gmra.mxu0 %v539
        %v1041 = vpop.f32.mrf.mxu0
        %v1042 = vadd.f32 %v595, %v1041
        %v1043 = vpop.f32.mrf.mxu0
        %v1044 = vadd.f32 %v599, %v1043
        %v1045 = vpop.f32.mrf.mxu0
        %v1046 = vadd.f32 %v595, %v1045
        %v1047 = vpop.f32.mrf.mxu0
        %v1048 = vadd.f32 %v599, %v1047
        %1049 = vmatprep.mubr.bf16.mxu0 0
        %1050 = vmatmul.mubr.bf16.gmra.mxu0 %v540
        %v1051 = vpop.f32.mrf.mxu0
        %v1052 = vadd.f32 %v595, %v1051
        %v1053 = vpop.f32.mrf.mxu0
        %v1054 = vadd.f32 %v599, %v1053
        %v1055 = vpop.f32.mrf.mxu0
        %v1056 = vadd.f32 %v595, %v1055
        %v1057 = vpop.f32.mrf.mxu0
        %v1058 = vadd.f32 %v599, %v1057
        %1059 = vmatprep.mubr.bf16.mxu0 0
        %1060 = vmatmul.mubr.bf16.gmra.mxu0 %v541
        %v1061 = vpop.f32.mrf.mxu0
        %v1062 = vadd.f32 %v595, %v1061
        %v1063 = vpop.f32.mrf.mxu0
        %v1064 = vadd.f32 %v599, %v1063
        %v1065 = vpop.f32.mrf.mxu0
        %v1066 = vadd.f32 %v595, %v1065
        %v1067 = vpop.f32.mrf.mxu0
        %v1068 = vadd.f32 %v599, %v1067
        %1069 = vmatprep.mubr.bf16.mxu0 0
        %1070 = vmatmul.mubr.bf16.gmra.mxu0 %v542
        %v1071 = vpop.f32.mrf.mxu0
        %v1072 = vadd.f32 %v595, %v1071
        %v1073 = vpop.f32.mrf.mxu0
        %v1074 = vadd.f32 %v599, %v1073
        %v1075 = vpop.f32.mrf.mxu0
        %v1076 = vadd.f32 %v595, %v1075
        %v1077 = vpop.f32.mrf.mxu0
        %v1078 = vadd.f32 %v599, %v1077
        %1079 = vmatprep.mubr.bf16.mxu0 0
        %1080 = vmatmul.mubr.bf16.gmra.mxu0 %v543
        %v1081 = vpop.f32.mrf.mxu0
        %v1082 = vadd.f32 %v595, %v1081
        %v1083 = vpop.f32.mrf.mxu0
        %v1084 = vadd.f32 %v599, %v1083
        %v1085 = vpop.f32.mrf.mxu0
        %v1086 = vadd.f32 %v595, %v1085
        %v1087 = vpop.f32.mrf.mxu0
        %v1088 = vadd.f32 %v599, %v1087
        %1089 = vmatprep.mubr.bf16.mxu0 0
        %1090 = vmatmul.mubr.bf16.gmra.mxu0 %v544
        %v1091 = vpop.f32.mrf.mxu0
        %v1092 = vadd.f32 %v595, %v1091
        %v1093 = vpop.f32.mrf.mxu0
        %v1094 = vadd.f32 %v599, %v1093
        %v1095 = vpop.f32.mrf.mxu0
        %v1096 = vadd.f32 %v595, %v1095
        %v1097 = vpop.f32.mrf.mxu0
        %v1098 = vadd.f32 %v599, %v1097
        %1099 = vmatprep.mubr.bf16.mxu0 0
        %1100 = vmatmul.mubr.bf16.gmra.mxu0 %v545
        %v1101 = vpop.f32.mrf.mxu0
        %v1102 = vadd.f32 %v595, %v1101
        %v1103 = vpop.f32.mrf.mxu0
        %v1104 = vadd.f32 %v599, %v1103
        %v1105 = vpop.f32.mrf.mxu0
        %v1106 = vadd.f32 %v595, %v1105
        %v1107 = vpop.f32.mrf.mxu0
        %v1108 = vadd.f32 %v599, %v1107
        %1109 = vmatprep.mubr.bf16.mxu0 0
        %1110 = vmatmul.mubr.bf16.gmra.mxu0 %v546
        %v1111 = vpop.f32.mrf.mxu0
        %v1112 = vadd.f32 %v595, %v1111
        %v1113 = vpop.f32.mrf.mxu0
        %v1114 = vadd.f32 %v599, %v1113
        %v1115 = vpop.f32.mrf.mxu0
        %v1116 = vadd.f32 %v595, %v1115
        %v1117 = vpop.f32.mrf.mxu0
        %v1118 = vadd.f32 %v599, %v1117
        %1119 = vmatprep.mubr.bf16.mxu0 0
        %1120 = vmatmul.mubr.bf16.gmra.mxu0 %v547
        %v1121 = vpop.f32.mrf.mxu0
        %v1122 = vadd.f32 %v595, %v1121
        %v1123 = vpop.f32.mrf.mxu0
        %v1124 = vadd.f32 %v599, %v1123
        %v1125 = vpop.f32.mrf.mxu0
        %v1126 = vadd.f32 %v595, %v1125
        %v1127 = vpop.f32.mrf.mxu0
        %v1128 = vadd.f32 %v599, %v1127
        %1129 = vmatprep.mubr.bf16.mxu0 0
        %1130 = vmatmul.mubr.bf16.gmra.mxu0 %v548
        %v1131 = vpop.f32.mrf.mxu0
        %v1132 = vadd.f32 %v595, %v1131
        %v1133 = vpop.f32.mrf.mxu0
        %v1134 = vadd.f32 %v599, %v1133
        %v1135 = vpop.f32.mrf.mxu0
        %v1136 = vadd.f32 %v595, %v1135
        %v1137 = vpop.f32.mrf.mxu0
        %v1138 = vadd.f32 %v599, %v1137
        %1139 = vmatprep.mubr.bf16.mxu0 0
        %1140 = vmatmul.mubr.bf16.gmra.mxu0 %v549
        %v1141 = vpop.f32.mrf.mxu0
        %v1142 = vadd.f32 %v595, %v1141
        %v1143 = vpop.f32.mrf.mxu0
        %v1144 = vadd.f32 %v599, %v1143
        %v1145 = vpop.f32.mrf.mxu0
        %v1146 = vadd.f32 %v595, %v1145
        %v1147 = vpop.f32.mrf.mxu0
        %v1148 = vadd.f32 %v599, %v1147
        %1149 = vdwg.mxu0
        %v1150 = vmax.f32 %v799, 0.0
        %v1151 = vmax.f32 %v801, 0.0
        %v1152 = vmax.f32 %v992, 0.0
        %v1153 = vmax.f32 %v994, 0.0
        %v1154 = vmax.f32 %v803, 0.0
        %v1155 = vmax.f32 %v805, 0.0
        %v1156 = vmax.f32 %v996, 0.0
        %v1157 = vmax.f32 %v998, 0.0
        %v1158 = vmax.f32 %v809, 0.0
        %v1159 = vmax.f32 %v811, 0.0
        %v1160 = vmax.f32 %v1002, 0.0
        %v1161 = vmax.f32 %v1004, 0.0
        %v1162 = vmax.f32 %v813, 0.0
        %v1163 = vmax.f32 %v815, 0.0
        %v1164 = vmax.f32 %v1006, 0.0
        %v1165 = vmax.f32 %v1008, 0.0
        %v1166 = vmax.f32 %v819, 0.0
        %v1167 = vmax.f32 %v821, 0.0
        %v1168 = vmax.f32 %v1012, 0.0
        %v1169 = vmax.f32 %v1014, 0.0
        %v1170 = vmax.f32 %v823, 0.0
        %v1171 = vmax.f32 %v825, 0.0
        %v1172 = vmax.f32 %v1016, 0.0
        %v1173 = vmax.f32 %v1018, 0.0
        %v1174 = vmax.f32 %v829, 0.0
        %v1175 = vmax.f32 %v831, 0.0
        %v1176 = vmax.f32 %v1022, 0.0
        %v1177 = vmax.f32 %v1024, 0.0
        %v1178 = vmax.f32 %v833, 0.0
        %v1179 = vmax.f32 %v835, 0.0
        %v1180 = vmax.f32 %v1026, 0.0
        %v1181 = vmax.f32 %v1028, 0.0
        %v1182 = vmax.f32 %v839, 0.0
        %v1183 = vmax.f32 %v841, 0.0
        %v1184 = vmax.f32 %v1032, 0.0
        %v1185 = vmax.f32 %v1034, 0.0
        %v1186 = vmax.f32 %v843, 0.0
        %v1187 = vmax.f32 %v845, 0.0
        %v1188 = vmax.f32 %v1036, 0.0
        %v1189 = vmax.f32 %v1038, 0.0
        %v1190 = vmax.f32 %v849, 0.0
        %v1191 = vmax.f32 %v851, 0.0
        %v1192 = vmax.f32 %v1042, 0.0
        %v1193 = vmax.f32 %v1044, 0.0
        %v1194 = vmax.f32 %v853, 0.0
        %v1195 = vmax.f32 %v855, 0.0
        %v1196 = vmax.f32 %v1046, 0.0
        %v1197 = vmax.f32 %v1048, 0.0
        %v1198 = vmax.f32 %v859, 0.0
        %v1199 = vmax.f32 %v861, 0.0
        %v1200 = vmax.f32 %v1052, 0.0
        %v1201 = vmax.f32 %v1054, 0.0
        %v1202 = vmax.f32 %v863, 0.0
        %v1203 = vmax.f32 %v865, 0.0
        %v1204 = vmax.f32 %v1056, 0.0
        %v1205 = vmax.f32 %v1058, 0.0
        %v1206 = vmax.f32 %v869, 0.0
        %v1207 = vmax.f32 %v871, 0.0
        %v1208 = vmax.f32 %v1062, 0.0
        %v1209 = vmax.f32 %v1064, 0.0
        %v1210 = vmax.f32 %v873, 0.0
        %v1211 = vmax.f32 %v875, 0.0
        %v1212 = vmax.f32 %v1066, 0.0
        %v1213 = vmax.f32 %v1068, 0.0
        %v1214 = vmax.f32 %v879, 0.0
        %v1215 = vmax.f32 %v881, 0.0
        %v1216 = vmax.f32 %v1072, 0.0
        %v1217 = vmax.f32 %v1074, 0.0
        %v1218 = vmax.f32 %v883, 0.0
        %v1219 = vmax.f32 %v885, 0.0
        %v1220 = vmax.f32 %v1076, 0.0
        %v1221 = vmax.f32 %v1078, 0.0
        %v1222 = vmax.f32 %v889, 0.0
        %v1223 = vmax.f32 %v891, 0.0
        %v1224 = vmax.f32 %v1082, 0.0
        %v1225 = vmax.f32 %v1084, 0.0
        %v1226 = vmax.f32 %v893, 0.0
        %v1227 = vmax.f32 %v895, 0.0
        %v1228 = vmax.f32 %v1086, 0.0
        %v1229 = vmax.f32 %v1088, 0.0
        %v1230 = vmax.f32 %v899, 0.0
        %v1231 = vmax.f32 %v901, 0.0
        %v1232 = vmax.f32 %v1092, 0.0
        %v1233 = vmax.f32 %v1094, 0.0
        %v1234 = vmax.f32 %v903, 0.0
        %v1235 = vmax.f32 %v905, 0.0
        %v1236 = vmax.f32 %v1096, 0.0
        %v1237 = vmax.f32 %v1098, 0.0
        %v1238 = vmax.f32 %v909, 0.0
        %v1239 = vmax.f32 %v911, 0.0
        %v1240 = vmax.f32 %v1102, 0.0
        %v1241 = vmax.f32 %v1104, 0.0
        %v1242 = vmax.f32 %v913, 0.0
        %v1243 = vmax.f32 %v915, 0.0
        %v1244 = vmax.f32 %v1106, 0.0
        %v1245 = vmax.f32 %v1108, 0.0
        %v1246 = vmax.f32 %v919, 0.0
        %v1247 = vmax.f32 %v921, 0.0
        %v1248 = vmax.f32 %v1112, 0.0
        %v1249 = vmax.f32 %v1114, 0.0
        %v1250 = vmax.f32 %v923, 0.0
        %v1251 = vmax.f32 %v925, 0.0
        %v1252 = vmax.f32 %v1116, 0.0
        %v1253 = vmax.f32 %v1118, 0.0
        %v1254 = vmax.f32 %v929, 0.0
        %v1255 = vmax.f32 %v931, 0.0
        %v1256 = vmax.f32 %v1122, 0.0
        %v1257 = vmax.f32 %v1124, 0.0
        %v1258 = vmax.f32 %v933, 0.0
        %v1259 = vmax.f32 %v935, 0.0
        %v1260 = vmax.f32 %v1126, 0.0
        %v1261 = vmax.f32 %v1128, 0.0
        %v1262 = vmax.f32 %v939, 0.0
        %v1263 = vmax.f32 %v941, 0.0
        %v1264 = vmax.f32 %v1132, 0.0
        %v1265 = vmax.f32 %v1134, 0.0
        %v1266 = vmax.f32 %v943, 0.0
        %v1267 = vmax.f32 %v945, 0.0
        %v1268 = vmax.f32 %v1136, 0.0
        %v1269 = vmax.f32 %v1138, 0.0
        %v1270 = vmax.f32 %v949, 0.0
        %v1271 = vmax.f32 %v951, 0.0
        %v1272 = vmax.f32 %v1142, 0.0
        %v1273 = vmax.f32 %v1144, 0.0
        %v1274 = vmax.f32 %v953, 0.0
        %v1275 = vmax.f32 %v955, 0.0
        %v1276 = vmax.f32 %v1146, 0.0
        %v1277 = vmax.f32 %v1148, 0.0
        %v1278 = vpack.c.bf16 %v1154, %v1150
        %v1279 = vpack.c.bf16 %v1155, %v1151
        %v1280 = vpack.c.bf16 %v1156, %v1152
        %v1281 = vpack.c.bf16 %v1157, %v1153
        %v1282 = vpack.c.bf16 %v1162, %v1158
        %v1283 = vpack.c.bf16 %v1163, %v1159
        %v1284 = vpack.c.bf16 %v1164, %v1160
        %v1285 = vpack.c.bf16 %v1165, %v1161
        %v1286 = vpack.c.bf16 %v1170, %v1166
        %v1287 = vpack.c.bf16 %v1171, %v1167
        %v1288 = vpack.c.bf16 %v1172, %v1168
        %v1289 = vpack.c.bf16 %v1173, %v1169
        %v1290 = vpack.c.bf16 %v1178, %v1174
        %v1291 = vpack.c.bf16 %v1179, %v1175
        %v1292 = vpack.c.bf16 %v1180, %v1176
        %v1293 = vpack.c.bf16 %v1181, %v1177
        %v1294 = vpack.c.bf16 %v1186, %v1182
        %v1295 = vpack.c.bf16 %v1187, %v1183
        %v1296 = vpack.c.bf16 %v1188, %v1184
        %v1297 = vpack.c.bf16 %v1189, %v1185
        %v1298 = vpack.c.bf16 %v1194, %v1190
        %v1299 = vpack.c.bf16 %v1195, %v1191
        %v1300 = vpack.c.bf16 %v1196, %v1192
        %v1301 = vpack.c.bf16 %v1197, %v1193
        %v1302 = vpack.c.bf16 %v1202, %v1198
        %v1303 = vpack.c.bf16 %v1203, %v1199
        %v1304 = vpack.c.bf16 %v1204, %v1200
        %v1305 = vpack.c.bf16 %v1205, %v1201
        %v1306 = vpack.c.bf16 %v1210, %v1206
        %v1307 = vpack.c.bf16 %v1211, %v1207
        %v1308 = vpack.c.bf16 %v1212, %v1208
        %v1309 = vpack.c.bf16 %v1213, %v1209
        %v1310 = vpack.c.bf16 %v1218, %v1214
        %v1311 = vpack.c.bf16 %v1219, %v1215
        %v1312 = vpack.c.bf16 %v1220, %v1216
        %v1313 = vpack.c.bf16 %v1221, %v1217
        %v1314 = vpack.c.bf16 %v1226, %v1222
        %v1315 = vpack.c.bf16 %v1227, %v1223
        %v1316 = vpack.c.bf16 %v1228, %v1224
        %v1317 = vpack.c.bf16 %v1229, %v1225
        %v1318 = vpack.c.bf16 %v1234, %v1230
        %v1319 = vpack.c.bf16 %v1235, %v1231
        %v1320 = vpack.c.bf16 %v1236, %v1232
        %v1321 = vpack.c.bf16 %v1237, %v1233
        %v1322 = vpack.c.bf16 %v1242, %v1238
        %v1323 = vpack.c.bf16 %v1243, %v1239
        %v1324 = vpack.c.bf16 %v1244, %v1240
        %v1325 = vpack.c.bf16 %v1245, %v1241
        %v1326 = vpack.c.bf16 %v1250, %v1246
        %v1327 = vpack.c.bf16 %v1251, %v1247
        %v1328 = vpack.c.bf16 %v1252, %v1248
        %v1329 = vpack.c.bf16 %v1253, %v1249
        %v1330 = vpack.c.bf16 %v1258, %v1254
        %v1331 = vpack.c.bf16 %v1259, %v1255
        %v1332 = vpack.c.bf16 %v1260, %v1256
        %v1333 = vpack.c.bf16 %v1261, %v1257
        %v1334 = vpack.c.bf16 %v1266, %v1262
        %v1335 = vpack.c.bf16 %v1267, %v1263
        %v1336 = vpack.c.bf16 %v1268, %v1264
        %v1337 = vpack.c.bf16 %v1269, %v1265
        %v1338 = vpack.c.bf16 %v1274, %v1270
        %v1339 = vpack.c.bf16 %v1275, %v1271
        %v1340 = vpack.c.bf16 %v1276, %v1272
        %v1341 = vpack.c.bf16 %v1277, %v1273
        %v1342 = vld [vmem:[#allocation5] sm:$0xff]
        %v1343 = vld [vmem:[#allocation5 + $0x8] sm:$0xff]
        %v1344 = vld [vmem:[#allocation5 + $0x10] sm:$0xff]
        %v1345 = vld [vmem:[#allocation5 + $0x18] sm:$0xff]
        %v1346 = vld [vmem:[#allocation5 + $0x20] sm:$0xff]
        %v1347 = vld [vmem:[#allocation5 + $0x28] sm:$0xff]
        %v1348 = vld [vmem:[#allocation5 + $0x30] sm:$0xff]
        %v1349 = vld [vmem:[#allocation5 + $0x38] sm:$0xff]
        %v1350 = vld [vmem:[#allocation5 + $0x40] sm:$0xff]
        %v1351 = vld [vmem:[#allocation5 + $0x48] sm:$0xff]
        %v1352 = vld [vmem:[#allocation5 + $0x50] sm:$0xff]
        %v1353 = vld [vmem:[#allocation5 + $0x58] sm:$0xff]
        %v1354 = vld [vmem:[#allocation5 + $0x60] sm:$0xff]
        %v1355 = vld [vmem:[#allocation5 + $0x68] sm:$0xff]
        %v1356 = vld [vmem:[#allocation5 + $0x70] sm:$0xff]
        %v1357 = vld [vmem:[#allocation5 + $0x78] sm:$0xff]
        %v1358 = vld [vmem:[#allocation5 + $0x80] sm:$0xff]
        %v1359 = vld [vmem:[#allocation5 + $0x88] sm:$0xff]
        %v1360 = vld [vmem:[#allocation5 + $0x90] sm:$0xff]
        %v1361 = vld [vmem:[#allocation5 + $0x98] sm:$0xff]
        %v1362 = vld [vmem:[#allocation5 + $0xa0] sm:$0xff]
        %v1363 = vld [vmem:[#allocation5 + $0xa8] sm:$0xff]
        %v1364 = vld [vmem:[#allocation5 + $0xb0] sm:$0xff]
        %v1365 = vld [vmem:[#allocation5 + $0xb8] sm:$0xff]
        %v1366 = vld [vmem:[#allocation5 + $0xc0] sm:$0xff]
        %v1367 = vld [vmem:[#allocation5 + $0xc8] sm:$0xff]
        %v1368 = vld [vmem:[#allocation5 + $0xd0] sm:$0xff]
        %v1369 = vld [vmem:[#allocation5 + $0xd8] sm:$0xff]
        %v1370 = vld [vmem:[#allocation5 + $0xe0] sm:$0xff]
        %v1371 = vld [vmem:[#allocation5 + $0xe8] sm:$0xff]
        %v1372 = vld [vmem:[#allocation5 + $0xf0] sm:$0xff]
        %v1373 = vld [vmem:[#allocation5 + $0xf8] sm:$0xff]
        %v1374 = vld [vmem:[#allocation5 + $0x100] sm:$0xff]
        %v1375 = vld [vmem:[#allocation5 + $0x108] sm:$0xff]
        %v1376 = vld [vmem:[#allocation5 + $0x110] sm:$0xff]
        %v1377 = vld [vmem:[#allocation5 + $0x118] sm:$0xff]
        %v1378 = vld [vmem:[#allocation5 + $0x120] sm:$0xff]
        %v1379 = vld [vmem:[#allocation5 + $0x128] sm:$0xff]
        %v1380 = vld [vmem:[#allocation5 + $0x130] sm:$0xff]
        %v1381 = vld [vmem:[#allocation5 + $0x138] sm:$0xff]
        %v1382 = vld [vmem:[#allocation5 + $0x140] sm:$0xff]
        %v1383 = vld [vmem:[#allocation5 + $0x148] sm:$0xff]
        %v1384 = vld [vmem:[#allocation5 + $0x150] sm:$0xff]
        %v1385 = vld [vmem:[#allocation5 + $0x158] sm:$0xff]
        %v1386 = vld [vmem:[#allocation5 + $0x160] sm:$0xff]
        %v1387 = vld [vmem:[#allocation5 + $0x168] sm:$0xff]
        %v1388 = vld [vmem:[#allocation5 + $0x170] sm:$0xff]
        %v1389 = vld [vmem:[#allocation5 + $0x178] sm:$0xff]
        %v1390 = vld [vmem:[#allocation5 + $0x180] sm:$0xff]
        %v1391 = vld [vmem:[#allocation5 + $0x188] sm:$0xff]
        %v1392 = vld [vmem:[#allocation5 + $0x190] sm:$0xff]
        %v1393 = vld [vmem:[#allocation5 + $0x198] sm:$0xff]
        %v1394 = vld [vmem:[#allocation5 + $0x1a0] sm:$0xff]
        %v1395 = vld [vmem:[#allocation5 + $0x1a8] sm:$0xff]
        %v1396 = vld [vmem:[#allocation5 + $0x1b0] sm:$0xff]
        %v1397 = vld [vmem:[#allocation5 + $0x1b8] sm:$0xff]
        %v1398 = vld [vmem:[#allocation5 + $0x1c0] sm:$0xff]
        %v1399 = vld [vmem:[#allocation5 + $0x1c8] sm:$0xff]
        %v1400 = vld [vmem:[#allocation5 + $0x1d0] sm:$0xff]
        %v1401 = vld [vmem:[#allocation5 + $0x1d8] sm:$0xff]
        %v1402 = vld [vmem:[#allocation5 + $0x1e0] sm:$0xff]
        %v1403 = vld [vmem:[#allocation5 + $0x1e8] sm:$0xff]
        %v1404 = vld [vmem:[#allocation5 + $0x1f0] sm:$0xff]
        %v1405 = vld [vmem:[#allocation5 + $0x1f8] sm:$0xff]
        %v1406 = vld [vmem:[%s4] sm:$0x3]
        %v1408 = vlaneseq
        %v1409 = vshrl.u32 %v1408, 7
        %v1410 = vsub.s32 0, %v1409
        %v1411 = vrot.slane %v1406, %v1410
        %v1412 = vlaneseq
        %v1413 = vshrl.u32 %v1412, 7
        %v1414 = vsub.s32 1, %v1413
        %v1415 = vrot.slane %v1406, %v1414
        %v1482 = vunpack.c.l.b16 %v1342
        %v1483 = vunpack.c.h.b16 %v1342
        %v1484 = vunpack.c.l.b16 %v1343
        %v1485 = vunpack.c.h.b16 %v1343
        %v1486 = vunpack.c.l.b16 %v1344
        %v1487 = vunpack.c.h.b16 %v1344
        %v1488 = vunpack.c.l.b16 %v1345
        %v1489 = vunpack.c.h.b16 %v1345
        %v1490 = vunpack.c.l.b16 %v1346
        %v1491 = vunpack.c.h.b16 %v1346
        %v1492 = vunpack.c.l.b16 %v1347
        %v1493 = vunpack.c.h.b16 %v1347
        %v1494 = vunpack.c.l.b16 %v1348
        %v1495 = vunpack.c.h.b16 %v1348
        %v1496 = vunpack.c.l.b16 %v1349
        %v1497 = vunpack.c.h.b16 %v1349
        %v1498 = vunpack.c.l.b16 %v1350
        %v1499 = vunpack.c.h.b16 %v1350
        %v1500 = vunpack.c.l.b16 %v1351
        %v1501 = vunpack.c.h.b16 %v1351
        %v1502 = vunpack.c.l.b16 %v1352
        %v1503 = vunpack.c.h.b16 %v1352
        %v1504 = vunpack.c.l.b16 %v1353
        %v1505 = vunpack.c.h.b16 %v1353
        %v1506 = vunpack.c.l.b16 %v1354
        %v1507 = vunpack.c.h.b16 %v1354
        %v1508 = vunpack.c.l.b16 %v1355
        %v1509 = vunpack.c.h.b16 %v1355
        %v1510 = vunpack.c.l.b16 %v1356
        %v1511 = vunpack.c.h.b16 %v1356
        %v1512 = vunpack.c.l.b16 %v1357
        %v1513 = vunpack.c.h.b16 %v1357
        %v1514 = vunpack.c.l.b16 %v1358
        %v1515 = vunpack.c.h.b16 %v1358
        %v1516 = vunpack.c.l.b16 %v1359
        %v1517 = vunpack.c.h.b16 %v1359
        %v1518 = vunpack.c.l.b16 %v1360
        %v1519 = vunpack.c.h.b16 %v1360
        %v1520 = vunpack.c.l.b16 %v1361
        %v1521 = vunpack.c.h.b16 %v1361
        %v1522 = vunpack.c.l.b16 %v1362
        %v1523 = vunpack.c.h.b16 %v1362
        %v1524 = vunpack.c.l.b16 %v1363
        %v1525 = vunpack.c.h.b16 %v1363
        %v1526 = vunpack.c.l.b16 %v1364
        %v1527 = vunpack.c.h.b16 %v1364
        %v1528 = vunpack.c.l.b16 %v1365
        %v1529 = vunpack.c.h.b16 %v1365
        %v1530 = vunpack.c.l.b16 %v1366
        %v1531 = vunpack.c.h.b16 %v1366
        %v1532 = vunpack.c.l.b16 %v1367
        %v1533 = vunpack.c.h.b16 %v1367
        %v1534 = vunpack.c.l.b16 %v1368
        %v1535 = vunpack.c.h.b16 %v1368
        %v1536 = vunpack.c.l.b16 %v1369
        %v1537 = vunpack.c.h.b16 %v1369
        %v1538 = vunpack.c.l.b16 %v1370
        %v1539 = vunpack.c.h.b16 %v1370
        %v1540 = vunpack.c.l.b16 %v1371
        %v1541 = vunpack.c.h.b16 %v1371
        %v1542 = vunpack.c.l.b16 %v1372
        %v1543 = vunpack.c.h.b16 %v1372
        %v1544 = vunpack.c.l.b16 %v1373
        %v1545 = vunpack.c.h.b16 %v1373
        %v1546 = vunpack.c.l.b16 %v1374
        %v1547 = vunpack.c.h.b16 %v1374
        %v1548 = vunpack.c.l.b16 %v1375
        %v1549 = vunpack.c.h.b16 %v1375
        %v1550 = vunpack.c.l.b16 %v1376
        %v1551 = vunpack.c.h.b16 %v1376
        %v1552 = vunpack.c.l.b16 %v1377
        %v1553 = vunpack.c.h.b16 %v1377
        %v1554 = vunpack.c.l.b16 %v1378
        %v1555 = vunpack.c.h.b16 %v1378
        %v1556 = vunpack.c.l.b16 %v1379
        %v1557 = vunpack.c.h.b16 %v1379
        %v1558 = vunpack.c.l.b16 %v1380
        %v1559 = vunpack.c.h.b16 %v1380
        %v1560 = vunpack.c.l.b16 %v1381
        %v1561 = vunpack.c.h.b16 %v1381
        %v1562 = vunpack.c.l.b16 %v1382
        %v1563 = vunpack.c.h.b16 %v1382
        %v1564 = vunpack.c.l.b16 %v1383
        %v1565 = vunpack.c.h.b16 %v1383
        %v1566 = vunpack.c.l.b16 %v1384
        %v1567 = vunpack.c.h.b16 %v1384
        %v1568 = vunpack.c.l.b16 %v1385
        %v1569 = vunpack.c.h.b16 %v1385
        %v1570 = vunpack.c.l.b16 %v1386
        %v1571 = vunpack.c.h.b16 %v1386
        %v1572 = vunpack.c.l.b16 %v1387
        %v1573 = vunpack.c.h.b16 %v1387
        %v1574 = vunpack.c.l.b16 %v1388
        %v1575 = vunpack.c.h.b16 %v1388
        %v1576 = vunpack.c.l.b16 %v1389
        %v1577 = vunpack.c.h.b16 %v1389
        %v1578 = vunpack.c.l.b16 %v1390
        %v1579 = vunpack.c.h.b16 %v1390
        %v1580 = vunpack.c.l.b16 %v1391
        %v1581 = vunpack.c.h.b16 %v1391
        %v1582 = vunpack.c.l.b16 %v1392
        %v1583 = vunpack.c.h.b16 %v1392
        %v1584 = vunpack.c.l.b16 %v1393
        %v1585 = vunpack.c.h.b16 %v1393
        %v1586 = vunpack.c.l.b16 %v1394
        %v1587 = vunpack.c.h.b16 %v1394
        %v1588 = vunpack.c.l.b16 %v1395
        %v1589 = vunpack.c.h.b16 %v1395
        %v1590 = vunpack.c.l.b16 %v1396
        %v1591 = vunpack.c.h.b16 %v1396
        %v1592 = vunpack.c.l.b16 %v1397
        %v1593 = vunpack.c.h.b16 %v1397
        %v1594 = vunpack.c.l.b16 %v1398
        %v1595 = vunpack.c.h.b16 %v1398
        %v1596 = vunpack.c.l.b16 %v1399
        %v1597 = vunpack.c.h.b16 %v1399
        %v1598 = vunpack.c.l.b16 %v1400
        %v1599 = vunpack.c.h.b16 %v1400
        %v1600 = vunpack.c.l.b16 %v1401
        %v1601 = vunpack.c.h.b16 %v1401
        %v1602 = vunpack.c.l.b16 %v1402
        %v1603 = vunpack.c.h.b16 %v1402
        %v1604 = vunpack.c.l.b16 %v1403
        %v1605 = vunpack.c.h.b16 %v1403
        %v1606 = vunpack.c.l.b16 %v1404
        %v1607 = vunpack.c.h.b16 %v1404
        %v1608 = vunpack.c.l.b16 %v1405
        %v1609 = vunpack.c.h.b16 %v1405
        %v1610 = vpack.c.b16 %v1484, %v1482
        %v1611 = vpack.c.b16 %v1485, %v1483
        %v1612 = vpack.c.b16 %v1488, %v1486
        %v1613 = vpack.c.b16 %v1489, %v1487
        %v1614 = vpack.c.b16 %v1492, %v1490
        %v1615 = vpack.c.b16 %v1493, %v1491
        %v1616 = vpack.c.b16 %v1496, %v1494
        %v1617 = vpack.c.b16 %v1497, %v1495
        %v1618 = vpack.c.b16 %v1500, %v1498
        %v1619 = vpack.c.b16 %v1501, %v1499
        %v1620 = vpack.c.b16 %v1504, %v1502
        %v1621 = vpack.c.b16 %v1505, %v1503
        %v1622 = vpack.c.b16 %v1508, %v1506
        %v1623 = vpack.c.b16 %v1509, %v1507
        %v1624 = vpack.c.b16 %v1512, %v1510
        %v1625 = vpack.c.b16 %v1513, %v1511
        %v1626 = vpack.c.b16 %v1516, %v1514
        %v1627 = vpack.c.b16 %v1517, %v1515
        %v1628 = vpack.c.b16 %v1520, %v1518
        %v1629 = vpack.c.b16 %v1521, %v1519
        %v1630 = vpack.c.b16 %v1524, %v1522
        %v1631 = vpack.c.b16 %v1525, %v1523
        %v1632 = vpack.c.b16 %v1528, %v1526
        %v1633 = vpack.c.b16 %v1529, %v1527
        %v1634 = vpack.c.b16 %v1532, %v1530
        %v1635 = vpack.c.b16 %v1533, %v1531
        %v1636 = vpack.c.b16 %v1536, %v1534
        %v1637 = vpack.c.b16 %v1537, %v1535
        %v1638 = vpack.c.b16 %v1540, %v1538
        %v1639 = vpack.c.b16 %v1541, %v1539
        %v1640 = vpack.c.b16 %v1544, %v1542
        %v1641 = vpack.c.b16 %v1545, %v1543
        %v1642 = vpack.c.b16 %v1548, %v1546
        %v1643 = vpack.c.b16 %v1549, %v1547
        %v1644 = vpack.c.b16 %v1552, %v1550
        %v1645 = vpack.c.b16 %v1553, %v1551
        %v1646 = vpack.c.b16 %v1556, %v1554
        %v1647 = vpack.c.b16 %v1557, %v1555
        %v1648 = vpack.c.b16 %v1560, %v1558
        %v1649 = vpack.c.b16 %v1561, %v1559
        %v1650 = vpack.c.b16 %v1564, %v1562
        %v1651 = vpack.c.b16 %v1565, %v1563
        %v1652 = vpack.c.b16 %v1568, %v1566
        %v1653 = vpack.c.b16 %v1569, %v1567
        %v1654 = vpack.c.b16 %v1572, %v1570
        %v1655 = vpack.c.b16 %v1573, %v1571
        %v1656 = vpack.c.b16 %v1576, %v1574
        %v1657 = vpack.c.b16 %v1577, %v1575
        %v1658 = vpack.c.b16 %v1580, %v1578
        %v1659 = vpack.c.b16 %v1581, %v1579
        %v1660 = vpack.c.b16 %v1584, %v1582
        %v1661 = vpack.c.b16 %v1585, %v1583
        %v1662 = vpack.c.b16 %v1588, %v1586
        %v1663 = vpack.c.b16 %v1589, %v1587
        %v1664 = vpack.c.b16 %v1592, %v1590
        %v1665 = vpack.c.b16 %v1593, %v1591
        %v1666 = vpack.c.b16 %v1596, %v1594
        %v1667 = vpack.c.b16 %v1597, %v1595
        %v1668 = vpack.c.b16 %v1600, %v1598
        %v1669 = vpack.c.b16 %v1601, %v1599
        %v1670 = vpack.c.b16 %v1604, %v1602
        %v1671 = vpack.c.b16 %v1605, %v1603
        %v1672 = vpack.c.b16 %v1608, %v1606
        %v1673 = vpack.c.b16 %v1609, %v1607
        %1738 = vmatprep.subr.bf16.mxu0 %v1625
        %1739 = vmatpush1.bf16.msra.mxu0 %v1624
        %1740 = vmatprep.subr.bf16.mxu0 %v1623
        %1741 = vmatpush1.bf16.msra.mxu0 %v1622
        %1742 = vmatprep.subr.bf16.mxu0 %v1621
        %1743 = vmatpush1.bf16.msra.mxu0 %v1620
        %1744 = vmatprep.subr.bf16.mxu0 %v1619
        %1745 = vmatpush1.bf16.msra.mxu0 %v1618
        %1746 = vmatprep.subr.bf16.mxu0 %v1617
        %1747 = vmatpush1.bf16.msra.mxu0 %v1616
        %1748 = vmatprep.subr.bf16.mxu0 %v1615
        %1749 = vmatpush1.bf16.msra.mxu0 %v1614
        %1750 = vmatprep.subr.bf16.mxu0 %v1613
        %1751 = vmatpush1.bf16.msra.mxu0 %v1612
        %1752 = vmatprep.subr.bf16.mxu0 %v1611
        %1753 = vmatpush1.bf16.msra.mxu0 %v1610
        %1754 = vmatprep.subr.bf16.mxu0 %v1641
        %1755 = vmatpush2.bf16.msra.mxu0 %v1640
        %1756 = vmatprep.subr.bf16.mxu0 %v1639
        %1757 = vmatpush2.bf16.msra.mxu0 %v1638
        %1758 = vmatprep.subr.bf16.mxu0 %v1637
        %1759 = vmatpush2.bf16.msra.mxu0 %v1636
        %1760 = vmatprep.subr.bf16.mxu0 %v1635
        %1761 = vmatpush2.bf16.msra.mxu0 %v1634
        %1762 = vmatprep.subr.bf16.mxu0 %v1633
        %1763 = vmatpush2.bf16.msra.mxu0 %v1632
        %1764 = vmatprep.subr.bf16.mxu0 %v1631
        %1765 = vmatpush2.bf16.msra.mxu0 %v1630
        %1766 = vmatprep.subr.bf16.mxu0 %v1629
        %1767 = vmatpush2.bf16.msra.mxu0 %v1628
        %1768 = vmatprep.subr.bf16.mxu0 %v1627
        %1769 = vmatpush2.bf16.msra.mxu0 %v1626
        %1770 = vmatprep.mubr.bf16.mxu0 %v1279
        %1771 = vmatmul.mubr.bf16.gmra.mxu0 %v1278
        %v1772 = vpop.f32.mrf.mxu0
        %v1773 = vadd.f32 %v1411, %v1772
        %v1774 = vpop.f32.mrf.mxu0
        %v1775 = vadd.f32 %v1415, %v1774
        %v1776 = vpop.f32.mrf.mxu0
        %v1777 = vadd.f32 %v1411, %v1776
        %v1778 = vpop.f32.mrf.mxu0
        %v1779 = vadd.f32 %v1415, %v1778
        %1780 = vmatprep.mubr.bf16.mxu0 %v1283
        %1781 = vmatmul.mubr.bf16.gmra.mxu0 %v1282
        %v1782 = vpop.f32.mrf.mxu0
        %v1783 = vadd.f32 %v1411, %v1782
        %v1784 = vpop.f32.mrf.mxu0
        %v1785 = vadd.f32 %v1415, %v1784
        %v1786 = vpop.f32.mrf.mxu0
        %v1787 = vadd.f32 %v1411, %v1786
        %v1788 = vpop.f32.mrf.mxu0
        %v1789 = vadd.f32 %v1415, %v1788
        %1790 = vmatprep.mubr.bf16.mxu0 %v1287
        %1791 = vmatmul.mubr.bf16.gmra.mxu0 %v1286
        %v1792 = vpop.f32.mrf.mxu0
        %v1793 = vadd.f32 %v1411, %v1792
        %v1794 = vpop.f32.mrf.mxu0
        %v1795 = vadd.f32 %v1415, %v1794
        %v1796 = vpop.f32.mrf.mxu0
        %v1797 = vadd.f32 %v1411, %v1796
        %v1798 = vpop.f32.mrf.mxu0
        %v1799 = vadd.f32 %v1415, %v1798
        %1800 = vmatprep.mubr.bf16.mxu0 %v1291
        %1801 = vmatmul.mubr.bf16.gmra.mxu0 %v1290
        %v1802 = vpop.f32.mrf.mxu0
        %v1803 = vadd.f32 %v1411, %v1802
        %v1804 = vpop.f32.mrf.mxu0
        %v1805 = vadd.f32 %v1415, %v1804
        %v1806 = vpop.f32.mrf.mxu0
        %v1807 = vadd.f32 %v1411, %v1806
        %v1808 = vpop.f32.mrf.mxu0
        %v1809 = vadd.f32 %v1415, %v1808
        %1810 = vmatprep.mubr.bf16.mxu0 %v1295
        %1811 = vmatmul.mubr.bf16.gmra.mxu0 %v1294
        %v1812 = vpop.f32.mrf.mxu0
        %v1813 = vadd.f32 %v1411, %v1812
        %v1814 = vpop.f32.mrf.mxu0
        %v1815 = vadd.f32 %v1415, %v1814
        %v1816 = vpop.f32.mrf.mxu0
        %v1817 = vadd.f32 %v1411, %v1816
        %v1818 = vpop.f32.mrf.mxu0
        %v1819 = vadd.f32 %v1415, %v1818
        %1820 = vmatprep.mubr.bf16.mxu0 %v1299
        %1821 = vmatmul.mubr.bf16.gmra.mxu0 %v1298
        %v1822 = vpop.f32.mrf.mxu0
        %v1823 = vadd.f32 %v1411, %v1822
        %v1824 = vpop.f32.mrf.mxu0
        %v1825 = vadd.f32 %v1415, %v1824
        %v1826 = vpop.f32.mrf.mxu0
        %v1827 = vadd.f32 %v1411, %v1826
        %v1828 = vpop.f32.mrf.mxu0
        %v1829 = vadd.f32 %v1415, %v1828
        %1830 = vmatprep.mubr.bf16.mxu0 %v1303
        %1831 = vmatmul.mubr.bf16.gmra.mxu0 %v1302
        %v1832 = vpop.f32.mrf.mxu0
        %v1833 = vadd.f32 %v1411, %v1832
        %v1834 = vpop.f32.mrf.mxu0
        %v1835 = vadd.f32 %v1415, %v1834
        %v1836 = vpop.f32.mrf.mxu0
        %v1837 = vadd.f32 %v1411, %v1836
        %v1838 = vpop.f32.mrf.mxu0
        %v1839 = vadd.f32 %v1415, %v1838
        %1840 = vmatprep.mubr.bf16.mxu0 %v1307
        %1841 = vmatmul.mubr.bf16.gmra.mxu0 %v1306
        %v1842 = vpop.f32.mrf.mxu0
        %v1843 = vadd.f32 %v1411, %v1842
        %v1844 = vpop.f32.mrf.mxu0
        %v1845 = vadd.f32 %v1415, %v1844
        %v1846 = vpop.f32.mrf.mxu0
        %v1847 = vadd.f32 %v1411, %v1846
        %v1848 = vpop.f32.mrf.mxu0
        %v1849 = vadd.f32 %v1415, %v1848
        %1850 = vmatprep.mubr.bf16.mxu0 %v1311
        %1851 = vmatmul.mubr.bf16.gmra.mxu0 %v1310
        %v1852 = vpop.f32.mrf.mxu0
        %v1853 = vadd.f32 %v1411, %v1852
        %v1854 = vpop.f32.mrf.mxu0
        %v1855 = vadd.f32 %v1415, %v1854
        %v1856 = vpop.f32.mrf.mxu0
        %v1857 = vadd.f32 %v1411, %v1856
        %v1858 = vpop.f32.mrf.mxu0
        %v1859 = vadd.f32 %v1415, %v1858
        %1860 = vmatprep.mubr.bf16.mxu0 %v1315
        %1861 = vmatmul.mubr.bf16.gmra.mxu0 %v1314
        %v1862 = vpop.f32.mrf.mxu0
        %v1863 = vadd.f32 %v1411, %v1862
        %v1864 = vpop.f32.mrf.mxu0
        %v1865 = vadd.f32 %v1415, %v1864
        %v1866 = vpop.f32.mrf.mxu0
        %v1867 = vadd.f32 %v1411, %v1866
        %v1868 = vpop.f32.mrf.mxu0
        %v1869 = vadd.f32 %v1415, %v1868
        %1870 = vmatprep.mubr.bf16.mxu0 %v1319
        %1871 = vmatmul.mubr.bf16.gmra.mxu0 %v1318
        %v1872 = vpop.f32.mrf.mxu0
        %v1873 = vadd.f32 %v1411, %v1872
        %v1874 = vpop.f32.mrf.mxu0
        %v1875 = vadd.f32 %v1415, %v1874
        %v1876 = vpop.f32.mrf.mxu0
        %v1877 = vadd.f32 %v1411, %v1876
        %v1878 = vpop.f32.mrf.mxu0
        %v1879 = vadd.f32 %v1415, %v1878
        %1880 = vmatprep.mubr.bf16.mxu0 %v1323
        %1881 = vmatmul.mubr.bf16.gmra.mxu0 %v1322
        %v1882 = vpop.f32.mrf.mxu0
        %v1883 = vadd.f32 %v1411, %v1882
        %v1884 = vpop.f32.mrf.mxu0
        %v1885 = vadd.f32 %v1415, %v1884
        %v1886 = vpop.f32.mrf.mxu0
        %v1887 = vadd.f32 %v1411, %v1886
        %v1888 = vpop.f32.mrf.mxu0
        %v1889 = vadd.f32 %v1415, %v1888
        %1890 = vmatprep.mubr.bf16.mxu0 %v1327
        %1891 = vmatmul.mubr.bf16.gmra.mxu0 %v1326
        %v1892 = vpop.f32.mrf.mxu0
        %v1893 = vadd.f32 %v1411, %v1892
        %v1894 = vpop.f32.mrf.mxu0
        %v1895 = vadd.f32 %v1415, %v1894
        %v1896 = vpop.f32.mrf.mxu0
        %v1897 = vadd.f32 %v1411, %v1896
        %v1898 = vpop.f32.mrf.mxu0
        %v1899 = vadd.f32 %v1415, %v1898
        %1900 = vmatprep.mubr.bf16.mxu0 %v1331
        %1901 = vmatmul.mubr.bf16.gmra.mxu0 %v1330
        %v1902 = vpop.f32.mrf.mxu0
        %v1903 = vadd.f32 %v1411, %v1902
        %v1904 = vpop.f32.mrf.mxu0
        %v1905 = vadd.f32 %v1415, %v1904
        %v1906 = vpop.f32.mrf.mxu0
        %v1907 = vadd.f32 %v1411, %v1906
        %v1908 = vpop.f32.mrf.mxu0
        %v1909 = vadd.f32 %v1415, %v1908
        %1910 = vmatprep.mubr.bf16.mxu0 %v1335
        %1911 = vmatmul.mubr.bf16.gmra.mxu0 %v1334
        %v1912 = vpop.f32.mrf.mxu0
        %v1913 = vadd.f32 %v1411, %v1912
        %v1914 = vpop.f32.mrf.mxu0
        %v1915 = vadd.f32 %v1415, %v1914
        %v1916 = vpop.f32.mrf.mxu0
        %v1917 = vadd.f32 %v1411, %v1916
        %v1918 = vpop.f32.mrf.mxu0
        %v1919 = vadd.f32 %v1415, %v1918
        %1920 = vmatprep.mubr.bf16.mxu0 %v1339
        %1921 = vmatmul.mubr.bf16.gmra.mxu0 %v1338
        %v1922 = vpop.f32.mrf.mxu0
        %v1923 = vadd.f32 %v1411, %v1922
        %v1924 = vpop.f32.mrf.mxu0
        %v1925 = vadd.f32 %v1415, %v1924
        %v1926 = vpop.f32.mrf.mxu0
        %v1927 = vadd.f32 %v1411, %v1926
        %v1928 = vpop.f32.mrf.mxu0
        %v1929 = vadd.f32 %v1415, %v1928
        %1930 = vdwg.mxu0
        %1931 = vmatprep.subr.bf16.mxu0 %v1657
        %1932 = vmatpush1.bf16.msra.mxu0 %v1656
        %1933 = vmatprep.subr.bf16.mxu0 %v1655
        %1934 = vmatpush1.bf16.msra.mxu0 %v1654
        %1935 = vmatprep.subr.bf16.mxu0 %v1653
        %1936 = vmatpush1.bf16.msra.mxu0 %v1652
        %1937 = vmatprep.subr.bf16.mxu0 %v1651
        %1938 = vmatpush1.bf16.msra.mxu0 %v1650
        %1939 = vmatprep.subr.bf16.mxu0 %v1649
        %1940 = vmatpush1.bf16.msra.mxu0 %v1648
        %1941 = vmatprep.subr.bf16.mxu0 %v1647
        %1942 = vmatpush1.bf16.msra.mxu0 %v1646
        %1943 = vmatprep.subr.bf16.mxu0 %v1645
        %1944 = vmatpush1.bf16.msra.mxu0 %v1644
        %1945 = vmatprep.subr.bf16.mxu0 %v1643
        %1946 = vmatpush1.bf16.msra.mxu0 %v1642
        %1947 = vmatprep.subr.bf16.mxu0 %v1673
        %1948 = vmatpush2.bf16.msra.mxu0 %v1672
        %1949 = vmatprep.subr.bf16.mxu0 %v1671
        %1950 = vmatpush2.bf16.msra.mxu0 %v1670
        %1951 = vmatprep.subr.bf16.mxu0 %v1669
        %1952 = vmatpush2.bf16.msra.mxu0 %v1668
        %1953 = vmatprep.subr.bf16.mxu0 %v1667
        %1954 = vmatpush2.bf16.msra.mxu0 %v1666
        %1955 = vmatprep.subr.bf16.mxu0 %v1665
        %1956 = vmatpush2.bf16.msra.mxu0 %v1664
        %1957 = vmatprep.subr.bf16.mxu0 %v1663
        %1958 = vmatpush2.bf16.msra.mxu0 %v1662
        %1959 = vmatprep.subr.bf16.mxu0 %v1661
        %1960 = vmatpush2.bf16.msra.mxu0 %v1660
        %1961 = vmatprep.subr.bf16.mxu0 %v1659
        %1962 = vmatpush2.bf16.msra.mxu0 %v1658
        %1963 = vmatprep.mubr.bf16.mxu0 %v1281
        %1964 = vmatmul.mubr.bf16.gmra.mxu0 %v1280
        %v1965 = vpop.f32.mrf.mxu0
        %v1966 = vadd.f32 %v1773, %v1965
        %v1967 = vpop.f32.mrf.mxu0
        %v1968 = vadd.f32 %v1775, %v1967
        %v1969 = vpop.f32.mrf.mxu0
        %v1970 = vadd.f32 %v1777, %v1969
        %v1971 = vpop.f32.mrf.mxu0
        %v1972 = vadd.f32 %v1779, %v1971
        %1973 = vmatprep.mubr.bf16.mxu0 %v1285
        %1974 = vmatmul.mubr.bf16.gmra.mxu0 %v1284
        %v1975 = vpop.f32.mrf.mxu0
        %v1976 = vadd.f32 %v1783, %v1975
        %v1977 = vpop.f32.mrf.mxu0
        %v1978 = vadd.f32 %v1785, %v1977
        %v1979 = vpop.f32.mrf.mxu0
        %v1980 = vadd.f32 %v1787, %v1979
        %v1981 = vpop.f32.mrf.mxu0
        %v1982 = vadd.f32 %v1789, %v1981
        %1983 = vmatprep.mubr.bf16.mxu0 %v1289
        %1984 = vmatmul.mubr.bf16.gmra.mxu0 %v1288
        %v1985 = vpop.f32.mrf.mxu0
        %v1986 = vadd.f32 %v1793, %v1985
        %v1987 = vpop.f32.mrf.mxu0
        %v1988 = vadd.f32 %v1795, %v1987
        %v1989 = vpop.f32.mrf.mxu0
        %v1990 = vadd.f32 %v1797, %v1989
        %v1991 = vpop.f32.mrf.mxu0
        %v1992 = vadd.f32 %v1799, %v1991
        %1993 = vmatprep.mubr.bf16.mxu0 %v1293
        %1994 = vmatmul.mubr.bf16.gmra.mxu0 %v1292
        %v1995 = vpop.f32.mrf.mxu0
        %v1996 = vadd.f32 %v1803, %v1995
        %v1997 = vpop.f32.mrf.mxu0
        %v1998 = vadd.f32 %v1805, %v1997
        %v1999 = vpop.f32.mrf.mxu0
        %v2000 = vadd.f32 %v1807, %v1999
        %v2001 = vpop.f32.mrf.mxu0
        %v2002 = vadd.f32 %v1809, %v2001
        %2003 = vmatprep.mubr.bf16.mxu0 %v1297
        %2004 = vmatmul.mubr.bf16.gmra.mxu0 %v1296
        %v2005 = vpop.f32.mrf.mxu0
        %v2006 = vadd.f32 %v1813, %v2005
        %v2007 = vpop.f32.mrf.mxu0
        %v2008 = vadd.f32 %v1815, %v2007
        %v2009 = vpop.f32.mrf.mxu0
        %v2010 = vadd.f32 %v1817, %v2009
        %v2011 = vpop.f32.mrf.mxu0
        %v2012 = vadd.f32 %v1819, %v2011
        %2013 = vmatprep.mubr.bf16.mxu0 %v1301
        %2014 = vmatmul.mubr.bf16.gmra.mxu0 %v1300
        %v2015 = vpop.f32.mrf.mxu0
        %v2016 = vadd.f32 %v1823, %v2015
        %v2017 = vpop.f32.mrf.mxu0
        %v2018 = vadd.f32 %v1825, %v2017
        %v2019 = vpop.f32.mrf.mxu0
        %v2020 = vadd.f32 %v1827, %v2019
        %v2021 = vpop.f32.mrf.mxu0
        %v2022 = vadd.f32 %v1829, %v2021
        %2023 = vmatprep.mubr.bf16.mxu0 %v1305
        %2024 = vmatmul.mubr.bf16.gmra.mxu0 %v1304
        %v2025 = vpop.f32.mrf.mxu0
        %v2026 = vadd.f32 %v1833, %v2025
        %v2027 = vpop.f32.mrf.mxu0
        %v2028 = vadd.f32 %v1835, %v2027
        %v2029 = vpop.f32.mrf.mxu0
        %v2030 = vadd.f32 %v1837, %v2029
        %v2031 = vpop.f32.mrf.mxu0
        %v2032 = vadd.f32 %v1839, %v2031
        %2033 = vmatprep.mubr.bf16.mxu0 %v1309
        %2034 = vmatmul.mubr.bf16.gmra.mxu0 %v1308
        %v2035 = vpop.f32.mrf.mxu0
        %v2036 = vadd.f32 %v1843, %v2035
        %v2037 = vpop.f32.mrf.mxu0
        %v2038 = vadd.f32 %v1845, %v2037
        %v2039 = vpop.f32.mrf.mxu0
        %v2040 = vadd.f32 %v1847, %v2039
        %v2041 = vpop.f32.mrf.mxu0
        %v2042 = vadd.f32 %v1849, %v2041
        %2043 = vmatprep.mubr.bf16.mxu0 %v1313
        %2044 = vmatmul.mubr.bf16.gmra.mxu0 %v1312
        %v2045 = vpop.f32.mrf.mxu0
        %v2046 = vadd.f32 %v1853, %v2045
        %v2047 = vpop.f32.mrf.mxu0
        %v2048 = vadd.f32 %v1855, %v2047
        %v2049 = vpop.f32.mrf.mxu0
        %v2050 = vadd.f32 %v1857, %v2049
        %v2051 = vpop.f32.mrf.mxu0
        %v2052 = vadd.f32 %v1859, %v2051
        %2053 = vmatprep.mubr.bf16.mxu0 %v1317
        %2054 = vmatmul.mubr.bf16.gmra.mxu0 %v1316
        %v2055 = vpop.f32.mrf.mxu0
        %v2056 = vadd.f32 %v1863, %v2055
        %v2057 = vpop.f32.mrf.mxu0
        %v2058 = vadd.f32 %v1865, %v2057
        %v2059 = vpop.f32.mrf.mxu0
        %v2060 = vadd.f32 %v1867, %v2059
        %v2061 = vpop.f32.mrf.mxu0
        %v2062 = vadd.f32 %v1869, %v2061
        %2063 = vmatprep.mubr.bf16.mxu0 %v1321
        %2064 = vmatmul.mubr.bf16.gmra.mxu0 %v1320
        %v2065 = vpop.f32.mrf.mxu0
        %v2066 = vadd.f32 %v1873, %v2065
        %v2067 = vpop.f32.mrf.mxu0
        %v2068 = vadd.f32 %v1875, %v2067
        %v2069 = vpop.f32.mrf.mxu0
        %v2070 = vadd.f32 %v1877, %v2069
        %v2071 = vpop.f32.mrf.mxu0
        %v2072 = vadd.f32 %v1879, %v2071
        %2073 = vmatprep.mubr.bf16.mxu0 %v1325
        %2074 = vmatmul.mubr.bf16.gmra.mxu0 %v1324
        %v2075 = vpop.f32.mrf.mxu0
        %v2076 = vadd.f32 %v1883, %v2075
        %v2077 = vpop.f32.mrf.mxu0
        %v2078 = vadd.f32 %v1885, %v2077
        %v2079 = vpop.f32.mrf.mxu0
        %v2080 = vadd.f32 %v1887, %v2079
        %v2081 = vpop.f32.mrf.mxu0
        %v2082 = vadd.f32 %v1889, %v2081
        %2083 = vmatprep.mubr.bf16.mxu0 %v1329
        %2084 = vmatmul.mubr.bf16.gmra.mxu0 %v1328
        %v2085 = vpop.f32.mrf.mxu0
        %v2086 = vadd.f32 %v1893, %v2085
        %v2087 = vpop.f32.mrf.mxu0
        %v2088 = vadd.f32 %v1895, %v2087
        %v2089 = vpop.f32.mrf.mxu0
        %v2090 = vadd.f32 %v1897, %v2089
        %v2091 = vpop.f32.mrf.mxu0
        %v2092 = vadd.f32 %v1899, %v2091
        %2093 = vmatprep.mubr.bf16.mxu0 %v1333
        %2094 = vmatmul.mubr.bf16.gmra.mxu0 %v1332
        %v2095 = vpop.f32.mrf.mxu0
        %v2096 = vadd.f32 %v1903, %v2095
        %v2097 = vpop.f32.mrf.mxu0
        %v2098 = vadd.f32 %v1905, %v2097
        %v2099 = vpop.f32.mrf.mxu0
        %v2100 = vadd.f32 %v1907, %v2099
        %v2101 = vpop.f32.mrf.mxu0
        %v2102 = vadd.f32 %v1909, %v2101
        %2103 = vmatprep.mubr.bf16.mxu0 %v1337
        %2104 = vmatmul.mubr.bf16.gmra.mxu0 %v1336
        %v2105 = vpop.f32.mrf.mxu0
        %v2106 = vadd.f32 %v1913, %v2105
        %v2107 = vpop.f32.mrf.mxu0
        %v2108 = vadd.f32 %v1915, %v2107
        %v2109 = vpop.f32.mrf.mxu0
        %v2110 = vadd.f32 %v1917, %v2109
        %v2111 = vpop.f32.mrf.mxu0
        %v2112 = vadd.f32 %v1919, %v2111
        %2113 = vmatprep.mubr.bf16.mxu0 %v1341
        %2114 = vmatmul.mubr.bf16.gmra.mxu0 %v1340
        %v2115 = vpop.f32.mrf.mxu0
        %v2116 = vadd.f32 %v1923, %v2115
        %v2117 = vpop.f32.mrf.mxu0
        %v2118 = vadd.f32 %v1925, %v2117
        %v2119 = vpop.f32.mrf.mxu0
        %v2120 = vadd.f32 %v1927, %v2119
        %v2121 = vpop.f32.mrf.mxu0
        %v2122 = vadd.f32 %v1929, %v2121
        %2123 = vdwg.mxu0
        %v2124 = vmax.f32 %v1966, 0.0
        %v2125 = vmax.f32 %v1968, 0.0
        %v2126 = vmax.f32 %v1970, 0.0
        %v2127 = vmax.f32 %v1972, 0.0
        %v2128 = vmax.f32 %v1976, 0.0
        %v2129 = vmax.f32 %v1978, 0.0
        %v2130 = vmax.f32 %v1980, 0.0
        %v2131 = vmax.f32 %v1982, 0.0
        %v2132 = vmax.f32 %v1986, 0.0
        %v2133 = vmax.f32 %v1988, 0.0
        %v2134 = vmax.f32 %v1990, 0.0
        %v2135 = vmax.f32 %v1992, 0.0
        %v2136 = vmax.f32 %v1996, 0.0
        %v2137 = vmax.f32 %v1998, 0.0
        %v2138 = vmax.f32 %v2000, 0.0
        %v2139 = vmax.f32 %v2002, 0.0
        %v2140 = vmax.f32 %v2006, 0.0
        %v2141 = vmax.f32 %v2008, 0.0
        %v2142 = vmax.f32 %v2010, 0.0
        %v2143 = vmax.f32 %v2012, 0.0
        %v2144 = vmax.f32 %v2016, 0.0
        %v2145 = vmax.f32 %v2018, 0.0
        %v2146 = vmax.f32 %v2020, 0.0
        %v2147 = vmax.f32 %v2022, 0.0
        %v2148 = vmax.f32 %v2026, 0.0
        %v2149 = vmax.f32 %v2028, 0.0
        %v2150 = vmax.f32 %v2030, 0.0
        %v2151 = vmax.f32 %v2032, 0.0
        %v2152 = vmax.f32 %v2036, 0.0
        %v2153 = vmax.f32 %v2038, 0.0
        %v2154 = vmax.f32 %v2040, 0.0
        %v2155 = vmax.f32 %v2042, 0.0
        %v2156 = vmax.f32 %v2046, 0.0
        %v2157 = vmax.f32 %v2048, 0.0
        %v2158 = vmax.f32 %v2050, 0.0
        %v2159 = vmax.f32 %v2052, 0.0
        %v2160 = vmax.f32 %v2056, 0.0
        %v2161 = vmax.f32 %v2058, 0.0
        %v2162 = vmax.f32 %v2060, 0.0
        %v2163 = vmax.f32 %v2062, 0.0
        %v2164 = vmax.f32 %v2066, 0.0
        %v2165 = vmax.f32 %v2068, 0.0
        %v2166 = vmax.f32 %v2070, 0.0
        %v2167 = vmax.f32 %v2072, 0.0
        %v2168 = vmax.f32 %v2076, 0.0
        %v2169 = vmax.f32 %v2078, 0.0
        %v2170 = vmax.f32 %v2080, 0.0
        %v2171 = vmax.f32 %v2082, 0.0
        %v2172 = vmax.f32 %v2086, 0.0
        %v2173 = vmax.f32 %v2088, 0.0
        %v2174 = vmax.f32 %v2090, 0.0
        %v2175 = vmax.f32 %v2092, 0.0
        %v2176 = vmax.f32 %v2096, 0.0
        %v2177 = vmax.f32 %v2098, 0.0
        %v2178 = vmax.f32 %v2100, 0.0
        %v2179 = vmax.f32 %v2102, 0.0
        %v2180 = vmax.f32 %v2106, 0.0
        %v2181 = vmax.f32 %v2108, 0.0
        %v2182 = vmax.f32 %v2110, 0.0
        %v2183 = vmax.f32 %v2112, 0.0
        %v2184 = vmax.f32 %v2116, 0.0
        %v2185 = vmax.f32 %v2118, 0.0
        %v2186 = vmax.f32 %v2120, 0.0
        %v2187 = vmax.f32 %v2122, 0.0
        %v2188 = vpack.c.bf16 %v2126, %v2124
        %v2189 = vpack.c.bf16 %v2127, %v2125
        %v2190 = vpack.c.bf16 %v2130, %v2128
        %v2191 = vpack.c.bf16 %v2131, %v2129
        %v2192 = vpack.c.bf16 %v2134, %v2132
        %v2193 = vpack.c.bf16 %v2135, %v2133
        %v2194 = vpack.c.bf16 %v2138, %v2136
        %v2195 = vpack.c.bf16 %v2139, %v2137
        %v2196 = vpack.c.bf16 %v2142, %v2140
        %v2197 = vpack.c.bf16 %v2143, %v2141
        %v2198 = vpack.c.bf16 %v2146, %v2144
        %v2199 = vpack.c.bf16 %v2147, %v2145
        %v2200 = vpack.c.bf16 %v2150, %v2148
        %v2201 = vpack.c.bf16 %v2151, %v2149
        %v2202 = vpack.c.bf16 %v2154, %v2152
        %v2203 = vpack.c.bf16 %v2155, %v2153
        %v2204 = vpack.c.bf16 %v2158, %v2156
        %v2205 = vpack.c.bf16 %v2159, %v2157
        %v2206 = vpack.c.bf16 %v2162, %v2160
        %v2207 = vpack.c.bf16 %v2163, %v2161
        %v2208 = vpack.c.bf16 %v2166, %v2164
        %v2209 = vpack.c.bf16 %v2167, %v2165
        %v2210 = vpack.c.bf16 %v2170, %v2168
        %v2211 = vpack.c.bf16 %v2171, %v2169
        %v2212 = vpack.c.bf16 %v2174, %v2172
        %v2213 = vpack.c.bf16 %v2175, %v2173
        %v2214 = vpack.c.bf16 %v2178, %v2176
        %v2215 = vpack.c.bf16 %v2179, %v2177
        %v2216 = vpack.c.bf16 %v2182, %v2180
        %v2217 = vpack.c.bf16 %v2183, %v2181
        %v2218 = vpack.c.bf16 %v2186, %v2184
        %v2219 = vpack.c.bf16 %v2187, %v2185
        %v2220 = vld [vmem:[%s5] sm:$0xf]
        %v2221 = vld [vmem:[%s5 + $0x4] sm:$0xf]
        %v2222 = vld [vmem:[%s5 + $0x8] sm:$0xf]
        %v2223 = vld [vmem:[%s5 + $0xc] sm:$0xf]
        %v2224 = vld [vmem:[%s5 + $0x10] sm:$0xf]
        %v2225 = vld [vmem:[%s5 + $0x14] sm:$0xf]
        %v2226 = vld [vmem:[%s5 + $0x18] sm:$0xf]
        %v2227 = vld [vmem:[%s5 + $0x1c] sm:$0xf]
        %v2228 = vld [vmem:[%s5 + $0x20] sm:$0xf]
        %v2229 = vld [vmem:[%s5 + $0x24] sm:$0xf]
        %v2230 = vld [vmem:[%s5 + $0x28] sm:$0xf]
        %v2231 = vld [vmem:[%s5 + $0x2c] sm:$0xf]
        %v2232 = vld [vmem:[%s5 + $0x30] sm:$0xf]
        %v2233 = vld [vmem:[%s5 + $0x34] sm:$0xf]
        %v2234 = vld [vmem:[%s5 + $0x38] sm:$0xf]
        %v2235 = vld [vmem:[%s5 + $0x3c] sm:$0xf]
        %v2236 = vld [vmem:[%s5 + $0x40] sm:$0xf]
        %v2237 = vld [vmem:[%s5 + $0x44] sm:$0xf]
        %v2238 = vld [vmem:[%s5 + $0x48] sm:$0xf]
        %v2239 = vld [vmem:[%s5 + $0x4c] sm:$0xf]
        %v2240 = vld [vmem:[%s5 + $0x50] sm:$0xf]
        %v2241 = vld [vmem:[%s5 + $0x54] sm:$0xf]
        %v2242 = vld [vmem:[%s5 + $0x58] sm:$0xf]
        %v2243 = vld [vmem:[%s5 + $0x5c] sm:$0xf]
        %v2244 = vld [vmem:[%s5 + $0x60] sm:$0xf]
        %v2245 = vld [vmem:[%s5 + $0x64] sm:$0xf]
        %v2246 = vld [vmem:[%s5 + $0x68] sm:$0xf]
        %v2247 = vld [vmem:[%s5 + $0x6c] sm:$0xf]
        %v2248 = vld [vmem:[%s5 + $0x70] sm:$0xf]
        %v2249 = vld [vmem:[%s5 + $0x74] sm:$0xf]
        %v2250 = vld [vmem:[%s5 + $0x78] sm:$0xf]
        %v2251 = vld [vmem:[%s5 + $0x7c] sm:$0xf]
        %v2252 = vld [vmem:[%s6] sm:$0x1]
        %v2254 = vlaneseq
        %v2255 = vshrl.u32 %v2254, 7
        %v2256 = vsub.s32 0, %v2255
        %v2257 = vrot.slane %v2252, %v2256
        %v2291 = vunpack.c.l.b16 %v2220
        %v2292 = vunpack.c.l.b16 %v2221
        %v2293 = vunpack.c.l.b16 %v2222
        %v2294 = vunpack.c.l.b16 %v2223
        %v2295 = vunpack.c.l.b16 %v2224
        %v2296 = vunpack.c.l.b16 %v2225
        %v2297 = vunpack.c.l.b16 %v2226
        %v2298 = vunpack.c.l.b16 %v2227
        %v2299 = vunpack.c.l.b16 %v2228
        %v2300 = vunpack.c.l.b16 %v2229
        %v2301 = vunpack.c.l.b16 %v2230
        %v2302 = vunpack.c.l.b16 %v2231
        %v2303 = vunpack.c.l.b16 %v2232
        %v2304 = vunpack.c.l.b16 %v2233
        %v2305 = vunpack.c.l.b16 %v2234
        %v2306 = vunpack.c.l.b16 %v2235
        %v2307 = vunpack.c.l.b16 %v2236
        %v2308 = vunpack.c.l.b16 %v2237
        %v2309 = vunpack.c.l.b16 %v2238
        %v2310 = vunpack.c.l.b16 %v2239
        %v2311 = vunpack.c.l.b16 %v2240
        %v2312 = vunpack.c.l.b16 %v2241
        %v2313 = vunpack.c.l.b16 %v2242
        %v2314 = vunpack.c.l.b16 %v2243
        %v2315 = vunpack.c.l.b16 %v2244
        %v2316 = vunpack.c.l.b16 %v2245
        %v2317 = vunpack.c.l.b16 %v2246
        %v2318 = vunpack.c.l.b16 %v2247
        %v2319 = vunpack.c.l.b16 %v2248
        %v2320 = vunpack.c.l.b16 %v2249
        %v2321 = vunpack.c.l.b16 %v2250
        %v2322 = vunpack.c.l.b16 %v2251
        %v2323 = vpack.c.b16 %v2292, %v2291
        %v2324 = vpack.c.b16 %v2294, %v2293
        %v2325 = vpack.c.b16 %v2296, %v2295
        %v2326 = vpack.c.b16 %v2298, %v2297
        %v2327 = vpack.c.b16 %v2300, %v2299
        %v2328 = vpack.c.b16 %v2302, %v2301
        %v2329 = vpack.c.b16 %v2304, %v2303
        %v2330 = vpack.c.b16 %v2306, %v2305
        %v2331 = vpack.c.b16 %v2308, %v2307
        %v2332 = vpack.c.b16 %v2310, %v2309
        %v2333 = vpack.c.b16 %v2312, %v2311
        %v2334 = vpack.c.b16 %v2314, %v2313
        %v2335 = vpack.c.b16 %v2316, %v2315
        %v2336 = vpack.c.b16 %v2318, %v2317
        %v2337 = vpack.c.b16 %v2320, %v2319
        %v2338 = vpack.c.b16 %v2322, %v2321
        %2355 = vmatprep.subr.bf16.mxu0 0
        %2356 = vmatpush1.bf16.msra.mxu0 %v2330
        %2357 = vmatprep.subr.bf16.mxu0 0
        %2358 = vmatpush1.bf16.msra.mxu0 %v2329
        %2359 = vmatprep.subr.bf16.mxu0 0
        %2360 = vmatpush1.bf16.msra.mxu0 %v2328
        %2361 = vmatprep.subr.bf16.mxu0 0
        %2362 = vmatpush1.bf16.msra.mxu0 %v2327
        %2363 = vmatprep.subr.bf16.mxu0 0
        %2364 = vmatpush1.bf16.msra.mxu0 %v2326
        %2365 = vmatprep.subr.bf16.mxu0 0
        %2366 = vmatpush1.bf16.msra.mxu0 %v2325
        %2367 = vmatprep.subr.bf16.mxu0 0
        %2368 = vmatpush1.bf16.msra.mxu0 %v2324
        %2369 = vmatprep.subr.bf16.mxu0 0
        %2370 = vmatpush1.bf16.msra.mxu0 %v2323
        %2371 = vmatprep.subr.bf16.mxu0 0
        %2372 = vmatpush2.bf16.msra.mxu0 %v2338
        %2373 = vmatprep.subr.bf16.mxu0 0
        %2374 = vmatpush2.bf16.msra.mxu0 %v2337
        %2375 = vmatprep.subr.bf16.mxu0 0
        %2376 = vmatpush2.bf16.msra.mxu0 %v2336
        %2377 = vmatprep.subr.bf16.mxu0 0
        %2378 = vmatpush2.bf16.msra.mxu0 %v2335
        %2379 = vmatprep.subr.bf16.mxu0 0
        %2380 = vmatpush2.bf16.msra.mxu0 %v2334
        %2381 = vmatprep.subr.bf16.mxu0 0
        %2382 = vmatpush2.bf16.msra.mxu0 %v2333
        %2383 = vmatprep.subr.bf16.mxu0 0
        %2384 = vmatpush2.bf16.msra.mxu0 %v2332
        %2385 = vmatprep.subr.bf16.mxu0 0
        %2386 = vmatpush2.bf16.msra.mxu0 %v2331
        %2387 = vmatprep.mubr.bf16.mxu0 %v2189
        %2388 = vmatmul.mubr.bf16.gmra.mxu0 %v2188
        %v2389 = vpop.f32.mrf.mxu0
        %v2390 = vadd.f32 %v2257, %v2389
        %v2391 = vpop.f32.mrf.mxu0
        %v2392 = vpop.f32.mrf.mxu0
        %v2393 = vadd.f32 %v2257, %v2392
        %v2394 = vpop.f32.mrf.mxu0
        %2395 = vmatprep.mubr.bf16.mxu0 %v2191
        %2396 = vmatmul.mubr.bf16.gmra.mxu0 %v2190
        %v2397 = vpop.f32.mrf.mxu0
        %v2398 = vadd.f32 %v2257, %v2397
        %v2399 = vpop.f32.mrf.mxu0
        %v2400 = vpop.f32.mrf.mxu0
        %v2401 = vadd.f32 %v2257, %v2400
        %v2402 = vpop.f32.mrf.mxu0
        %2403 = vmatprep.mubr.bf16.mxu0 %v2193
        %2404 = vmatmul.mubr.bf16.gmra.mxu0 %v2192
        %v2405 = vpop.f32.mrf.mxu0
        %v2406 = vadd.f32 %v2257, %v2405
        %v2407 = vpop.f32.mrf.mxu0
        %v2408 = vpop.f32.mrf.mxu0
        %v2409 = vadd.f32 %v2257, %v2408
        %v2410 = vpop.f32.mrf.mxu0
        %2411 = vmatprep.mubr.bf16.mxu0 %v2195
        %2412 = vmatmul.mubr.bf16.gmra.mxu0 %v2194
        %v2413 = vpop.f32.mrf.mxu0
        %v2414 = vadd.f32 %v2257, %v2413
        %v2415 = vpop.f32.mrf.mxu0
        %v2416 = vpop.f32.mrf.mxu0
        %v2417 = vadd.f32 %v2257, %v2416
        %v2418 = vpop.f32.mrf.mxu0
        %2419 = vmatprep.mubr.bf16.mxu0 %v2197
        %2420 = vmatmul.mubr.bf16.gmra.mxu0 %v2196
        %v2421 = vpop.f32.mrf.mxu0
        %v2422 = vadd.f32 %v2257, %v2421
        %v2423 = vpop.f32.mrf.mxu0
        %v2424 = vpop.f32.mrf.mxu0
        %v2425 = vadd.f32 %v2257, %v2424
        %v2426 = vpop.f32.mrf.mxu0
        %2427 = vmatprep.mubr.bf16.mxu0 %v2199
        %2428 = vmatmul.mubr.bf16.gmra.mxu0 %v2198
        %v2429 = vpop.f32.mrf.mxu0
        %v2430 = vadd.f32 %v2257, %v2429
        %v2431 = vpop.f32.mrf.mxu0
        %v2432 = vpop.f32.mrf.mxu0
        %v2433 = vadd.f32 %v2257, %v2432
        %v2434 = vpop.f32.mrf.mxu0
        %2435 = vmatprep.mubr.bf16.mxu0 %v2201
        %2436 = vmatmul.mubr.bf16.gmra.mxu0 %v2200
        %v2437 = vpop.f32.mrf.mxu0
        %v2438 = vadd.f32 %v2257, %v2437
        %v2439 = vpop.f32.mrf.mxu0
        %v2440 = vpop.f32.mrf.mxu0
        %v2441 = vadd.f32 %v2257, %v2440
        %v2442 = vpop.f32.mrf.mxu0
        %2443 = vmatprep.mubr.bf16.mxu0 %v2203
        %2444 = vmatmul.mubr.bf16.gmra.mxu0 %v2202
        %v2445 = vpop.f32.mrf.mxu0
        %v2446 = vadd.f32 %v2257, %v2445
        %v2447 = vpop.f32.mrf.mxu0
        %v2448 = vpop.f32.mrf.mxu0
        %v2449 = vadd.f32 %v2257, %v2448
        %v2450 = vpop.f32.mrf.mxu0
        %2451 = vmatprep.mubr.bf16.mxu0 %v2205
        %2452 = vmatmul.mubr.bf16.gmra.mxu0 %v2204
        %v2453 = vpop.f32.mrf.mxu0
        %v2454 = vadd.f32 %v2257, %v2453
        %v2455 = vpop.f32.mrf.mxu0
        %v2456 = vpop.f32.mrf.mxu0
        %v2457 = vadd.f32 %v2257, %v2456
        %v2458 = vpop.f32.mrf.mxu0
        %2459 = vmatprep.mubr.bf16.mxu0 %v2207
        %2460 = vmatmul.mubr.bf16.gmra.mxu0 %v2206
        %v2461 = vpop.f32.mrf.mxu0
        %v2462 = vadd.f32 %v2257, %v2461
        %v2463 = vpop.f32.mrf.mxu0
        %v2464 = vpop.f32.mrf.mxu0
        %v2465 = vadd.f32 %v2257, %v2464
        %v2466 = vpop.f32.mrf.mxu0
        %2467 = vmatprep.mubr.bf16.mxu0 %v2209
        %2468 = vmatmul.mubr.bf16.gmra.mxu0 %v2208
        %v2469 = vpop.f32.mrf.mxu0
        %v2470 = vadd.f32 %v2257, %v2469
        %v2471 = vpop.f32.mrf.mxu0
        %v2472 = vpop.f32.mrf.mxu0
        %v2473 = vadd.f32 %v2257, %v2472
        %v2474 = vpop.f32.mrf.mxu0
        %2475 = vmatprep.mubr.bf16.mxu0 %v2211
        %2476 = vmatmul.mubr.bf16.gmra.mxu0 %v2210
        %v2477 = vpop.f32.mrf.mxu0
        %v2478 = vadd.f32 %v2257, %v2477
        %v2479 = vpop.f32.mrf.mxu0
        %v2480 = vpop.f32.mrf.mxu0
        %v2481 = vadd.f32 %v2257, %v2480
        %v2482 = vpop.f32.mrf.mxu0
        %2483 = vmatprep.mubr.bf16.mxu0 %v2213
        %2484 = vmatmul.mubr.bf16.gmra.mxu0 %v2212
        %v2485 = vpop.f32.mrf.mxu0
        %v2486 = vadd.f32 %v2257, %v2485
        %v2487 = vpop.f32.mrf.mxu0
        %v2488 = vpop.f32.mrf.mxu0
        %v2489 = vadd.f32 %v2257, %v2488
        %v2490 = vpop.f32.mrf.mxu0
        %2491 = vmatprep.mubr.bf16.mxu0 %v2215
        %2492 = vmatmul.mubr.bf16.gmra.mxu0 %v2214
        %v2493 = vpop.f32.mrf.mxu0
        %v2494 = vadd.f32 %v2257, %v2493
        %v2495 = vpop.f32.mrf.mxu0
        %v2496 = vpop.f32.mrf.mxu0
        %v2497 = vadd.f32 %v2257, %v2496
        %v2498 = vpop.f32.mrf.mxu0
        %2499 = vmatprep.mubr.bf16.mxu0 %v2217
        %2500 = vmatmul.mubr.bf16.gmra.mxu0 %v2216
        %v2501 = vpop.f32.mrf.mxu0
        %v2502 = vadd.f32 %v2257, %v2501
        %v2503 = vpop.f32.mrf.mxu0
        %v2504 = vpop.f32.mrf.mxu0
        %v2505 = vadd.f32 %v2257, %v2504
        %v2506 = vpop.f32.mrf.mxu0
        %2507 = vmatprep.mubr.bf16.mxu0 %v2219
        %2508 = vmatmul.mubr.bf16.gmra.mxu0 %v2218
        %v2509 = vpop.f32.mrf.mxu0
        %v2510 = vadd.f32 %v2257, %v2509
        %v2511 = vpop.f32.mrf.mxu0
        %v2512 = vpop.f32.mrf.mxu0
        %v2513 = vadd.f32 %v2257, %v2512
        %v2514 = vpop.f32.mrf.mxu0
        %2515 = vdwg.mxu0
        %v2516 = vpack.c.bf16 %v2393, %v2390
        %v2517 = vpack.c.bf16 %v2401, %v2398
        %v2518 = vpack.c.bf16 %v2409, %v2406
        %v2519 = vpack.c.bf16 %v2417, %v2414
        %v2520 = vpack.c.bf16 %v2425, %v2422
        %v2521 = vpack.c.bf16 %v2433, %v2430
        %v2522 = vpack.c.bf16 %v2441, %v2438
        %v2523 = vpack.c.bf16 %v2449, %v2446
        %v2524 = vpack.c.bf16 %v2457, %v2454
        %v2525 = vpack.c.bf16 %v2465, %v2462
        %v2526 = vpack.c.bf16 %v2473, %v2470
        %v2527 = vpack.c.bf16 %v2481, %v2478
        %v2528 = vpack.c.bf16 %v2489, %v2486
        %v2529 = vpack.c.bf16 %v2497, %v2494
        %v2530 = vpack.c.bf16 %v2505, %v2502
        %v2531 = vpack.c.bf16 %v2513, %v2510
        %v2532 = vld [vmem:[%s7] sm:$0xff]
        %v2533 = vld [vmem:[%s7 + $0x8] sm:$0xff]
        %v2534 = vld [vmem:[%s7 + $0x10] sm:$0xff]
        %v2535 = vld [vmem:[%s7 + $0x18] sm:$0xff]
        %v2536 = vld [vmem:[%s7 + $0x20] sm:$0xff]
        %v2537 = vld [vmem:[%s7 + $0x28] sm:$0xff]
        %v2538 = vld [vmem:[%s7 + $0x30] sm:$0xff]
        %v2539 = vld [vmem:[%s7 + $0x38] sm:$0xff]
        %v2540 = vld [vmem:[%s7 + $0x40] sm:$0xff]
        %v2541 = vld [vmem:[%s7 + $0x48] sm:$0xff]
        %v2542 = vld [vmem:[%s7 + $0x50] sm:$0xff]
        %v2543 = vld [vmem:[%s7 + $0x58] sm:$0xff]
        %v2544 = vld [vmem:[%s7 + $0x60] sm:$0xff]
        %v2545 = vld [vmem:[%s7 + $0x68] sm:$0xff]
        %v2546 = vld [vmem:[%s7 + $0x70] sm:$0xff]
        %v2547 = vld [vmem:[%s7 + $0x78] sm:$0xff]
        %v2548 = vld [vmem:[%s8] sm:$0x3]
        %v2550 = vlaneseq
        %v2551 = vshrl.u32 %v2550, 7
        %v2552 = vsub.s32 0, %v2551
        %v2553 = vrot.slane %v2548, %v2552
        %v2554 = vlaneseq
        %v2555 = vshrl.u32 %v2554, 7
        %v2556 = vsub.s32 1, %v2555
        %v2557 = vrot.slane %v2548, %v2556
        %v2576 = vunpack.c.l.b16 %v2532
        %v2577 = vunpack.c.h.b16 %v2532
        %v2578 = vunpack.c.l.b16 %v2533
        %v2579 = vunpack.c.h.b16 %v2533
        %v2580 = vunpack.c.l.b16 %v2534
        %v2581 = vunpack.c.h.b16 %v2534
        %v2582 = vunpack.c.l.b16 %v2535
        %v2583 = vunpack.c.h.b16 %v2535
        %v2584 = vunpack.c.l.b16 %v2536
        %v2585 = vunpack.c.h.b16 %v2536
        %v2586 = vunpack.c.l.b16 %v2537
        %v2587 = vunpack.c.h.b16 %v2537
        %v2588 = vunpack.c.l.b16 %v2538
        %v2589 = vunpack.c.h.b16 %v2538
        %v2590 = vunpack.c.l.b16 %v2539
        %v2591 = vunpack.c.h.b16 %v2539
        %v2592 = vunpack.c.l.b16 %v2540
        %v2593 = vunpack.c.h.b16 %v2540
        %v2594 = vunpack.c.l.b16 %v2541
        %v2595 = vunpack.c.h.b16 %v2541
        %v2596 = vunpack.c.l.b16 %v2542
        %v2597 = vunpack.c.h.b16 %v2542
        %v2598 = vunpack.c.l.b16 %v2543
        %v2599 = vunpack.c.h.b16 %v2543
        %v2600 = vunpack.c.l.b16 %v2544
        %v2601 = vunpack.c.h.b16 %v2544
        %v2602 = vunpack.c.l.b16 %v2545
        %v2603 = vunpack.c.h.b16 %v2545
        %v2604 = vunpack.c.l.b16 %v2546
        %v2605 = vunpack.c.h.b16 %v2546
        %v2606 = vunpack.c.l.b16 %v2547
        %v2607 = vunpack.c.h.b16 %v2547
        %v2608 = vpack.c.b16 %v2578, %v2576
        %v2609 = vpack.c.b16 %v2579, %v2577
        %v2610 = vpack.c.b16 %v2582, %v2580
        %v2611 = vpack.c.b16 %v2583, %v2581
        %v2612 = vpack.c.b16 %v2586, %v2584
        %v2613 = vpack.c.b16 %v2587, %v2585
        %v2614 = vpack.c.b16 %v2590, %v2588
        %v2615 = vpack.c.b16 %v2591, %v2589
        %v2616 = vpack.c.b16 %v2594, %v2592
        %v2617 = vpack.c.b16 %v2595, %v2593
        %v2618 = vpack.c.b16 %v2598, %v2596
        %v2619 = vpack.c.b16 %v2599, %v2597
        %v2620 = vpack.c.b16 %v2602, %v2600
        %v2621 = vpack.c.b16 %v2603, %v2601
        %v2622 = vpack.c.b16 %v2606, %v2604
        %v2623 = vpack.c.b16 %v2607, %v2605
        %2640 = vmatprep.subr.bf16.mxu0 %v2623
        %2641 = vmatpush1.bf16.msra.mxu0 %v2622
        %2642 = vmatprep.subr.bf16.mxu0 %v2621
        %2643 = vmatpush1.bf16.msra.mxu0 %v2620
        %2644 = vmatprep.subr.bf16.mxu0 %v2619
        %2645 = vmatpush1.bf16.msra.mxu0 %v2618
        %2646 = vmatprep.subr.bf16.mxu0 %v2617
        %2647 = vmatpush1.bf16.msra.mxu0 %v2616
        %2648 = vmatprep.subr.bf16.mxu0 %v2615
        %2649 = vmatpush1.bf16.msra.mxu0 %v2614
        %2650 = vmatprep.subr.bf16.mxu0 %v2613
        %2651 = vmatpush1.bf16.msra.mxu0 %v2612
        %2652 = vmatprep.subr.bf16.mxu0 %v2611
        %2653 = vmatpush1.bf16.msra.mxu0 %v2610
        %2654 = vmatprep.subr.bf16.mxu0 %v2609
        %2655 = vmatpush1.bf16.msra.mxu0 %v2608
        %2656 = vmatprep.subr.bf16.mxu0 0
        %2657 = vmatpush2.bf16.msra.mxu0 0
        %2658 = vmatprep.subr.bf16.mxu0 0
        %2659 = vmatpush2.bf16.msra.mxu0 0
        %2660 = vmatprep.subr.bf16.mxu0 0
        %2661 = vmatpush2.bf16.msra.mxu0 0
        %2662 = vmatprep.subr.bf16.mxu0 0
        %2663 = vmatpush2.bf16.msra.mxu0 0
        %2664 = vmatprep.subr.bf16.mxu0 0
        %2665 = vmatpush2.bf16.msra.mxu0 0
        %2666 = vmatprep.subr.bf16.mxu0 0
        %2667 = vmatpush2.bf16.msra.mxu0 0
        %2668 = vmatprep.subr.bf16.mxu0 0
        %2669 = vmatpush2.bf16.msra.mxu0 0
        %2670 = vmatprep.subr.bf16.mxu0 0
        %2671 = vmatpush2.bf16.msra.mxu0 0
        %2672 = vmatprep.mubr.bf16.mxu0 0
        %2673 = vmatmul.mubr.bf16.gmra.mxu0 %v2516
        %v2674 = vpop.f32.mrf.mxu0
        %v2675 = vadd.f32 %v2553, %v2674
        %v2676 = vpop.f32.mrf.mxu0
        %v2677 = vadd.f32 %v2557, %v2676
        %v2678 = vpop.f32.mrf.mxu0
        %v2679 = vadd.f32 %v2553, %v2678
        %v2680 = vpop.f32.mrf.mxu0
        %v2681 = vadd.f32 %v2557, %v2680
        %2682 = vmatprep.mubr.bf16.mxu0 0
        %2683 = vmatmul.mubr.bf16.gmra.mxu0 %v2517
        %v2684 = vpop.f32.mrf.mxu0
        %v2685 = vadd.f32 %v2553, %v2684
        %v2686 = vpop.f32.mrf.mxu0
        %v2687 = vadd.f32 %v2557, %v2686
        %v2688 = vpop.f32.mrf.mxu0
        %v2689 = vadd.f32 %v2553, %v2688
        %v2690 = vpop.f32.mrf.mxu0
        %v2691 = vadd.f32 %v2557, %v2690
        %2692 = vmatprep.mubr.bf16.mxu0 0
        %2693 = vmatmul.mubr.bf16.gmra.mxu0 %v2518
        %v2694 = vpop.f32.mrf.mxu0
        %v2695 = vadd.f32 %v2553, %v2694
        %v2696 = vpop.f32.mrf.mxu0
        %v2697 = vadd.f32 %v2557, %v2696
        %v2698 = vpop.f32.mrf.mxu0
        %v2699 = vadd.f32 %v2553, %v2698
        %v2700 = vpop.f32.mrf.mxu0
        %v2701 = vadd.f32 %v2557, %v2700
        %2702 = vmatprep.mubr.bf16.mxu0 0
        %2703 = vmatmul.mubr.bf16.gmra.mxu0 %v2519
        %v2704 = vpop.f32.mrf.mxu0
        %v2705 = vadd.f32 %v2553, %v2704
        %v2706 = vpop.f32.mrf.mxu0
        %v2707 = vadd.f32 %v2557, %v2706
        %v2708 = vpop.f32.mrf.mxu0
        %v2709 = vadd.f32 %v2553, %v2708
        %v2710 = vpop.f32.mrf.mxu0
        %v2711 = vadd.f32 %v2557, %v2710
        %2712 = vmatprep.mubr.bf16.mxu0 0
        %2713 = vmatmul.mubr.bf16.gmra.mxu0 %v2520
        %v2714 = vpop.f32.mrf.mxu0
        %v2715 = vadd.f32 %v2553, %v2714
        %v2716 = vpop.f32.mrf.mxu0
        %v2717 = vadd.f32 %v2557, %v2716
        %v2718 = vpop.f32.mrf.mxu0
        %v2719 = vadd.f32 %v2553, %v2718
        %v2720 = vpop.f32.mrf.mxu0
        %v2721 = vadd.f32 %v2557, %v2720
        %2722 = vmatprep.mubr.bf16.mxu0 0
        %2723 = vmatmul.mubr.bf16.gmra.mxu0 %v2521
        %v2724 = vpop.f32.mrf.mxu0
        %v2725 = vadd.f32 %v2553, %v2724
        %v2726 = vpop.f32.mrf.mxu0
        %v2727 = vadd.f32 %v2557, %v2726
        %v2728 = vpop.f32.mrf.mxu0
        %v2729 = vadd.f32 %v2553, %v2728
        %v2730 = vpop.f32.mrf.mxu0
        %v2731 = vadd.f32 %v2557, %v2730
        %2732 = vmatprep.mubr.bf16.mxu0 0
        %2733 = vmatmul.mubr.bf16.gmra.mxu0 %v2522
        %v2734 = vpop.f32.mrf.mxu0
        %v2735 = vadd.f32 %v2553, %v2734
        %v2736 = vpop.f32.mrf.mxu0
        %v2737 = vadd.f32 %v2557, %v2736
        %v2738 = vpop.f32.mrf.mxu0
        %v2739 = vadd.f32 %v2553, %v2738
        %v2740 = vpop.f32.mrf.mxu0
        %v2741 = vadd.f32 %v2557, %v2740
        %2742 = vmatprep.mubr.bf16.mxu0 0
        %2743 = vmatmul.mubr.bf16.gmra.mxu0 %v2523
        %v2744 = vpop.f32.mrf.mxu0
        %v2745 = vadd.f32 %v2553, %v2744
        %v2746 = vpop.f32.mrf.mxu0
        %v2747 = vadd.f32 %v2557, %v2746
        %v2748 = vpop.f32.mrf.mxu0
        %v2749 = vadd.f32 %v2553, %v2748
        %v2750 = vpop.f32.mrf.mxu0
        %v2751 = vadd.f32 %v2557, %v2750
        %2752 = vmatprep.mubr.bf16.mxu0 0
        %2753 = vmatmul.mubr.bf16.gmra.mxu0 %v2524
        %v2754 = vpop.f32.mrf.mxu0
        %v2755 = vadd.f32 %v2553, %v2754
        %v2756 = vpop.f32.mrf.mxu0
        %v2757 = vadd.f32 %v2557, %v2756
        %v2758 = vpop.f32.mrf.mxu0
        %v2759 = vadd.f32 %v2553, %v2758
        %v2760 = vpop.f32.mrf.mxu0
        %v2761 = vadd.f32 %v2557, %v2760
        %2762 = vmatprep.mubr.bf16.mxu0 0
        %2763 = vmatmul.mubr.bf16.gmra.mxu0 %v2525
        %v2764 = vpop.f32.mrf.mxu0
        %v2765 = vadd.f32 %v2553, %v2764
        %v2766 = vpop.f32.mrf.mxu0
        %v2767 = vadd.f32 %v2557, %v2766
        %v2768 = vpop.f32.mrf.mxu0
        %v2769 = vadd.f32 %v2553, %v2768
        %v2770 = vpop.f32.mrf.mxu0
        %v2771 = vadd.f32 %v2557, %v2770
        %2772 = vmatprep.mubr.bf16.mxu0 0
        %2773 = vmatmul.mubr.bf16.gmra.mxu0 %v2526
        %v2774 = vpop.f32.mrf.mxu0
        %v2775 = vadd.f32 %v2553, %v2774
        %v2776 = vpop.f32.mrf.mxu0
        %v2777 = vadd.f32 %v2557, %v2776
        %v2778 = vpop.f32.mrf.mxu0
        %v2779 = vadd.f32 %v2553, %v2778
        %v2780 = vpop.f32.mrf.mxu0
        %v2781 = vadd.f32 %v2557, %v2780
        %2782 = vmatprep.mubr.bf16.mxu0 0
        %2783 = vmatmul.mubr.bf16.gmra.mxu0 %v2527
        %v2784 = vpop.f32.mrf.mxu0
        %v2785 = vadd.f32 %v2553, %v2784
        %v2786 = vpop.f32.mrf.mxu0
        %v2787 = vadd.f32 %v2557, %v2786
        %v2788 = vpop.f32.mrf.mxu0
        %v2789 = vadd.f32 %v2553, %v2788
        %v2790 = vpop.f32.mrf.mxu0
        %v2791 = vadd.f32 %v2557, %v2790
        %2792 = vmatprep.mubr.bf16.mxu0 0
        %2793 = vmatmul.mubr.bf16.gmra.mxu0 %v2528
        %v2794 = vpop.f32.mrf.mxu0
        %v2795 = vadd.f32 %v2553, %v2794
        %v2796 = vpop.f32.mrf.mxu0
        %v2797 = vadd.f32 %v2557, %v2796
        %v2798 = vpop.f32.mrf.mxu0
        %v2799 = vadd.f32 %v2553, %v2798
        %v2800 = vpop.f32.mrf.mxu0
        %v2801 = vadd.f32 %v2557, %v2800
        %2802 = vmatprep.mubr.bf16.mxu0 0
        %2803 = vmatmul.mubr.bf16.gmra.mxu0 %v2529
        %v2804 = vpop.f32.mrf.mxu0
        %v2805 = vadd.f32 %v2553, %v2804
        %v2806 = vpop.f32.mrf.mxu0
        %v2807 = vadd.f32 %v2557, %v2806
        %v2808 = vpop.f32.mrf.mxu0
        %v2809 = vadd.f32 %v2553, %v2808
        %v2810 = vpop.f32.mrf.mxu0
        %v2811 = vadd.f32 %v2557, %v2810
        %2812 = vmatprep.mubr.bf16.mxu0 0
        %2813 = vmatmul.mubr.bf16.gmra.mxu0 %v2530
        %v2814 = vpop.f32.mrf.mxu0
        %v2815 = vadd.f32 %v2553, %v2814
        %v2816 = vpop.f32.mrf.mxu0
        %v2817 = vadd.f32 %v2557, %v2816
        %v2818 = vpop.f32.mrf.mxu0
        %v2819 = vadd.f32 %v2553, %v2818
        %v2820 = vpop.f32.mrf.mxu0
        %v2821 = vadd.f32 %v2557, %v2820
        %2822 = vmatprep.mubr.bf16.mxu0 0
        %2823 = vmatmul.mubr.bf16.gmra.mxu0 %v2531
        %v2824 = vpop.f32.mrf.mxu0
        %v2825 = vadd.f32 %v2553, %v2824
        %v2826 = vpop.f32.mrf.mxu0
        %v2827 = vadd.f32 %v2557, %v2826
        %v2828 = vpop.f32.mrf.mxu0
        %v2829 = vadd.f32 %v2553, %v2828
        %v2830 = vpop.f32.mrf.mxu0
        %v2831 = vadd.f32 %v2557, %v2830
        %2832 = vdwg.mxu0
        %v2833 = vmax.f32 %v2675, 0.0
        %v2834 = vmax.f32 %v2677, 0.0
        %v2835 = vmax.f32 %v2679, 0.0
        %v2836 = vmax.f32 %v2681, 0.0
        %v2837 = vmax.f32 %v2685, 0.0
        %v2838 = vmax.f32 %v2687, 0.0
        %v2839 = vmax.f32 %v2689, 0.0
        %v2840 = vmax.f32 %v2691, 0.0
        %v2841 = vmax.f32 %v2695, 0.0
        %v2842 = vmax.f32 %v2697, 0.0
        %v2843 = vmax.f32 %v2699, 0.0
        %v2844 = vmax.f32 %v2701, 0.0
        %v2845 = vmax.f32 %v2705, 0.0
        %v2846 = vmax.f32 %v2707, 0.0
        %v2847 = vmax.f32 %v2709, 0.0
        %v2848 = vmax.f32 %v2711, 0.0
        %v2849 = vmax.f32 %v2715, 0.0
        %v2850 = vmax.f32 %v2717, 0.0
        %v2851 = vmax.f32 %v2719, 0.0
        %v2852 = vmax.f32 %v2721, 0.0
        %v2853 = vmax.f32 %v2725, 0.0
        %v2854 = vmax.f32 %v2727, 0.0
        %v2855 = vmax.f32 %v2729, 0.0
        %v2856 = vmax.f32 %v2731, 0.0
        %v2857 = vmax.f32 %v2735, 0.0
        %v2858 = vmax.f32 %v2737, 0.0
        %v2859 = vmax.f32 %v2739, 0.0
        %v2860 = vmax.f32 %v2741, 0.0
        %v2861 = vmax.f32 %v2745, 0.0
        %v2862 = vmax.f32 %v2747, 0.0
        %v2863 = vmax.f32 %v2749, 0.0
        %v2864 = vmax.f32 %v2751, 0.0
        %v2865 = vmax.f32 %v2755, 0.0
        %v2866 = vmax.f32 %v2757, 0.0
        %v2867 = vmax.f32 %v2759, 0.0
        %v2868 = vmax.f32 %v2761, 0.0
        %v2869 = vmax.f32 %v2765, 0.0
        %v2870 = vmax.f32 %v2767, 0.0
        %v2871 = vmax.f32 %v2769, 0.0
        %v2872 = vmax.f32 %v2771, 0.0
        %v2873 = vmax.f32 %v2775, 0.0
        %v2874 = vmax.f32 %v2777, 0.0
        %v2875 = vmax.f32 %v2779, 0.0
        %v2876 = vmax.f32 %v2781, 0.0
        %v2877 = vmax.f32 %v2785, 0.0
        %v2878 = vmax.f32 %v2787, 0.0
        %v2879 = vmax.f32 %v2789, 0.0
        %v2880 = vmax.f32 %v2791, 0.0
        %v2881 = vmax.f32 %v2795, 0.0
        %v2882 = vmax.f32 %v2797, 0.0
        %v2883 = vmax.f32 %v2799, 0.0
        %v2884 = vmax.f32 %v2801, 0.0
        %v2885 = vmax.f32 %v2805, 0.0
        %v2886 = vmax.f32 %v2807, 0.0
        %v2887 = vmax.f32 %v2809, 0.0
        %v2888 = vmax.f32 %v2811, 0.0
        %v2889 = vmax.f32 %v2815, 0.0
        %v2890 = vmax.f32 %v2817, 0.0
        %v2891 = vmax.f32 %v2819, 0.0
        %v2892 = vmax.f32 %v2821, 0.0
        %v2893 = vmax.f32 %v2825, 0.0
        %v2894 = vmax.f32 %v2827, 0.0
        %v2895 = vmax.f32 %v2829, 0.0
        %v2896 = vmax.f32 %v2831, 0.0
        %v2897 = vpack.c.bf16 %v2835, %v2833
        %v2898 = vpack.c.bf16 %v2836, %v2834
        %v2899 = vpack.c.bf16 %v2839, %v2837
        %v2900 = vpack.c.bf16 %v2840, %v2838
        %v2901 = vpack.c.bf16 %v2843, %v2841
        %v2902 = vpack.c.bf16 %v2844, %v2842
        %v2903 = vpack.c.bf16 %v2847, %v2845
        %v2904 = vpack.c.bf16 %v2848, %v2846
        %v2905 = vpack.c.bf16 %v2851, %v2849
        %v2906 = vpack.c.bf16 %v2852, %v2850
        %v2907 = vpack.c.bf16 %v2855, %v2853
        %v2908 = vpack.c.bf16 %v2856, %v2854
        %v2909 = vpack.c.bf16 %v2859, %v2857
        %v2910 = vpack.c.bf16 %v2860, %v2858
        %v2911 = vpack.c.bf16 %v2863, %v2861
        %v2912 = vpack.c.bf16 %v2864, %v2862
        %v2913 = vpack.c.bf16 %v2867, %v2865
        %v2914 = vpack.c.bf16 %v2868, %v2866
        %v2915 = vpack.c.bf16 %v2871, %v2869
        %v2916 = vpack.c.bf16 %v2872, %v2870
        %v2917 = vpack.c.bf16 %v2875, %v2873
        %v2918 = vpack.c.bf16 %v2876, %v2874
        %v2919 = vpack.c.bf16 %v2879, %v2877
        %v2920 = vpack.c.bf16 %v2880, %v2878
        %v2921 = vpack.c.bf16 %v2883, %v2881
        %v2922 = vpack.c.bf16 %v2884, %v2882
        %v2923 = vpack.c.bf16 %v2887, %v2885
        %v2924 = vpack.c.bf16 %v2888, %v2886
        %v2925 = vpack.c.bf16 %v2891, %v2889
        %v2926 = vpack.c.bf16 %v2892, %v2890
        %v2927 = vpack.c.bf16 %v2895, %v2893
        %v2928 = vpack.c.bf16 %v2896, %v2894
        %v2929 = vld [vmem:[#allocation7] sm:$0xff]
        %v2930 = vld [vmem:[#allocation7 + $0x8] sm:$0xff]
        %v2931 = vld [vmem:[#allocation7 + $0x10] sm:$0xff]
        %v2932 = vld [vmem:[#allocation7 + $0x18] sm:$0xff]
        %v2933 = vld [vmem:[#allocation7 + $0x20] sm:$0xff]
        %v2934 = vld [vmem:[#allocation7 + $0x28] sm:$0xff]
        %v2935 = vld [vmem:[#allocation7 + $0x30] sm:$0xff]
        %v2936 = vld [vmem:[#allocation7 + $0x38] sm:$0xff]
        %v2937 = vld [vmem:[#allocation7 + $0x40] sm:$0xff]
        %v2938 = vld [vmem:[#allocation7 + $0x48] sm:$0xff]
        %v2939 = vld [vmem:[#allocation7 + $0x50] sm:$0xff]
        %v2940 = vld [vmem:[#allocation7 + $0x58] sm:$0xff]
        %v2941 = vld [vmem:[#allocation7 + $0x60] sm:$0xff]
        %v2942 = vld [vmem:[#allocation7 + $0x68] sm:$0xff]
        %v2943 = vld [vmem:[#allocation7 + $0x70] sm:$0xff]
        %v2944 = vld [vmem:[#allocation7 + $0x78] sm:$0xff]
        %v2945 = vld [vmem:[#allocation7 + $0x80] sm:$0xff]
        %v2946 = vld [vmem:[#allocation7 + $0x88] sm:$0xff]
        %v2947 = vld [vmem:[#allocation7 + $0x90] sm:$0xff]
        %v2948 = vld [vmem:[#allocation7 + $0x98] sm:$0xff]
        %v2949 = vld [vmem:[#allocation7 + $0xa0] sm:$0xff]
        %v2950 = vld [vmem:[#allocation7 + $0xa8] sm:$0xff]
        %v2951 = vld [vmem:[#allocation7 + $0xb0] sm:$0xff]
        %v2952 = vld [vmem:[#allocation7 + $0xb8] sm:$0xff]
        %v2953 = vld [vmem:[#allocation7 + $0xc0] sm:$0xff]
        %v2954 = vld [vmem:[#allocation7 + $0xc8] sm:$0xff]
        %v2955 = vld [vmem:[#allocation7 + $0xd0] sm:$0xff]
        %v2956 = vld [vmem:[#allocation7 + $0xd8] sm:$0xff]
        %v2957 = vld [vmem:[#allocation7 + $0xe0] sm:$0xff]
        %v2958 = vld [vmem:[#allocation7 + $0xe8] sm:$0xff]
        %v2959 = vld [vmem:[#allocation7 + $0xf0] sm:$0xff]
        %v2960 = vld [vmem:[#allocation7 + $0xf8] sm:$0xff]
        %v2961 = vld [vmem:[#allocation7 + $0x100] sm:$0xff]
        %v2962 = vld [vmem:[#allocation7 + $0x108] sm:$0xff]
        %v2963 = vld [vmem:[#allocation7 + $0x110] sm:$0xff]
        %v2964 = vld [vmem:[#allocation7 + $0x118] sm:$0xff]
        %v2965 = vld [vmem:[#allocation7 + $0x120] sm:$0xff]
        %v2966 = vld [vmem:[#allocation7 + $0x128] sm:$0xff]
        %v2967 = vld [vmem:[#allocation7 + $0x130] sm:$0xff]
        %v2968 = vld [vmem:[#allocation7 + $0x138] sm:$0xff]
        %v2969 = vld [vmem:[#allocation7 + $0x140] sm:$0xff]
        %v2970 = vld [vmem:[#allocation7 + $0x148] sm:$0xff]
        %v2971 = vld [vmem:[#allocation7 + $0x150] sm:$0xff]
        %v2972 = vld [vmem:[#allocation7 + $0x158] sm:$0xff]
        %v2973 = vld [vmem:[#allocation7 + $0x160] sm:$0xff]
        %v2974 = vld [vmem:[#allocation7 + $0x168] sm:$0xff]
        %v2975 = vld [vmem:[#allocation7 + $0x170] sm:$0xff]
        %v2976 = vld [vmem:[#allocation7 + $0x178] sm:$0xff]
        %v2977 = vld [vmem:[#allocation7 + $0x180] sm:$0xff]
        %v2978 = vld [vmem:[#allocation7 + $0x188] sm:$0xff]
        %v2979 = vld [vmem:[#allocation7 + $0x190] sm:$0xff]
        %v2980 = vld [vmem:[#allocation7 + $0x198] sm:$0xff]
        %v2981 = vld [vmem:[#allocation7 + $0x1a0] sm:$0xff]
        %v2982 = vld [vmem:[#allocation7 + $0x1a8] sm:$0xff]
        %v2983 = vld [vmem:[#allocation7 + $0x1b0] sm:$0xff]
        %v2984 = vld [vmem:[#allocation7 + $0x1b8] sm:$0xff]
        %v2985 = vld [vmem:[#allocation7 + $0x1c0] sm:$0xff]
        %v2986 = vld [vmem:[#allocation7 + $0x1c8] sm:$0xff]
        %v2987 = vld [vmem:[#allocation7 + $0x1d0] sm:$0xff]
        %v2988 = vld [vmem:[#allocation7 + $0x1d8] sm:$0xff]
        %v2989 = vld [vmem:[#allocation7 + $0x1e0] sm:$0xff]
        %v2990 = vld [vmem:[#allocation7 + $0x1e8] sm:$0xff]
        %v2991 = vld [vmem:[#allocation7 + $0x1f0] sm:$0xff]
        %v2992 = vld [vmem:[#allocation7 + $0x1f8] sm:$0xff]
        %v2993 = vld [vmem:[%s10] sm:$0xf]
        %v2995 = vlaneseq
        %v2996 = vshrl.u32 %v2995, 7
        %v2997 = vsub.s32 0, %v2996
        %v2998 = vrot.slane %v2993, %v2997
        %v2999 = vlaneseq
        %v3000 = vshrl.u32 %v2999, 7
        %v3001 = vsub.s32 1, %v3000
        %v3002 = vrot.slane %v2993, %v3001
        %v3003 = vlaneseq
        %v3004 = vshrl.u32 %v3003, 7
        %v3005 = vsub.s32 2, %v3004
        %v3006 = vrot.slane %v2993, %v3005
        %v3007 = vlaneseq
        %v3008 = vshrl.u32 %v3007, 7
        %v3009 = vsub.s32 3, %v3008
        %v3010 = vrot.slane %v2993, %v3009
        %v3079 = vunpack.c.l.b16 %v2929
        %v3080 = vunpack.c.h.b16 %v2929
        %v3081 = vunpack.c.l.b16 %v2930
        %v3082 = vunpack.c.h.b16 %v2930
        %v3083 = vunpack.c.l.b16 %v2931
        %v3084 = vunpack.c.h.b16 %v2931
        %v3085 = vunpack.c.l.b16 %v2932
        %v3086 = vunpack.c.h.b16 %v2932
        %v3087 = vunpack.c.l.b16 %v2933
        %v3088 = vunpack.c.h.b16 %v2933
        %v3089 = vunpack.c.l.b16 %v2934
        %v3090 = vunpack.c.h.b16 %v2934
        %v3091 = vunpack.c.l.b16 %v2935
        %v3092 = vunpack.c.h.b16 %v2935
        %v3093 = vunpack.c.l.b16 %v2936
        %v3094 = vunpack.c.h.b16 %v2936
        %v3095 = vunpack.c.l.b16 %v2937
        %v3096 = vunpack.c.h.b16 %v2937
        %v3097 = vunpack.c.l.b16 %v2938
        %v3098 = vunpack.c.h.b16 %v2938
        %v3099 = vunpack.c.l.b16 %v2939
        %v3100 = vunpack.c.h.b16 %v2939
        %v3101 = vunpack.c.l.b16 %v2940
        %v3102 = vunpack.c.h.b16 %v2940
        %v3103 = vunpack.c.l.b16 %v2941
        %v3104 = vunpack.c.h.b16 %v2941
        %v3105 = vunpack.c.l.b16 %v2942
        %v3106 = vunpack.c.h.b16 %v2942
        %v3107 = vunpack.c.l.b16 %v2943
        %v3108 = vunpack.c.h.b16 %v2943
        %v3109 = vunpack.c.l.b16 %v2944
        %v3110 = vunpack.c.h.b16 %v2944
        %v3111 = vunpack.c.l.b16 %v2945
        %v3112 = vunpack.c.h.b16 %v2945
        %v3113 = vunpack.c.l.b16 %v2946
        %v3114 = vunpack.c.h.b16 %v2946
        %v3115 = vunpack.c.l.b16 %v2947
        %v3116 = vunpack.c.h.b16 %v2947
        %v3117 = vunpack.c.l.b16 %v2948
        %v3118 = vunpack.c.h.b16 %v2948
        %v3119 = vunpack.c.l.b16 %v2949
        %v3120 = vunpack.c.h.b16 %v2949
        %v3121 = vunpack.c.l.b16 %v2950
        %v3122 = vunpack.c.h.b16 %v2950
        %v3123 = vunpack.c.l.b16 %v2951
        %v3124 = vunpack.c.h.b16 %v2951
        %v3125 = vunpack.c.l.b16 %v2952
        %v3126 = vunpack.c.h.b16 %v2952
        %v3127 = vunpack.c.l.b16 %v2953
        %v3128 = vunpack.c.h.b16 %v2953
        %v3129 = vunpack.c.l.b16 %v2954
        %v3130 = vunpack.c.h.b16 %v2954
        %v3131 = vunpack.c.l.b16 %v2955
        %v3132 = vunpack.c.h.b16 %v2955
        %v3133 = vunpack.c.l.b16 %v2956
        %v3134 = vunpack.c.h.b16 %v2956
        %v3135 = vunpack.c.l.b16 %v2957
        %v3136 = vunpack.c.h.b16 %v2957
        %v3137 = vunpack.c.l.b16 %v2958
        %v3138 = vunpack.c.h.b16 %v2958
        %v3139 = vunpack.c.l.b16 %v2959
        %v3140 = vunpack.c.h.b16 %v2959
        %v3141 = vunpack.c.l.b16 %v2960
        %v3142 = vunpack.c.h.b16 %v2960
        %v3143 = vunpack.c.l.b16 %v2961
        %v3144 = vunpack.c.h.b16 %v2961
        %v3145 = vunpack.c.l.b16 %v2962
        %v3146 = vunpack.c.h.b16 %v2962
        %v3147 = vunpack.c.l.b16 %v2963
        %v3148 = vunpack.c.h.b16 %v2963
        %v3149 = vunpack.c.l.b16 %v2964
        %v3150 = vunpack.c.h.b16 %v2964
        %v3151 = vunpack.c.l.b16 %v2965
        %v3152 = vunpack.c.h.b16 %v2965
        %v3153 = vunpack.c.l.b16 %v2966
        %v3154 = vunpack.c.h.b16 %v2966
        %v3155 = vunpack.c.l.b16 %v2967
        %v3156 = vunpack.c.h.b16 %v2967
        %v3157 = vunpack.c.l.b16 %v2968
        %v3158 = vunpack.c.h.b16 %v2968
        %v3159 = vunpack.c.l.b16 %v2969
        %v3160 = vunpack.c.h.b16 %v2969
        %v3161 = vunpack.c.l.b16 %v2970
        %v3162 = vunpack.c.h.b16 %v2970
        %v3163 = vunpack.c.l.b16 %v2971
        %v3164 = vunpack.c.h.b16 %v2971
        %v3165 = vunpack.c.l.b16 %v2972
        %v3166 = vunpack.c.h.b16 %v2972
        %v3167 = vunpack.c.l.b16 %v2973
        %v3168 = vunpack.c.h.b16 %v2973
        %v3169 = vunpack.c.l.b16 %v2974
        %v3170 = vunpack.c.h.b16 %v2974
        %v3171 = vunpack.c.l.b16 %v2975
        %v3172 = vunpack.c.h.b16 %v2975
        %v3173 = vunpack.c.l.b16 %v2976
        %v3174 = vunpack.c.h.b16 %v2976
        %v3175 = vunpack.c.l.b16 %v2977
        %v3176 = vunpack.c.h.b16 %v2977
        %v3177 = vunpack.c.l.b16 %v2978
        %v3178 = vunpack.c.h.b16 %v2978
        %v3179 = vunpack.c.l.b16 %v2979
        %v3180 = vunpack.c.h.b16 %v2979
        %v3181 = vunpack.c.l.b16 %v2980
        %v3182 = vunpack.c.h.b16 %v2980
        %v3183 = vunpack.c.l.b16 %v2981
        %v3184 = vunpack.c.h.b16 %v2981
        %v3185 = vunpack.c.l.b16 %v2982
        %v3186 = vunpack.c.h.b16 %v2982
        %v3187 = vunpack.c.l.b16 %v2983
        %v3188 = vunpack.c.h.b16 %v2983
        %v3189 = vunpack.c.l.b16 %v2984
        %v3190 = vunpack.c.h.b16 %v2984
        %v3191 = vunpack.c.l.b16 %v2985
        %v3192 = vunpack.c.h.b16 %v2985
        %v3193 = vunpack.c.l.b16 %v2986
        %v3194 = vunpack.c.h.b16 %v2986
        %v3195 = vunpack.c.l.b16 %v2987
        %v3196 = vunpack.c.h.b16 %v2987
        %v3197 = vunpack.c.l.b16 %v2988
        %v3198 = vunpack.c.h.b16 %v2988
        %v3199 = vunpack.c.l.b16 %v2989
        %v3200 = vunpack.c.h.b16 %v2989
        %v3201 = vunpack.c.l.b16 %v2990
        %v3202 = vunpack.c.h.b16 %v2990
        %v3203 = vunpack.c.l.b16 %v2991
        %v3204 = vunpack.c.h.b16 %v2991
        %v3205 = vunpack.c.l.b16 %v2992
        %v3206 = vunpack.c.h.b16 %v2992
        %v3207 = vpack.c.b16 %v3083, %v3079
        %v3208 = vpack.c.b16 %v3084, %v3080
        %v3209 = vpack.c.b16 %v3085, %v3081
        %v3210 = vpack.c.b16 %v3086, %v3082
        %v3211 = vpack.c.b16 %v3091, %v3087
        %v3212 = vpack.c.b16 %v3092, %v3088
        %v3213 = vpack.c.b16 %v3093, %v3089
        %v3214 = vpack.c.b16 %v3094, %v3090
        %v3215 = vpack.c.b16 %v3099, %v3095
        %v3216 = vpack.c.b16 %v3100, %v3096
        %v3217 = vpack.c.b16 %v3101, %v3097
        %v3218 = vpack.c.b16 %v3102, %v3098
        %v3219 = vpack.c.b16 %v3107, %v3103
        %v3220 = vpack.c.b16 %v3108, %v3104
        %v3221 = vpack.c.b16 %v3109, %v3105
        %v3222 = vpack.c.b16 %v3110, %v3106
        %v3223 = vpack.c.b16 %v3115, %v3111
        %v3224 = vpack.c.b16 %v3116, %v3112
        %v3225 = vpack.c.b16 %v3117, %v3113
        %v3226 = vpack.c.b16 %v3118, %v3114
        %v3227 = vpack.c.b16 %v3123, %v3119
        %v3228 = vpack.c.b16 %v3124, %v3120
        %v3229 = vpack.c.b16 %v3125, %v3121
        %v3230 = vpack.c.b16 %v3126, %v3122
        %v3231 = vpack.c.b16 %v3131, %v3127
        %v3232 = vpack.c.b16 %v3132, %v3128
        %v3233 = vpack.c.b16 %v3133, %v3129
        %v3234 = vpack.c.b16 %v3134, %v3130
        %v3235 = vpack.c.b16 %v3139, %v3135
        %v3236 = vpack.c.b16 %v3140, %v3136
        %v3237 = vpack.c.b16 %v3141, %v3137
        %v3238 = vpack.c.b16 %v3142, %v3138
        %v3239 = vpack.c.b16 %v3147, %v3143
        %v3240 = vpack.c.b16 %v3148, %v3144
        %v3241 = vpack.c.b16 %v3149, %v3145
        %v3242 = vpack.c.b16 %v3150, %v3146
        %v3243 = vpack.c.b16 %v3155, %v3151
        %v3244 = vpack.c.b16 %v3156, %v3152
        %v3245 = vpack.c.b16 %v3157, %v3153
        %v3246 = vpack.c.b16 %v3158, %v3154
        %v3247 = vpack.c.b16 %v3163, %v3159
        %v3248 = vpack.c.b16 %v3164, %v3160
        %v3249 = vpack.c.b16 %v3165, %v3161
        %v3250 = vpack.c.b16 %v3166, %v3162
        %v3251 = vpack.c.b16 %v3171, %v3167
        %v3252 = vpack.c.b16 %v3172, %v3168
        %v3253 = vpack.c.b16 %v3173, %v3169
        %v3254 = vpack.c.b16 %v3174, %v3170
        %v3255 = vpack.c.b16 %v3179, %v3175
        %v3256 = vpack.c.b16 %v3180, %v3176
        %v3257 = vpack.c.b16 %v3181, %v3177
        %v3258 = vpack.c.b16 %v3182, %v3178
        %v3259 = vpack.c.b16 %v3187, %v3183
        %v3260 = vpack.c.b16 %v3188, %v3184
        %v3261 = vpack.c.b16 %v3189, %v3185
        %v3262 = vpack.c.b16 %v3190, %v3186
        %v3263 = vpack.c.b16 %v3195, %v3191
        %v3264 = vpack.c.b16 %v3196, %v3192
        %v3265 = vpack.c.b16 %v3197, %v3193
        %v3266 = vpack.c.b16 %v3198, %v3194
        %v3267 = vpack.c.b16 %v3203, %v3199
        %v3268 = vpack.c.b16 %v3204, %v3200
        %v3269 = vpack.c.b16 %v3205, %v3201
        %v3270 = vpack.c.b16 %v3206, %v3202
        %3335 = vmatprep.subr.bf16.mxu0 %v3236
        %3336 = vmatpush1.bf16.msra.mxu0 %v3235
        %3337 = vmatprep.subr.bf16.mxu0 %v3232
        %3338 = vmatpush1.bf16.msra.mxu0 %v3231
        %3339 = vmatprep.subr.bf16.mxu0 %v3228
        %3340 = vmatpush1.bf16.msra.mxu0 %v3227
        %3341 = vmatprep.subr.bf16.mxu0 %v3224
        %3342 = vmatpush1.bf16.msra.mxu0 %v3223
        %3343 = vmatprep.subr.bf16.mxu0 %v3220
        %3344 = vmatpush1.bf16.msra.mxu0 %v3219
        %3345 = vmatprep.subr.bf16.mxu0 %v3216
        %3346 = vmatpush1.bf16.msra.mxu0 %v3215
        %3347 = vmatprep.subr.bf16.mxu0 %v3212
        %3348 = vmatpush1.bf16.msra.mxu0 %v3211
        %3349 = vmatprep.subr.bf16.mxu0 %v3208
        %3350 = vmatpush1.bf16.msra.mxu0 %v3207
        %3351 = vmatprep.subr.bf16.mxu0 %v3268
        %3352 = vmatpush2.bf16.msra.mxu0 %v3267
        %3353 = vmatprep.subr.bf16.mxu0 %v3264
        %3354 = vmatpush2.bf16.msra.mxu0 %v3263
        %3355 = vmatprep.subr.bf16.mxu0 %v3260
        %3356 = vmatpush2.bf16.msra.mxu0 %v3259
        %3357 = vmatprep.subr.bf16.mxu0 %v3256
        %3358 = vmatpush2.bf16.msra.mxu0 %v3255
        %3359 = vmatprep.subr.bf16.mxu0 %v3252
        %3360 = vmatpush2.bf16.msra.mxu0 %v3251
        %3361 = vmatprep.subr.bf16.mxu0 %v3248
        %3362 = vmatpush2.bf16.msra.mxu0 %v3247
        %3363 = vmatprep.subr.bf16.mxu0 %v3244
        %3364 = vmatpush2.bf16.msra.mxu0 %v3243
        %3365 = vmatprep.subr.bf16.mxu0 %v3240
        %3366 = vmatpush2.bf16.msra.mxu0 %v3239
        %3367 = vmatprep.mubr.bf16.mxu0 %v2898
        %3368 = vmatmul.mubr.bf16.gmra.mxu0 %v2897
        %v3369 = vpop.f32.mrf.mxu0
        %v3370 = vadd.f32 %v2998, %v3369
        %v3371 = vpop.f32.mrf.mxu0
        %v3372 = vadd.f32 %v3002, %v3371
        %v3373 = vpop.f32.mrf.mxu0
        %v3374 = vadd.f32 %v2998, %v3373
        %v3375 = vpop.f32.mrf.mxu0
        %v3376 = vadd.f32 %v3002, %v3375
        %3377 = vmatprep.mubr.bf16.mxu0 %v2900
        %3378 = vmatmul.mubr.bf16.gmra.mxu0 %v2899
        %v3379 = vpop.f32.mrf.mxu0
        %v3380 = vadd.f32 %v2998, %v3379
        %v3381 = vpop.f32.mrf.mxu0
        %v3382 = vadd.f32 %v3002, %v3381
        %v3383 = vpop.f32.mrf.mxu0
        %v3384 = vadd.f32 %v2998, %v3383
        %v3385 = vpop.f32.mrf.mxu0
        %v3386 = vadd.f32 %v3002, %v3385
        %3387 = vmatprep.mubr.bf16.mxu0 %v2902
        %3388 = vmatmul.mubr.bf16.gmra.mxu0 %v2901
        %v3389 = vpop.f32.mrf.mxu0
        %v3390 = vadd.f32 %v2998, %v3389
        %v3391 = vpop.f32.mrf.mxu0
        %v3392 = vadd.f32 %v3002, %v3391
        %v3393 = vpop.f32.mrf.mxu0
        %v3394 = vadd.f32 %v2998, %v3393
        %v3395 = vpop.f32.mrf.mxu0
        %v3396 = vadd.f32 %v3002, %v3395
        %3397 = vmatprep.mubr.bf16.mxu0 %v2904
        %3398 = vmatmul.mubr.bf16.gmra.mxu0 %v2903
        %v3399 = vpop.f32.mrf.mxu0
        %v3400 = vadd.f32 %v2998, %v3399
        %v3401 = vpop.f32.mrf.mxu0
        %v3402 = vadd.f32 %v3002, %v3401
        %v3403 = vpop.f32.mrf.mxu0
        %v3404 = vadd.f32 %v2998, %v3403
        %v3405 = vpop.f32.mrf.mxu0
        %v3406 = vadd.f32 %v3002, %v3405
        %3407 = vmatprep.mubr.bf16.mxu0 %v2906
        %3408 = vmatmul.mubr.bf16.gmra.mxu0 %v2905
        %v3409 = vpop.f32.mrf.mxu0
        %v3410 = vadd.f32 %v2998, %v3409
        %v3411 = vpop.f32.mrf.mxu0
        %v3412 = vadd.f32 %v3002, %v3411
        %v3413 = vpop.f32.mrf.mxu0
        %v3414 = vadd.f32 %v2998, %v3413
        %v3415 = vpop.f32.mrf.mxu0
        %v3416 = vadd.f32 %v3002, %v3415
        %3417 = vmatprep.mubr.bf16.mxu0 %v2908
        %3418 = vmatmul.mubr.bf16.gmra.mxu0 %v2907
        %v3419 = vpop.f32.mrf.mxu0
        %v3420 = vadd.f32 %v2998, %v3419
        %v3421 = vpop.f32.mrf.mxu0
        %v3422 = vadd.f32 %v3002, %v3421
        %v3423 = vpop.f32.mrf.mxu0
        %v3424 = vadd.f32 %v2998, %v3423
        %v3425 = vpop.f32.mrf.mxu0
        %v3426 = vadd.f32 %v3002, %v3425
        %3427 = vmatprep.mubr.bf16.mxu0 %v2910
        %3428 = vmatmul.mubr.bf16.gmra.mxu0 %v2909
        %v3429 = vpop.f32.mrf.mxu0
        %v3430 = vadd.f32 %v2998, %v3429
        %v3431 = vpop.f32.mrf.mxu0
        %v3432 = vadd.f32 %v3002, %v3431
        %v3433 = vpop.f32.mrf.mxu0
        %v3434 = vadd.f32 %v2998, %v3433
        %v3435 = vpop.f32.mrf.mxu0
        %v3436 = vadd.f32 %v3002, %v3435
        %3437 = vmatprep.mubr.bf16.mxu0 %v2912
        %3438 = vmatmul.mubr.bf16.gmra.mxu0 %v2911
        %v3439 = vpop.f32.mrf.mxu0
        %v3440 = vadd.f32 %v2998, %v3439
        %v3441 = vpop.f32.mrf.mxu0
        %v3442 = vadd.f32 %v3002, %v3441
        %v3443 = vpop.f32.mrf.mxu0
        %v3444 = vadd.f32 %v2998, %v3443
        %v3445 = vpop.f32.mrf.mxu0
        %v3446 = vadd.f32 %v3002, %v3445
        %3447 = vmatprep.mubr.bf16.mxu0 %v2914
        %3448 = vmatmul.mubr.bf16.gmra.mxu0 %v2913
        %v3449 = vpop.f32.mrf.mxu0
        %v3450 = vadd.f32 %v2998, %v3449
        %v3451 = vpop.f32.mrf.mxu0
        %v3452 = vadd.f32 %v3002, %v3451
        %v3453 = vpop.f32.mrf.mxu0
        %v3454 = vadd.f32 %v2998, %v3453
        %v3455 = vpop.f32.mrf.mxu0
        %v3456 = vadd.f32 %v3002, %v3455
        %3457 = vmatprep.mubr.bf16.mxu0 %v2916
        %3458 = vmatmul.mubr.bf16.gmra.mxu0 %v2915
        %v3459 = vpop.f32.mrf.mxu0
        %v3460 = vadd.f32 %v2998, %v3459
        %v3461 = vpop.f32.mrf.mxu0
        %v3462 = vadd.f32 %v3002, %v3461
        %v3463 = vpop.f32.mrf.mxu0
        %v3464 = vadd.f32 %v2998, %v3463
        %v3465 = vpop.f32.mrf.mxu0
        %v3466 = vadd.f32 %v3002, %v3465
        %3467 = vmatprep.mubr.bf16.mxu0 %v2918
        %3468 = vmatmul.mubr.bf16.gmra.mxu0 %v2917
        %v3469 = vpop.f32.mrf.mxu0
        %v3470 = vadd.f32 %v2998, %v3469
        %v3471 = vpop.f32.mrf.mxu0
        %v3472 = vadd.f32 %v3002, %v3471
        %v3473 = vpop.f32.mrf.mxu0
        %v3474 = vadd.f32 %v2998, %v3473
        %v3475 = vpop.f32.mrf.mxu0
        %v3476 = vadd.f32 %v3002, %v3475
        %3477 = vmatprep.mubr.bf16.mxu0 %v2920
        %3478 = vmatmul.mubr.bf16.gmra.mxu0 %v2919
        %v3479 = vpop.f32.mrf.mxu0
        %v3480 = vadd.f32 %v2998, %v3479
        %v3481 = vpop.f32.mrf.mxu0
        %v3482 = vadd.f32 %v3002, %v3481
        %v3483 = vpop.f32.mrf.mxu0
        %v3484 = vadd.f32 %v2998, %v3483
        %v3485 = vpop.f32.mrf.mxu0
        %v3486 = vadd.f32 %v3002, %v3485
        %3487 = vmatprep.mubr.bf16.mxu0 %v2922
        %3488 = vmatmul.mubr.bf16.gmra.mxu0 %v2921
        %v3489 = vpop.f32.mrf.mxu0
        %v3490 = vadd.f32 %v2998, %v3489
        %v3491 = vpop.f32.mrf.mxu0
        %v3492 = vadd.f32 %v3002, %v3491
        %v3493 = vpop.f32.mrf.mxu0
        %v3494 = vadd.f32 %v2998, %v3493
        %v3495 = vpop.f32.mrf.mxu0
        %v3496 = vadd.f32 %v3002, %v3495
        %3497 = vmatprep.mubr.bf16.mxu0 %v2924
        %3498 = vmatmul.mubr.bf16.gmra.mxu0 %v2923
        %v3499 = vpop.f32.mrf.mxu0
        %v3500 = vadd.f32 %v2998, %v3499
        %v3501 = vpop.f32.mrf.mxu0
        %v3502 = vadd.f32 %v3002, %v3501
        %v3503 = vpop.f32.mrf.mxu0
        %v3504 = vadd.f32 %v2998, %v3503
        %v3505 = vpop.f32.mrf.mxu0
        %v3506 = vadd.f32 %v3002, %v3505
        %3507 = vmatprep.mubr.bf16.mxu0 %v2926
        %3508 = vmatmul.mubr.bf16.gmra.mxu0 %v2925
        %v3509 = vpop.f32.mrf.mxu0
        %v3510 = vadd.f32 %v2998, %v3509
        %v3511 = vpop.f32.mrf.mxu0
        %v3512 = vadd.f32 %v3002, %v3511
        %v3513 = vpop.f32.mrf.mxu0
        %v3514 = vadd.f32 %v2998, %v3513
        %v3515 = vpop.f32.mrf.mxu0
        %v3516 = vadd.f32 %v3002, %v3515
        %3517 = vmatprep.mubr.bf16.mxu0 %v2928
        %3518 = vmatmul.mubr.bf16.gmra.mxu0 %v2927
        %v3519 = vpop.f32.mrf.mxu0
        %v3520 = vadd.f32 %v2998, %v3519
        %v3521 = vpop.f32.mrf.mxu0
        %v3522 = vadd.f32 %v3002, %v3521
        %v3523 = vpop.f32.mrf.mxu0
        %v3524 = vadd.f32 %v2998, %v3523
        %v3525 = vpop.f32.mrf.mxu0
        %v3526 = vadd.f32 %v3002, %v3525
        %3527 = vdwg.mxu0
        %3528 = vmatprep.subr.bf16.mxu0 %v3238
        %3529 = vmatpush1.bf16.msra.mxu0 %v3237
        %3530 = vmatprep.subr.bf16.mxu0 %v3234
        %3531 = vmatpush1.bf16.msra.mxu0 %v3233
        %3532 = vmatprep.subr.bf16.mxu0 %v3230
        %3533 = vmatpush1.bf16.msra.mxu0 %v3229
        %3534 = vmatprep.subr.bf16.mxu0 %v3226
        %3535 = vmatpush1.bf16.msra.mxu0 %v3225
        %3536 = vmatprep.subr.bf16.mxu0 %v3222
        %3537 = vmatpush1.bf16.msra.mxu0 %v3221
        %3538 = vmatprep.subr.bf16.mxu0 %v3218
        %3539 = vmatpush1.bf16.msra.mxu0 %v3217
        %3540 = vmatprep.subr.bf16.mxu0 %v3214
        %3541 = vmatpush1.bf16.msra.mxu0 %v3213
        %3542 = vmatprep.subr.bf16.mxu0 %v3210
        %3543 = vmatpush1.bf16.msra.mxu0 %v3209
        %3544 = vmatprep.subr.bf16.mxu0 %v3270
        %3545 = vmatpush2.bf16.msra.mxu0 %v3269
        %3546 = vmatprep.subr.bf16.mxu0 %v3266
        %3547 = vmatpush2.bf16.msra.mxu0 %v3265
        %3548 = vmatprep.subr.bf16.mxu0 %v3262
        %3549 = vmatpush2.bf16.msra.mxu0 %v3261
        %3550 = vmatprep.subr.bf16.mxu0 %v3258
        %3551 = vmatpush2.bf16.msra.mxu0 %v3257
        %3552 = vmatprep.subr.bf16.mxu0 %v3254
        %3553 = vmatpush2.bf16.msra.mxu0 %v3253
        %3554 = vmatprep.subr.bf16.mxu0 %v3250
        %3555 = vmatpush2.bf16.msra.mxu0 %v3249
        %3556 = vmatprep.subr.bf16.mxu0 %v3246
        %3557 = vmatpush2.bf16.msra.mxu0 %v3245
        %3558 = vmatprep.subr.bf16.mxu0 %v3242
        %3559 = vmatpush2.bf16.msra.mxu0 %v3241
        %3560 = vmatprep.mubr.bf16.mxu0 %v2898
        %3561 = vmatmul.mubr.bf16.gmra.mxu0 %v2897
        %v3562 = vpop.f32.mrf.mxu0
        %v3563 = vadd.f32 %v3006, %v3562
        %v3564 = vpop.f32.mrf.mxu0
        %v3565 = vadd.f32 %v3010, %v3564
        %v3566 = vpop.f32.mrf.mxu0
        %v3567 = vadd.f32 %v3006, %v3566
        %v3568 = vpop.f32.mrf.mxu0
        %v3569 = vadd.f32 %v3010, %v3568
        %3570 = vmatprep.mubr.bf16.mxu0 %v2900
        %3571 = vmatmul.mubr.bf16.gmra.mxu0 %v2899
        %v3572 = vpop.f32.mrf.mxu0
        %v3573 = vadd.f32 %v3006, %v3572
        %v3574 = vpop.f32.mrf.mxu0
        %v3575 = vadd.f32 %v3010, %v3574
        %v3576 = vpop.f32.mrf.mxu0
        %v3577 = vadd.f32 %v3006, %v3576
        %v3578 = vpop.f32.mrf.mxu0
        %v3579 = vadd.f32 %v3010, %v3578
        %3580 = vmatprep.mubr.bf16.mxu0 %v2902
        %3581 = vmatmul.mubr.bf16.gmra.mxu0 %v2901
        %v3582 = vpop.f32.mrf.mxu0
        %v3583 = vadd.f32 %v3006, %v3582
        %v3584 = vpop.f32.mrf.mxu0
        %v3585 = vadd.f32 %v3010, %v3584
        %v3586 = vpop.f32.mrf.mxu0
        %v3587 = vadd.f32 %v3006, %v3586
        %v3588 = vpop.f32.mrf.mxu0
        %v3589 = vadd.f32 %v3010, %v3588
        %3590 = vmatprep.mubr.bf16.mxu0 %v2904
        %3591 = vmatmul.mubr.bf16.gmra.mxu0 %v2903
        %v3592 = vpop.f32.mrf.mxu0
        %v3593 = vadd.f32 %v3006, %v3592
        %v3594 = vpop.f32.mrf.mxu0
        %v3595 = vadd.f32 %v3010, %v3594
        %v3596 = vpop.f32.mrf.mxu0
        %v3597 = vadd.f32 %v3006, %v3596
        %v3598 = vpop.f32.mrf.mxu0
        %v3599 = vadd.f32 %v3010, %v3598
        %3600 = vmatprep.mubr.bf16.mxu0 %v2906
        %3601 = vmatmul.mubr.bf16.gmra.mxu0 %v2905
        %v3602 = vpop.f32.mrf.mxu0
        %v3603 = vadd.f32 %v3006, %v3602
        %v3604 = vpop.f32.mrf.mxu0
        %v3605 = vadd.f32 %v3010, %v3604
        %v3606 = vpop.f32.mrf.mxu0
        %v3607 = vadd.f32 %v3006, %v3606
        %v3608 = vpop.f32.mrf.mxu0
        %v3609 = vadd.f32 %v3010, %v3608
        %3610 = vmatprep.mubr.bf16.mxu0 %v2908
        %3611 = vmatmul.mubr.bf16.gmra.mxu0 %v2907
        %v3612 = vpop.f32.mrf.mxu0
        %v3613 = vadd.f32 %v3006, %v3612
        %v3614 = vpop.f32.mrf.mxu0
        %v3615 = vadd.f32 %v3010, %v3614
        %v3616 = vpop.f32.mrf.mxu0
        %v3617 = vadd.f32 %v3006, %v3616
        %v3618 = vpop.f32.mrf.mxu0
        %v3619 = vadd.f32 %v3010, %v3618
        %3620 = vmatprep.mubr.bf16.mxu0 %v2910
        %3621 = vmatmul.mubr.bf16.gmra.mxu0 %v2909
        %v3622 = vpop.f32.mrf.mxu0
        %v3623 = vadd.f32 %v3006, %v3622
        %v3624 = vpop.f32.mrf.mxu0
        %v3625 = vadd.f32 %v3010, %v3624
        %v3626 = vpop.f32.mrf.mxu0
        %v3627 = vadd.f32 %v3006, %v3626
        %v3628 = vpop.f32.mrf.mxu0
        %v3629 = vadd.f32 %v3010, %v3628
        %3630 = vmatprep.mubr.bf16.mxu0 %v2912
        %3631 = vmatmul.mubr.bf16.gmra.mxu0 %v2911
        %v3632 = vpop.f32.mrf.mxu0
        %v3633 = vadd.f32 %v3006, %v3632
        %v3634 = vpop.f32.mrf.mxu0
        %v3635 = vadd.f32 %v3010, %v3634
        %v3636 = vpop.f32.mrf.mxu0
        %v3637 = vadd.f32 %v3006, %v3636
        %v3638 = vpop.f32.mrf.mxu0
        %v3639 = vadd.f32 %v3010, %v3638
        %3640 = vmatprep.mubr.bf16.mxu0 %v2914
        %3641 = vmatmul.mubr.bf16.gmra.mxu0 %v2913
        %v3642 = vpop.f32.mrf.mxu0
        %v3643 = vadd.f32 %v3006, %v3642
        %v3644 = vpop.f32.mrf.mxu0
        %v3645 = vadd.f32 %v3010, %v3644
        %v3646 = vpop.f32.mrf.mxu0
        %v3647 = vadd.f32 %v3006, %v3646
        %v3648 = vpop.f32.mrf.mxu0
        %v3649 = vadd.f32 %v3010, %v3648
        %3650 = vmatprep.mubr.bf16.mxu0 %v2916
        %3651 = vmatmul.mubr.bf16.gmra.mxu0 %v2915
        %v3652 = vpop.f32.mrf.mxu0
        %v3653 = vadd.f32 %v3006, %v3652
        %v3654 = vpop.f32.mrf.mxu0
        %v3655 = vadd.f32 %v3010, %v3654
        %v3656 = vpop.f32.mrf.mxu0
        %v3657 = vadd.f32 %v3006, %v3656
        %v3658 = vpop.f32.mrf.mxu0
        %v3659 = vadd.f32 %v3010, %v3658
        %3660 = vmatprep.mubr.bf16.mxu0 %v2918
        %3661 = vmatmul.mubr.bf16.gmra.mxu0 %v2917
        %v3662 = vpop.f32.mrf.mxu0
        %v3663 = vadd.f32 %v3006, %v3662
        %v3664 = vpop.f32.mrf.mxu0
        %v3665 = vadd.f32 %v3010, %v3664
        %v3666 = vpop.f32.mrf.mxu0
        %v3667 = vadd.f32 %v3006, %v3666
        %v3668 = vpop.f32.mrf.mxu0
        %v3669 = vadd.f32 %v3010, %v3668
        %3670 = vmatprep.mubr.bf16.mxu0 %v2920
        %3671 = vmatmul.mubr.bf16.gmra.mxu0 %v2919
        %v3672 = vpop.f32.mrf.mxu0
        %v3673 = vadd.f32 %v3006, %v3672
        %v3674 = vpop.f32.mrf.mxu0
        %v3675 = vadd.f32 %v3010, %v3674
        %v3676 = vpop.f32.mrf.mxu0
        %v3677 = vadd.f32 %v3006, %v3676
        %v3678 = vpop.f32.mrf.mxu0
        %v3679 = vadd.f32 %v3010, %v3678
        %3680 = vmatprep.mubr.bf16.mxu0 %v2922
        %3681 = vmatmul.mubr.bf16.gmra.mxu0 %v2921
        %v3682 = vpop.f32.mrf.mxu0
        %v3683 = vadd.f32 %v3006, %v3682
        %v3684 = vpop.f32.mrf.mxu0
        %v3685 = vadd.f32 %v3010, %v3684
        %v3686 = vpop.f32.mrf.mxu0
        %v3687 = vadd.f32 %v3006, %v3686
        %v3688 = vpop.f32.mrf.mxu0
        %v3689 = vadd.f32 %v3010, %v3688
        %3690 = vmatprep.mubr.bf16.mxu0 %v2924
        %3691 = vmatmul.mubr.bf16.gmra.mxu0 %v2923
        %v3692 = vpop.f32.mrf.mxu0
        %v3693 = vadd.f32 %v3006, %v3692
        %v3694 = vpop.f32.mrf.mxu0
        %v3695 = vadd.f32 %v3010, %v3694
        %v3696 = vpop.f32.mrf.mxu0
        %v3697 = vadd.f32 %v3006, %v3696
        %v3698 = vpop.f32.mrf.mxu0
        %v3699 = vadd.f32 %v3010, %v3698
        %3700 = vmatprep.mubr.bf16.mxu0 %v2926
        %3701 = vmatmul.mubr.bf16.gmra.mxu0 %v2925
        %v3702 = vpop.f32.mrf.mxu0
        %v3703 = vadd.f32 %v3006, %v3702
        %v3704 = vpop.f32.mrf.mxu0
        %v3705 = vadd.f32 %v3010, %v3704
        %v3706 = vpop.f32.mrf.mxu0
        %v3707 = vadd.f32 %v3006, %v3706
        %v3708 = vpop.f32.mrf.mxu0
        %v3709 = vadd.f32 %v3010, %v3708
        %3710 = vmatprep.mubr.bf16.mxu0 %v2928
        %3711 = vmatmul.mubr.bf16.gmra.mxu0 %v2927
        %v3712 = vpop.f32.mrf.mxu0
        %v3713 = vadd.f32 %v3006, %v3712
        %v3714 = vpop.f32.mrf.mxu0
        %v3715 = vadd.f32 %v3010, %v3714
        %v3716 = vpop.f32.mrf.mxu0
        %v3717 = vadd.f32 %v3006, %v3716
        %v3718 = vpop.f32.mrf.mxu0
        %v3719 = vadd.f32 %v3010, %v3718
        %3720 = vdwg.mxu0
        %v3721 = vmax.f32 %v3370, 0.0
        %v3722 = vmax.f32 %v3372, 0.0
        %v3723 = vmax.f32 %v3563, 0.0
        %v3724 = vmax.f32 %v3565, 0.0
        %v3725 = vmax.f32 %v3374, 0.0
        %v3726 = vmax.f32 %v3376, 0.0
        %v3727 = vmax.f32 %v3567, 0.0
        %v3728 = vmax.f32 %v3569, 0.0
        %v3729 = vmax.f32 %v3380, 0.0
        %v3730 = vmax.f32 %v3382, 0.0
        %v3731 = vmax.f32 %v3573, 0.0
        %v3732 = vmax.f32 %v3575, 0.0
        %v3733 = vmax.f32 %v3384, 0.0
        %v3734 = vmax.f32 %v3386, 0.0
        %v3735 = vmax.f32 %v3577, 0.0
        %v3736 = vmax.f32 %v3579, 0.0
        %v3737 = vmax.f32 %v3390, 0.0
        %v3738 = vmax.f32 %v3392, 0.0
        %v3739 = vmax.f32 %v3583, 0.0
        %v3740 = vmax.f32 %v3585, 0.0
        %v3741 = vmax.f32 %v3394, 0.0
        %v3742 = vmax.f32 %v3396, 0.0
        %v3743 = vmax.f32 %v3587, 0.0
        %v3744 = vmax.f32 %v3589, 0.0
        %v3745 = vmax.f32 %v3400, 0.0
        %v3746 = vmax.f32 %v3402, 0.0
        %v3747 = vmax.f32 %v3593, 0.0
        %v3748 = vmax.f32 %v3595, 0.0
        %v3749 = vmax.f32 %v3404, 0.0
        %v3750 = vmax.f32 %v3406, 0.0
        %v3751 = vmax.f32 %v3597, 0.0
        %v3752 = vmax.f32 %v3599, 0.0
        %v3753 = vmax.f32 %v3410, 0.0
        %v3754 = vmax.f32 %v3412, 0.0
        %v3755 = vmax.f32 %v3603, 0.0
        %v3756 = vmax.f32 %v3605, 0.0
        %v3757 = vmax.f32 %v3414, 0.0
        %v3758 = vmax.f32 %v3416, 0.0
        %v3759 = vmax.f32 %v3607, 0.0
        %v3760 = vmax.f32 %v3609, 0.0
        %v3761 = vmax.f32 %v3420, 0.0
        %v3762 = vmax.f32 %v3422, 0.0
        %v3763 = vmax.f32 %v3613, 0.0
        %v3764 = vmax.f32 %v3615, 0.0
        %v3765 = vmax.f32 %v3424, 0.0
        %v3766 = vmax.f32 %v3426, 0.0
        %v3767 = vmax.f32 %v3617, 0.0
        %v3768 = vmax.f32 %v3619, 0.0
        %v3769 = vmax.f32 %v3430, 0.0
        %v3770 = vmax.f32 %v3432, 0.0
        %v3771 = vmax.f32 %v3623, 0.0
        %v3772 = vmax.f32 %v3625, 0.0
        %v3773 = vmax.f32 %v3434, 0.0
        %v3774 = vmax.f32 %v3436, 0.0
        %v3775 = vmax.f32 %v3627, 0.0
        %v3776 = vmax.f32 %v3629, 0.0
        %v3777 = vmax.f32 %v3440, 0.0
        %v3778 = vmax.f32 %v3442, 0.0
        %v3779 = vmax.f32 %v3633, 0.0
        %v3780 = vmax.f32 %v3635, 0.0
        %v3781 = vmax.f32 %v3444, 0.0
        %v3782 = vmax.f32 %v3446, 0.0
        %v3783 = vmax.f32 %v3637, 0.0
        %v3784 = vmax.f32 %v3639, 0.0
        %v3785 = vmax.f32 %v3450, 0.0
        %v3786 = vmax.f32 %v3452, 0.0
        %v3787 = vmax.f32 %v3643, 0.0
        %v3788 = vmax.f32 %v3645, 0.0
        %v3789 = vmax.f32 %v3454, 0.0
        %v3790 = vmax.f32 %v3456, 0.0
        %v3791 = vmax.f32 %v3647, 0.0
        %v3792 = vmax.f32 %v3649, 0.0
        %v3793 = vmax.f32 %v3460, 0.0
        %v3794 = vmax.f32 %v3462, 0.0
        %v3795 = vmax.f32 %v3653, 0.0
        %v3796 = vmax.f32 %v3655, 0.0
        %v3797 = vmax.f32 %v3464, 0.0
        %v3798 = vmax.f32 %v3466, 0.0
        %v3799 = vmax.f32 %v3657, 0.0
        %v3800 = vmax.f32 %v3659, 0.0
        %v3801 = vmax.f32 %v3470, 0.0
        %v3802 = vmax.f32 %v3472, 0.0
        %v3803 = vmax.f32 %v3663, 0.0
        %v3804 = vmax.f32 %v3665, 0.0
        %v3805 = vmax.f32 %v3474, 0.0
        %v3806 = vmax.f32 %v3476, 0.0
        %v3807 = vmax.f32 %v3667, 0.0
        %v3808 = vmax.f32 %v3669, 0.0
        %v3809 = vmax.f32 %v3480, 0.0
        %v3810 = vmax.f32 %v3482, 0.0
        %v3811 = vmax.f32 %v3673, 0.0
        %v3812 = vmax.f32 %v3675, 0.0
        %v3813 = vmax.f32 %v3484, 0.0
        %v3814 = vmax.f32 %v3486, 0.0
        %v3815 = vmax.f32 %v3677, 0.0
        %v3816 = vmax.f32 %v3679, 0.0
        %v3817 = vmax.f32 %v3490, 0.0
        %v3818 = vmax.f32 %v3492, 0.0
        %v3819 = vmax.f32 %v3683, 0.0
        %v3820 = vmax.f32 %v3685, 0.0
        %v3821 = vmax.f32 %v3494, 0.0
        %v3822 = vmax.f32 %v3496, 0.0
        %v3823 = vmax.f32 %v3687, 0.0
        %v3824 = vmax.f32 %v3689, 0.0
        %v3825 = vmax.f32 %v3500, 0.0
        %v3826 = vmax.f32 %v3502, 0.0
        %v3827 = vmax.f32 %v3693, 0.0
        %v3828 = vmax.f32 %v3695, 0.0
        %v3829 = vmax.f32 %v3504, 0.0
        %v3830 = vmax.f32 %v3506, 0.0
        %v3831 = vmax.f32 %v3697, 0.0
        %v3832 = vmax.f32 %v3699, 0.0
        %v3833 = vmax.f32 %v3510, 0.0
        %v3834 = vmax.f32 %v3512, 0.0
        %v3835 = vmax.f32 %v3703, 0.0
        %v3836 = vmax.f32 %v3705, 0.0
        %v3837 = vmax.f32 %v3514, 0.0
        %v3838 = vmax.f32 %v3516, 0.0
        %v3839 = vmax.f32 %v3707, 0.0
        %v3840 = vmax.f32 %v3709, 0.0
        %v3841 = vmax.f32 %v3520, 0.0
        %v3842 = vmax.f32 %v3522, 0.0
        %v3843 = vmax.f32 %v3713, 0.0
        %v3844 = vmax.f32 %v3715, 0.0
        %v3845 = vmax.f32 %v3524, 0.0
        %v3846 = vmax.f32 %v3526, 0.0
        %v3847 = vmax.f32 %v3717, 0.0
        %v3848 = vmax.f32 %v3719, 0.0
        %v3849 = vpack.c.bf16 %v3725, %v3721
        %v3850 = vpack.c.bf16 %v3726, %v3722
        %v3851 = vpack.c.bf16 %v3727, %v3723
        %v3852 = vpack.c.bf16 %v3728, %v3724
        %v3853 = vpack.c.bf16 %v3733, %v3729
        %v3854 = vpack.c.bf16 %v3734, %v3730
        %v3855 = vpack.c.bf16 %v3735, %v3731
        %v3856 = vpack.c.bf16 %v3736, %v3732
        %v3857 = vpack.c.bf16 %v3741, %v3737
        %v3858 = vpack.c.bf16 %v3742, %v3738
        %v3859 = vpack.c.bf16 %v3743, %v3739
        %v3860 = vpack.c.bf16 %v3744, %v3740
        %v3861 = vpack.c.bf16 %v3749, %v3745
        %v3862 = vpack.c.bf16 %v3750, %v3746
        %v3863 = vpack.c.bf16 %v3751, %v3747
        %v3864 = vpack.c.bf16 %v3752, %v3748
        %v3865 = vpack.c.bf16 %v3757, %v3753
        %v3866 = vpack.c.bf16 %v3758, %v3754
        %v3867 = vpack.c.bf16 %v3759, %v3755
        %v3868 = vpack.c.bf16 %v3760, %v3756
        %v3869 = vpack.c.bf16 %v3765, %v3761
        %v3870 = vpack.c.bf16 %v3766, %v3762
        %v3871 = vpack.c.bf16 %v3767, %v3763
        %v3872 = vpack.c.bf16 %v3768, %v3764
        %v3873 = vpack.c.bf16 %v3773, %v3769
        %v3874 = vpack.c.bf16 %v3774, %v3770
        %v3875 = vpack.c.bf16 %v3775, %v3771
        %v3876 = vpack.c.bf16 %v3776, %v3772
        %v3877 = vpack.c.bf16 %v3781, %v3777
        %v3878 = vpack.c.bf16 %v3782, %v3778
        %v3879 = vpack.c.bf16 %v3783, %v3779
        %v3880 = vpack.c.bf16 %v3784, %v3780
        %v3881 = vpack.c.bf16 %v3789, %v3785
        %v3882 = vpack.c.bf16 %v3790, %v3786
        %v3883 = vpack.c.bf16 %v3791, %v3787
        %v3884 = vpack.c.bf16 %v3792, %v3788
        %v3885 = vpack.c.bf16 %v3797, %v3793
        %v3886 = vpack.c.bf16 %v3798, %v3794
        %v3887 = vpack.c.bf16 %v3799, %v3795
        %v3888 = vpack.c.bf16 %v3800, %v3796
        %v3889 = vpack.c.bf16 %v3805, %v3801
        %v3890 = vpack.c.bf16 %v3806, %v3802
        %v3891 = vpack.c.bf16 %v3807, %v3803
        %v3892 = vpack.c.bf16 %v3808, %v3804
        %v3893 = vpack.c.bf16 %v3813, %v3809
        %v3894 = vpack.c.bf16 %v3814, %v3810
        %v3895 = vpack.c.bf16 %v3815, %v3811
        %v3896 = vpack.c.bf16 %v3816, %v3812
        %v3897 = vpack.c.bf16 %v3821, %v3817
        %v3898 = vpack.c.bf16 %v3822, %v3818
        %v3899 = vpack.c.bf16 %v3823, %v3819
        %v3900 = vpack.c.bf16 %v3824, %v3820
        %v3901 = vpack.c.bf16 %v3829, %v3825
        %v3902 = vpack.c.bf16 %v3830, %v3826
        %v3903 = vpack.c.bf16 %v3831, %v3827
        %v3904 = vpack.c.bf16 %v3832, %v3828
        %v3905 = vpack.c.bf16 %v3837, %v3833
        %v3906 = vpack.c.bf16 %v3838, %v3834
        %v3907 = vpack.c.bf16 %v3839, %v3835
        %v3908 = vpack.c.bf16 %v3840, %v3836
        %v3909 = vpack.c.bf16 %v3845, %v3841
        %v3910 = vpack.c.bf16 %v3846, %v3842
        %v3911 = vpack.c.bf16 %v3847, %v3843
        %v3912 = vpack.c.bf16 %v3848, %v3844
        %v3913 = vld [vmem:[#allocation8] sm:$0xf]
        %v3914 = vld [vmem:[#allocation8 + $0x4] sm:$0xf]
        %v3915 = vld [vmem:[#allocation8 + $0x8] sm:$0xf]
        %v3916 = vld [vmem:[#allocation8 + $0xc] sm:$0xf]
        %v3917 = vld [vmem:[#allocation8 + $0x10] sm:$0xf]
        %v3918 = vld [vmem:[#allocation8 + $0x14] sm:$0xf]
        %v3919 = vld [vmem:[#allocation8 + $0x18] sm:$0xf]
        %v3920 = vld [vmem:[#allocation8 + $0x1c] sm:$0xf]
        %v3921 = vld [vmem:[#allocation8 + $0x20] sm:$0xf]
        %v3922 = vld [vmem:[#allocation8 + $0x24] sm:$0xf]
        %v3923 = vld [vmem:[#allocation8 + $0x28] sm:$0xf]
        %v3924 = vld [vmem:[#allocation8 + $0x2c] sm:$0xf]
        %v3925 = vld [vmem:[#allocation8 + $0x30] sm:$0xf]
        %v3926 = vld [vmem:[#allocation8 + $0x34] sm:$0xf]
        %v3927 = vld [vmem:[#allocation8 + $0x38] sm:$0xf]
        %v3928 = vld [vmem:[#allocation8 + $0x3c] sm:$0xf]
        %v3929 = vld [vmem:[#allocation8 + $0x40] sm:$0xf]
        %v3930 = vld [vmem:[#allocation8 + $0x44] sm:$0xf]
        %v3931 = vld [vmem:[#allocation8 + $0x48] sm:$0xf]
        %v3932 = vld [vmem:[#allocation8 + $0x4c] sm:$0xf]
        %v3933 = vld [vmem:[#allocation8 + $0x50] sm:$0xf]
        %v3934 = vld [vmem:[#allocation8 + $0x54] sm:$0xf]
        %v3935 = vld [vmem:[#allocation8 + $0x58] sm:$0xf]
        %v3936 = vld [vmem:[#allocation8 + $0x5c] sm:$0xf]
        %v3937 = vld [vmem:[#allocation8 + $0x60] sm:$0xf]
        %v3938 = vld [vmem:[#allocation8 + $0x64] sm:$0xf]
        %v3939 = vld [vmem:[#allocation8 + $0x68] sm:$0xf]
        %v3940 = vld [vmem:[#allocation8 + $0x6c] sm:$0xf]
        %v3941 = vld [vmem:[#allocation8 + $0x70] sm:$0xf]
        %v3942 = vld [vmem:[#allocation8 + $0x74] sm:$0xf]
        %v3943 = vld [vmem:[#allocation8 + $0x78] sm:$0xf]
        %v3944 = vld [vmem:[#allocation8 + $0x7c] sm:$0xf]
        %v3945 = vld [vmem:[#allocation8 + $0x80] sm:$0xf]
        %v3946 = vld [vmem:[#allocation8 + $0x84] sm:$0xf]
        %v3947 = vld [vmem:[#allocation8 + $0x88] sm:$0xf]
        %v3948 = vld [vmem:[#allocation8 + $0x8c] sm:$0xf]
        %v3949 = vld [vmem:[#allocation8 + $0x90] sm:$0xf]
        %v3950 = vld [vmem:[#allocation8 + $0x94] sm:$0xf]
        %v3951 = vld [vmem:[#allocation8 + $0x98] sm:$0xf]
        %v3952 = vld [vmem:[#allocation8 + $0x9c] sm:$0xf]
        %v3953 = vld [vmem:[#allocation8 + $0xa0] sm:$0xf]
        %v3954 = vld [vmem:[#allocation8 + $0xa4] sm:$0xf]
        %v3955 = vld [vmem:[#allocation8 + $0xa8] sm:$0xf]
        %v3956 = vld [vmem:[#allocation8 + $0xac] sm:$0xf]
        %v3957 = vld [vmem:[#allocation8 + $0xb0] sm:$0xf]
        %v3958 = vld [vmem:[#allocation8 + $0xb4] sm:$0xf]
        %v3959 = vld [vmem:[#allocation8 + $0xb8] sm:$0xf]
        %v3960 = vld [vmem:[#allocation8 + $0xbc] sm:$0xf]
        %v3961 = vld [vmem:[#allocation8 + $0xc0] sm:$0xf]
        %v3962 = vld [vmem:[#allocation8 + $0xc4] sm:$0xf]
        %v3963 = vld [vmem:[#allocation8 + $0xc8] sm:$0xf]
        %v3964 = vld [vmem:[#allocation8 + $0xcc] sm:$0xf]
        %v3965 = vld [vmem:[#allocation8 + $0xd0] sm:$0xf]
        %v3966 = vld [vmem:[#allocation8 + $0xd4] sm:$0xf]
        %v3967 = vld [vmem:[#allocation8 + $0xd8] sm:$0xf]
        %v3968 = vld [vmem:[#allocation8 + $0xdc] sm:$0xf]
        %v3969 = vld [vmem:[#allocation8 + $0xe0] sm:$0xf]
        %v3970 = vld [vmem:[#allocation8 + $0xe4] sm:$0xf]
        %v3971 = vld [vmem:[#allocation8 + $0xe8] sm:$0xf]
        %v3972 = vld [vmem:[#allocation8 + $0xec] sm:$0xf]
        %v3973 = vld [vmem:[#allocation8 + $0xf0] sm:$0xf]
        %v3974 = vld [vmem:[#allocation8 + $0xf4] sm:$0xf]
        %v3975 = vld [vmem:[#allocation8 + $0xf8] sm:$0xf]
        %v3976 = vld [vmem:[#allocation8 + $0xfc] sm:$0xf]
        %v3977 = vld [vmem:[%s12] sm:$0x1]
        %v3979 = vlaneseq
        %v3980 = vshrl.u32 %v3979, 7
        %v3981 = vsub.s32 0, %v3980
        %v3982 = vrot.slane %v3977, %v3981
        %v4048 = vunpack.c.l.b16 %v3913
        %v4049 = vunpack.c.l.b16 %v3914
        %v4050 = vunpack.c.l.b16 %v3915
        %v4051 = vunpack.c.l.b16 %v3916
        %v4052 = vunpack.c.l.b16 %v3917
        %v4053 = vunpack.c.l.b16 %v3918
        %v4054 = vunpack.c.l.b16 %v3919
        %v4055 = vunpack.c.l.b16 %v3920
        %v4056 = vunpack.c.l.b16 %v3921
        %v4057 = vunpack.c.l.b16 %v3922
        %v4058 = vunpack.c.l.b16 %v3923
        %v4059 = vunpack.c.l.b16 %v3924
        %v4060 = vunpack.c.l.b16 %v3925
        %v4061 = vunpack.c.l.b16 %v3926
        %v4062 = vunpack.c.l.b16 %v3927
        %v4063 = vunpack.c.l.b16 %v3928
        %v4064 = vunpack.c.l.b16 %v3929
        %v4065 = vunpack.c.l.b16 %v3930
        %v4066 = vunpack.c.l.b16 %v3931
        %v4067 = vunpack.c.l.b16 %v3932
        %v4068 = vunpack.c.l.b16 %v3933
        %v4069 = vunpack.c.l.b16 %v3934
        %v4070 = vunpack.c.l.b16 %v3935
        %v4071 = vunpack.c.l.b16 %v3936
        %v4072 = vunpack.c.l.b16 %v3937
        %v4073 = vunpack.c.l.b16 %v3938
        %v4074 = vunpack.c.l.b16 %v3939
        %v4075 = vunpack.c.l.b16 %v3940
        %v4076 = vunpack.c.l.b16 %v3941
        %v4077 = vunpack.c.l.b16 %v3942
        %v4078 = vunpack.c.l.b16 %v3943
        %v4079 = vunpack.c.l.b16 %v3944
        %v4080 = vunpack.c.l.b16 %v3945
        %v4081 = vunpack.c.l.b16 %v3946
        %v4082 = vunpack.c.l.b16 %v3947
        %v4083 = vunpack.c.l.b16 %v3948
        %v4084 = vunpack.c.l.b16 %v3949
        %v4085 = vunpack.c.l.b16 %v3950
        %v4086 = vunpack.c.l.b16 %v3951
        %v4087 = vunpack.c.l.b16 %v3952
        %v4088 = vunpack.c.l.b16 %v3953
        %v4089 = vunpack.c.l.b16 %v3954
        %v4090 = vunpack.c.l.b16 %v3955
        %v4091 = vunpack.c.l.b16 %v3956
        %v4092 = vunpack.c.l.b16 %v3957
        %v4093 = vunpack.c.l.b16 %v3958
        %v4094 = vunpack.c.l.b16 %v3959
        %v4095 = vunpack.c.l.b16 %v3960
        %v4096 = vunpack.c.l.b16 %v3961
        %v4097 = vunpack.c.l.b16 %v3962
        %v4098 = vunpack.c.l.b16 %v3963
        %v4099 = vunpack.c.l.b16 %v3964
        %v4100 = vunpack.c.l.b16 %v3965
        %v4101 = vunpack.c.l.b16 %v3966
        %v4102 = vunpack.c.l.b16 %v3967
        %v4103 = vunpack.c.l.b16 %v3968
        %v4104 = vunpack.c.l.b16 %v3969
        %v4105 = vunpack.c.l.b16 %v3970
        %v4106 = vunpack.c.l.b16 %v3971
        %v4107 = vunpack.c.l.b16 %v3972
        %v4108 = vunpack.c.l.b16 %v3973
        %v4109 = vunpack.c.l.b16 %v3974
        %v4110 = vunpack.c.l.b16 %v3975
        %v4111 = vunpack.c.l.b16 %v3976
        %v4112 = vpack.c.b16 %v4049, %v4048
        %v4113 = vpack.c.b16 %v4051, %v4050
        %v4114 = vpack.c.b16 %v4053, %v4052
        %v4115 = vpack.c.b16 %v4055, %v4054
        %v4116 = vpack.c.b16 %v4057, %v4056
        %v4117 = vpack.c.b16 %v4059, %v4058
        %v4118 = vpack.c.b16 %v4061, %v4060
        %v4119 = vpack.c.b16 %v4063, %v4062
        %v4120 = vpack.c.b16 %v4065, %v4064
        %v4121 = vpack.c.b16 %v4067, %v4066
        %v4122 = vpack.c.b16 %v4069, %v4068
        %v4123 = vpack.c.b16 %v4071, %v4070
        %v4124 = vpack.c.b16 %v4073, %v4072
        %v4125 = vpack.c.b16 %v4075, %v4074
        %v4126 = vpack.c.b16 %v4077, %v4076
        %v4127 = vpack.c.b16 %v4079, %v4078
        %v4128 = vpack.c.b16 %v4081, %v4080
        %v4129 = vpack.c.b16 %v4083, %v4082
        %v4130 = vpack.c.b16 %v4085, %v4084
        %v4131 = vpack.c.b16 %v4087, %v4086
        %v4132 = vpack.c.b16 %v4089, %v4088
        %v4133 = vpack.c.b16 %v4091, %v4090
        %v4134 = vpack.c.b16 %v4093, %v4092
        %v4135 = vpack.c.b16 %v4095, %v4094
        %v4136 = vpack.c.b16 %v4097, %v4096
        %v4137 = vpack.c.b16 %v4099, %v4098
        %v4138 = vpack.c.b16 %v4101, %v4100
        %v4139 = vpack.c.b16 %v4103, %v4102
        %v4140 = vpack.c.b16 %v4105, %v4104
        %v4141 = vpack.c.b16 %v4107, %v4106
        %v4142 = vpack.c.b16 %v4109, %v4108
        %v4143 = vpack.c.b16 %v4111, %v4110
        %4176 = vmatprep.subr.bf16.mxu0 0
        %4177 = vmatpush1.bf16.msra.mxu0 %v4119
        %4178 = vmatprep.subr.bf16.mxu0 0
        %4179 = vmatpush1.bf16.msra.mxu0 %v4118
        %4180 = vmatprep.subr.bf16.mxu0 0
        %4181 = vmatpush1.bf16.msra.mxu0 %v4117
        %4182 = vmatprep.subr.bf16.mxu0 0
        %4183 = vmatpush1.bf16.msra.mxu0 %v4116
        %4184 = vmatprep.subr.bf16.mxu0 0
        %4185 = vmatpush1.bf16.msra.mxu0 %v4115
        %4186 = vmatprep.subr.bf16.mxu0 0
        %4187 = vmatpush1.bf16.msra.mxu0 %v4114
        %4188 = vmatprep.subr.bf16.mxu0 0
        %4189 = vmatpush1.bf16.msra.mxu0 %v4113
        %4190 = vmatprep.subr.bf16.mxu0 0
        %4191 = vmatpush1.bf16.msra.mxu0 %v4112
        %4192 = vmatprep.subr.bf16.mxu0 0
        %4193 = vmatpush2.bf16.msra.mxu0 %v4127
        %4194 = vmatprep.subr.bf16.mxu0 0
        %4195 = vmatpush2.bf16.msra.mxu0 %v4126
        %4196 = vmatprep.subr.bf16.mxu0 0
        %4197 = vmatpush2.bf16.msra.mxu0 %v4125
        %4198 = vmatprep.subr.bf16.mxu0 0
        %4199 = vmatpush2.bf16.msra.mxu0 %v4124
        %4200 = vmatprep.subr.bf16.mxu0 0
        %4201 = vmatpush2.bf16.msra.mxu0 %v4123
        %4202 = vmatprep.subr.bf16.mxu0 0
        %4203 = vmatpush2.bf16.msra.mxu0 %v4122
        %4204 = vmatprep.subr.bf16.mxu0 0
        %4205 = vmatpush2.bf16.msra.mxu0 %v4121
        %4206 = vmatprep.subr.bf16.mxu0 0
        %4207 = vmatpush2.bf16.msra.mxu0 %v4120
        %4208 = vmatprep.mubr.bf16.mxu0 %v3850
        %4209 = vmatmul.mubr.bf16.gmra.mxu0 %v3849
        %v4210 = vpop.f32.mrf.mxu0
        %v4211 = vadd.f32 %v3982, %v4210
        %v4212 = vpop.f32.mrf.mxu0
        %v4213 = vpop.f32.mrf.mxu0
        %v4214 = vadd.f32 %v3982, %v4213
        %v4215 = vpop.f32.mrf.mxu0
        %4216 = vmatprep.mubr.bf16.mxu0 %v3854
        %4217 = vmatmul.mubr.bf16.gmra.mxu0 %v3853
        %v4218 = vpop.f32.mrf.mxu0
        %v4219 = vadd.f32 %v3982, %v4218
        %v4220 = vpop.f32.mrf.mxu0
        %v4221 = vpop.f32.mrf.mxu0
        %v4222 = vadd.f32 %v3982, %v4221
        %v4223 = vpop.f32.mrf.mxu0
        %4224 = vmatprep.mubr.bf16.mxu0 %v3858
        %4225 = vmatmul.mubr.bf16.gmra.mxu0 %v3857
        %v4226 = vpop.f32.mrf.mxu0
        %v4227 = vadd.f32 %v3982, %v4226
        %v4228 = vpop.f32.mrf.mxu0
        %v4229 = vpop.f32.mrf.mxu0
        %v4230 = vadd.f32 %v3982, %v4229
        %v4231 = vpop.f32.mrf.mxu0
        %4232 = vmatprep.mubr.bf16.mxu0 %v3862
        %4233 = vmatmul.mubr.bf16.gmra.mxu0 %v3861
        %v4234 = vpop.f32.mrf.mxu0
        %v4235 = vadd.f32 %v3982, %v4234
        %v4236 = vpop.f32.mrf.mxu0
        %v4237 = vpop.f32.mrf.mxu0
        %v4238 = vadd.f32 %v3982, %v4237
        %v4239 = vpop.f32.mrf.mxu0
        %4240 = vmatprep.mubr.bf16.mxu0 %v3866
        %4241 = vmatmul.mubr.bf16.gmra.mxu0 %v3865
        %v4242 = vpop.f32.mrf.mxu0
        %v4243 = vadd.f32 %v3982, %v4242
        %v4244 = vpop.f32.mrf.mxu0
        %v4245 = vpop.f32.mrf.mxu0
        %v4246 = vadd.f32 %v3982, %v4245
        %v4247 = vpop.f32.mrf.mxu0
        %4248 = vmatprep.mubr.bf16.mxu0 %v3870
        %4249 = vmatmul.mubr.bf16.gmra.mxu0 %v3869
        %v4250 = vpop.f32.mrf.mxu0
        %v4251 = vadd.f32 %v3982, %v4250
        %v4252 = vpop.f32.mrf.mxu0
        %v4253 = vpop.f32.mrf.mxu0
        %v4254 = vadd.f32 %v3982, %v4253
        %v4255 = vpop.f32.mrf.mxu0
        %4256 = vmatprep.mubr.bf16.mxu0 %v3874
        %4257 = vmatmul.mubr.bf16.gmra.mxu0 %v3873
        %v4258 = vpop.f32.mrf.mxu0
        %v4259 = vadd.f32 %v3982, %v4258
        %v4260 = vpop.f32.mrf.mxu0
        %v4261 = vpop.f32.mrf.mxu0
        %v4262 = vadd.f32 %v3982, %v4261
        %v4263 = vpop.f32.mrf.mxu0
        %4264 = vmatprep.mubr.bf16.mxu0 %v3878
        %4265 = vmatmul.mubr.bf16.gmra.mxu0 %v3877
        %v4266 = vpop.f32.mrf.mxu0
        %v4267 = vadd.f32 %v3982, %v4266
        %v4268 = vpop.f32.mrf.mxu0
        %v4269 = vpop.f32.mrf.mxu0
        %v4270 = vadd.f32 %v3982, %v4269
        %v4271 = vpop.f32.mrf.mxu0
        %4272 = vmatprep.mubr.bf16.mxu0 %v3882
        %4273 = vmatmul.mubr.bf16.gmra.mxu0 %v3881
        %v4274 = vpop.f32.mrf.mxu0
        %v4275 = vadd.f32 %v3982, %v4274
        %v4276 = vpop.f32.mrf.mxu0
        %v4277 = vpop.f32.mrf.mxu0
        %v4278 = vadd.f32 %v3982, %v4277
        %v4279 = vpop.f32.mrf.mxu0
        %4280 = vmatprep.mubr.bf16.mxu0 %v3886
        %4281 = vmatmul.mubr.bf16.gmra.mxu0 %v3885
        %v4282 = vpop.f32.mrf.mxu0
        %v4283 = vadd.f32 %v3982, %v4282
        %v4284 = vpop.f32.mrf.mxu0
        %v4285 = vpop.f32.mrf.mxu0
        %v4286 = vadd.f32 %v3982, %v4285
        %v4287 = vpop.f32.mrf.mxu0
        %4288 = vmatprep.mubr.bf16.mxu0 %v3890
        %4289 = vmatmul.mubr.bf16.gmra.mxu0 %v3889
        %v4290 = vpop.f32.mrf.mxu0
        %v4291 = vadd.f32 %v3982, %v4290
        %v4292 = vpop.f32.mrf.mxu0
        %v4293 = vpop.f32.mrf.mxu0
        %v4294 = vadd.f32 %v3982, %v4293
        %v4295 = vpop.f32.mrf.mxu0
        %4296 = vmatprep.mubr.bf16.mxu0 %v3894
        %4297 = vmatmul.mubr.bf16.gmra.mxu0 %v3893
        %v4298 = vpop.f32.mrf.mxu0
        %v4299 = vadd.f32 %v3982, %v4298
        %v4300 = vpop.f32.mrf.mxu0
        %v4301 = vpop.f32.mrf.mxu0
        %v4302 = vadd.f32 %v3982, %v4301
        %v4303 = vpop.f32.mrf.mxu0
        %4304 = vmatprep.mubr.bf16.mxu0 %v3898
        %4305 = vmatmul.mubr.bf16.gmra.mxu0 %v3897
        %v4306 = vpop.f32.mrf.mxu0
        %v4307 = vadd.f32 %v3982, %v4306
        %v4308 = vpop.f32.mrf.mxu0
        %v4309 = vpop.f32.mrf.mxu0
        %v4310 = vadd.f32 %v3982, %v4309
        %v4311 = vpop.f32.mrf.mxu0
        %4312 = vmatprep.mubr.bf16.mxu0 %v3902
        %4313 = vmatmul.mubr.bf16.gmra.mxu0 %v3901
        %v4314 = vpop.f32.mrf.mxu0
        %v4315 = vadd.f32 %v3982, %v4314
        %v4316 = vpop.f32.mrf.mxu0
        %v4317 = vpop.f32.mrf.mxu0
        %v4318 = vadd.f32 %v3982, %v4317
        %v4319 = vpop.f32.mrf.mxu0
        %4320 = vmatprep.mubr.bf16.mxu0 %v3906
        %4321 = vmatmul.mubr.bf16.gmra.mxu0 %v3905
        %v4322 = vpop.f32.mrf.mxu0
        %v4323 = vadd.f32 %v3982, %v4322
        %v4324 = vpop.f32.mrf.mxu0
        %v4325 = vpop.f32.mrf.mxu0
        %v4326 = vadd.f32 %v3982, %v4325
        %v4327 = vpop.f32.mrf.mxu0
        %4328 = vmatprep.mubr.bf16.mxu0 %v3910
        %4329 = vmatmul.mubr.bf16.gmra.mxu0 %v3909
        %v4330 = vpop.f32.mrf.mxu0
        %v4331 = vadd.f32 %v3982, %v4330
        %v4332 = vpop.f32.mrf.mxu0
        %v4333 = vpop.f32.mrf.mxu0
        %v4334 = vadd.f32 %v3982, %v4333
        %v4335 = vpop.f32.mrf.mxu0
        %4336 = vdwg.mxu0
        %4337 = vmatprep.subr.bf16.mxu0 0
        %4338 = vmatpush1.bf16.msra.mxu0 %v4135
        %4339 = vmatprep.subr.bf16.mxu0 0
        %4340 = vmatpush1.bf16.msra.mxu0 %v4134
        %4341 = vmatprep.subr.bf16.mxu0 0
        %4342 = vmatpush1.bf16.msra.mxu0 %v4133
        %4343 = vmatprep.subr.bf16.mxu0 0
        %4344 = vmatpush1.bf16.msra.mxu0 %v4132
        %4345 = vmatprep.subr.bf16.mxu0 0
        %4346 = vmatpush1.bf16.msra.mxu0 %v4131
        %4347 = vmatprep.subr.bf16.mxu0 0
        %4348 = vmatpush1.bf16.msra.mxu0 %v4130
        %4349 = vmatprep.subr.bf16.mxu0 0
        %4350 = vmatpush1.bf16.msra.mxu0 %v4129
        %4351 = vmatprep.subr.bf16.mxu0 0
        %4352 = vmatpush1.bf16.msra.mxu0 %v4128
        %4353 = vmatprep.subr.bf16.mxu0 0
        %4354 = vmatpush2.bf16.msra.mxu0 %v4143
        %4355 = vmatprep.subr.bf16.mxu0 0
        %4356 = vmatpush2.bf16.msra.mxu0 %v4142
        %4357 = vmatprep.subr.bf16.mxu0 0
        %4358 = vmatpush2.bf16.msra.mxu0 %v4141
        %4359 = vmatprep.subr.bf16.mxu0 0
        %4360 = vmatpush2.bf16.msra.mxu0 %v4140
        %4361 = vmatprep.subr.bf16.mxu0 0
        %4362 = vmatpush2.bf16.msra.mxu0 %v4139
        %4363 = vmatprep.subr.bf16.mxu0 0
        %4364 = vmatpush2.bf16.msra.mxu0 %v4138
        %4365 = vmatprep.subr.bf16.mxu0 0
        %4366 = vmatpush2.bf16.msra.mxu0 %v4137
        %4367 = vmatprep.subr.bf16.mxu0 0
        %4368 = vmatpush2.bf16.msra.mxu0 %v4136
        %4369 = vmatprep.mubr.bf16.mxu0 %v3852
        %4370 = vmatmul.mubr.bf16.gmra.mxu0 %v3851
        %v4371 = vpop.f32.mrf.mxu0
        %v4372 = vadd.f32 %v4211, %v4371
        %v4373 = vpop.f32.mrf.mxu0
        %v4374 = vpop.f32.mrf.mxu0
        %v4375 = vadd.f32 %v4214, %v4374
        %v4376 = vpop.f32.mrf.mxu0
        %4377 = vmatprep.mubr.bf16.mxu0 %v3856
        %4378 = vmatmul.mubr.bf16.gmra.mxu0 %v3855
        %v4379 = vpop.f32.mrf.mxu0
        %v4380 = vadd.f32 %v4219, %v4379
        %v4381 = vpop.f32.mrf.mxu0
        %v4382 = vpop.f32.mrf.mxu0
        %v4383 = vadd.f32 %v4222, %v4382
        %v4384 = vpop.f32.mrf.mxu0
        %4385 = vmatprep.mubr.bf16.mxu0 %v3860
        %4386 = vmatmul.mubr.bf16.gmra.mxu0 %v3859
        %v4387 = vpop.f32.mrf.mxu0
        %v4388 = vadd.f32 %v4227, %v4387
        %v4389 = vpop.f32.mrf.mxu0
        %v4390 = vpop.f32.mrf.mxu0
        %v4391 = vadd.f32 %v4230, %v4390
        %v4392 = vpop.f32.mrf.mxu0
        %4393 = vmatprep.mubr.bf16.mxu0 %v3864
        %4394 = vmatmul.mubr.bf16.gmra.mxu0 %v3863
        %v4395 = vpop.f32.mrf.mxu0
        %v4396 = vadd.f32 %v4235, %v4395
        %v4397 = vpop.f32.mrf.mxu0
        %v4398 = vpop.f32.mrf.mxu0
        %v4399 = vadd.f32 %v4238, %v4398
        %v4400 = vpop.f32.mrf.mxu0
        %4401 = vmatprep.mubr.bf16.mxu0 %v3868
        %4402 = vmatmul.mubr.bf16.gmra.mxu0 %v3867
        %v4403 = vpop.f32.mrf.mxu0
        %v4404 = vadd.f32 %v4243, %v4403
        %v4405 = vpop.f32.mrf.mxu0
        %v4406 = vpop.f32.mrf.mxu0
        %v4407 = vadd.f32 %v4246, %v4406
        %v4408 = vpop.f32.mrf.mxu0
        %4409 = vmatprep.mubr.bf16.mxu0 %v3872
        %4410 = vmatmul.mubr.bf16.gmra.mxu0 %v3871
        %v4411 = vpop.f32.mrf.mxu0
        %v4412 = vadd.f32 %v4251, %v4411
        %v4413 = vpop.f32.mrf.mxu0
        %v4414 = vpop.f32.mrf.mxu0
        %v4415 = vadd.f32 %v4254, %v4414
        %v4416 = vpop.f32.mrf.mxu0
        %4417 = vmatprep.mubr.bf16.mxu0 %v3876
        %4418 = vmatmul.mubr.bf16.gmra.mxu0 %v3875
        %v4419 = vpop.f32.mrf.mxu0
        %v4420 = vadd.f32 %v4259, %v4419
        %v4421 = vpop.f32.mrf.mxu0
        %v4422 = vpop.f32.mrf.mxu0
        %v4423 = vadd.f32 %v4262, %v4422
        %v4424 = vpop.f32.mrf.mxu0
        %4425 = vmatprep.mubr.bf16.mxu0 %v3880
        %4426 = vmatmul.mubr.bf16.gmra.mxu0 %v3879
        %v4427 = vpop.f32.mrf.mxu0
        %v4428 = vadd.f32 %v4267, %v4427
        %v4429 = vpop.f32.mrf.mxu0
        %v4430 = vpop.f32.mrf.mxu0
        %v4431 = vadd.f32 %v4270, %v4430
        %v4432 = vpop.f32.mrf.mxu0
        %4433 = vmatprep.mubr.bf16.mxu0 %v3884
        %4434 = vmatmul.mubr.bf16.gmra.mxu0 %v3883
        %v4435 = vpop.f32.mrf.mxu0
        %v4436 = vadd.f32 %v4275, %v4435
        %v4437 = vpop.f32.mrf.mxu0
        %v4438 = vpop.f32.mrf.mxu0
        %v4439 = vadd.f32 %v4278, %v4438
        %v4440 = vpop.f32.mrf.mxu0
        %4441 = vmatprep.mubr.bf16.mxu0 %v3888
        %4442 = vmatmul.mubr.bf16.gmra.mxu0 %v3887
        %v4443 = vpop.f32.mrf.mxu0
        %v4444 = vadd.f32 %v4283, %v4443
        %v4445 = vpop.f32.mrf.mxu0
        %v4446 = vpop.f32.mrf.mxu0
        %v4447 = vadd.f32 %v4286, %v4446
        %v4448 = vpop.f32.mrf.mxu0
        %4449 = vmatprep.mubr.bf16.mxu0 %v3892
        %4450 = vmatmul.mubr.bf16.gmra.mxu0 %v3891
        %v4451 = vpop.f32.mrf.mxu0
        %v4452 = vadd.f32 %v4291, %v4451
        %v4453 = vpop.f32.mrf.mxu0
        %v4454 = vpop.f32.mrf.mxu0
        %v4455 = vadd.f32 %v4294, %v4454
        %v4456 = vpop.f32.mrf.mxu0
        %4457 = vmatprep.mubr.bf16.mxu0 %v3896
        %4458 = vmatmul.mubr.bf16.gmra.mxu0 %v3895
        %v4459 = vpop.f32.mrf.mxu0
        %v4460 = vadd.f32 %v4299, %v4459
        %v4461 = vpop.f32.mrf.mxu0
        %v4462 = vpop.f32.mrf.mxu0
        %v4463 = vadd.f32 %v4302, %v4462
        %v4464 = vpop.f32.mrf.mxu0
        %4465 = vmatprep.mubr.bf16.mxu0 %v3900
        %4466 = vmatmul.mubr.bf16.gmra.mxu0 %v3899
        %v4467 = vpop.f32.mrf.mxu0
        %v4468 = vadd.f32 %v4307, %v4467
        %v4469 = vpop.f32.mrf.mxu0
        %v4470 = vpop.f32.mrf.mxu0
        %v4471 = vadd.f32 %v4310, %v4470
        %v4472 = vpop.f32.mrf.mxu0
        %4473 = vmatprep.mubr.bf16.mxu0 %v3904
        %4474 = vmatmul.mubr.bf16.gmra.mxu0 %v3903
        %v4475 = vpop.f32.mrf.mxu0
        %v4476 = vadd.f32 %v4315, %v4475
        %v4477 = vpop.f32.mrf.mxu0
        %v4478 = vpop.f32.mrf.mxu0
        %v4479 = vadd.f32 %v4318, %v4478
        %v4480 = vpop.f32.mrf.mxu0
        %4481 = vmatprep.mubr.bf16.mxu0 %v3908
        %4482 = vmatmul.mubr.bf16.gmra.mxu0 %v3907
        %v4483 = vpop.f32.mrf.mxu0
        %v4484 = vadd.f32 %v4323, %v4483
        %v4485 = vpop.f32.mrf.mxu0
        %v4486 = vpop.f32.mrf.mxu0
        %v4487 = vadd.f32 %v4326, %v4486
        %v4488 = vpop.f32.mrf.mxu0
        %4489 = vmatprep.mubr.bf16.mxu0 %v3912
        %4490 = vmatmul.mubr.bf16.gmra.mxu0 %v3911
        %v4491 = vpop.f32.mrf.mxu0
        %v4492 = vadd.f32 %v4331, %v4491
        %v4493 = vpop.f32.mrf.mxu0
        %v4494 = vpop.f32.mrf.mxu0
        %v4495 = vadd.f32 %v4334, %v4494
        %v4496 = vpop.f32.mrf.mxu0
        %4497 = vdwg.mxu0
        %4498 = vst [vmem:[%s493] sm:$0xff] %v4372
        %4499 = vst [vmem:[%s493 + $0x8] sm:$0xff] %v4375
        %4500 = vst [vmem:[%s493 + $0x10] sm:$0xff] %v4380
        %4501 = vst [vmem:[%s493 + $0x18] sm:$0xff] %v4383
        %4502 = vst [vmem:[%s493 + $0x20] sm:$0xff] %v4388
        %4503 = vst [vmem:[%s493 + $0x28] sm:$0xff] %v4391
        %4504 = vst [vmem:[%s493 + $0x30] sm:$0xff] %v4396
        %4505 = vst [vmem:[%s493 + $0x38] sm:$0xff] %v4399
        %4506 = vst [vmem:[%s493 + $0x40] sm:$0xff] %v4404
        %4507 = vst [vmem:[%s493 + $0x48] sm:$0xff] %v4407
        %4508 = vst [vmem:[%s493 + $0x50] sm:$0xff] %v4412
        %4509 = vst [vmem:[%s493 + $0x58] sm:$0xff] %v4415
        %4510 = vst [vmem:[%s493 + $0x60] sm:$0xff] %v4420
        %4511 = vst [vmem:[%s493 + $0x68] sm:$0xff] %v4423
        %4512 = vst [vmem:[%s493 + $0x70] sm:$0xff] %v4428
        %4513 = vst [vmem:[%s493 + $0x78] sm:$0xff] %v4431
        %4514 = vst [vmem:[%s493 + $0x80] sm:$0xff] %v4436
        %4515 = vst [vmem:[%s493 + $0x88] sm:$0xff] %v4439
        %4516 = vst [vmem:[%s493 + $0x90] sm:$0xff] %v4444
        %4517 = vst [vmem:[%s493 + $0x98] sm:$0xff] %v4447
        %4518 = vst [vmem:[%s493 + $0xa0] sm:$0xff] %v4452
        %4519 = vst [vmem:[%s493 + $0xa8] sm:$0xff] %v4455
        %4520 = vst [vmem:[%s493 + $0xb0] sm:$0xff] %v4460
        %4521 = vst [vmem:[%s493 + $0xb8] sm:$0xff] %v4463
        %4522 = vst [vmem:[%s493 + $0xc0] sm:$0xff] %v4468
        %4523 = vst [vmem:[%s493 + $0xc8] sm:$0xff] %v4471
        %4524 = vst [vmem:[%s493 + $0xd0] sm:$0xff] %v4476
        %4525 = vst [vmem:[%s493 + $0xd8] sm:$0xff] %v4479
        %4526 = vst [vmem:[%s493 + $0xe0] sm:$0xff] %v4484
        %4527 = vst [vmem:[%s493 + $0xe8] sm:$0xff] %v4487
        %4528 = vst [vmem:[%s493 + $0xf0] sm:$0xff] %v4492
        %4529 = vst [vmem:[%s493 + $0xf8] sm:$0xff] %v4495
        %s4530 = sand.u32 %s316, 1
        %s4531 = scalar_lea.sflag [#allocation4], %s4530
        %s4532 = sand.u32 %s316, 1
        %s4533 = smul.addr %s4532, 256
        %s4534 = scalar_lea.vmem [#allocation10], %s4533
        // Predicated region
        $region89: #{autoencoder_forward.1} parent=71 // pred_check
          %p4535 = pneg %p326
        $region90: #{autoencoder_forward.1} parent=71 // pred_check_branch
          %4537 = sbr.rel (%p4535) target = $region92
        $region91: #{autoencoder_forward.1} parent=71 // pred_region
          %s4538 = smul.u32 32, %s30
          %s4540 = ssub.s32 4096, 4096
          %4541 = vsyncadd %s4531, %s4540
          %s4542 = smul.addr %s4538, 128
          %s4543 = scalar_lea.hbm %s13, %s4542
          %s4544 = sshll.u32 %s4534, 4
          %s4545 = int_to_ptr.vmem [resolvable:$true] %s4544
          %4550 = dma.vmem_to_hbm [thread:$0]  %s4545, 4096, %s4543, %s4531, 128, 128, 8
        $region92: #{autoencoder_forward.1} parent=71 // pred_fallthru
          _
      $region72: #{autoencoder_forward.1} parent=5 // pred_fallthru
        _
      %p4551 = scmp.le.s32.totalorder 2, %s25
      // Predicated region
      $region93: #{autoencoder_forward.1} parent=5 // pred_check
        %p4552 = pneg %p4551
      $region94: #{autoencoder_forward.1} parent=5 // pred_check_branch
        %4554 = sbr.rel (%p4552) target = $region96
      $region95: #{autoencoder_forward.1} parent=5 // pred_region
        %s4555 = ssub.s32 %s25, 2
        // Predicated region
        $region97: #{autoencoder_forward.1} parent=95 // pred_check
          %p4556 = pneg %p332
        $region98: #{autoencoder_forward.1} parent=95 // pred_check_branch
          %4558 = sbr.rel (%p4556) target = $region100
        $region99: #{autoencoder_forward.1} parent=95 // pred_region
          %s4559 = sand.u32 %s317, 1
          %s4560 = scalar_lea.sflag [#allocation4], %s4559
          %s4561 = sand.u32 %s317, 1
          %s4562 = smul.addr %s4561, 256
          %s4563 = scalar_lea.vmem [#allocation10], %s4562
          %4564 = dma.done %s4560, 4096
        $region100: #{autoencoder_forward.1} parent=95 // pred_fallthru
          _
      $region96: #{autoencoder_forward.1} parent=5 // pred_fallthru
        _
    $region6: #{autoencoder_forward.1} parent=1 // loop_footer
      %s29 = sadd.s32 1, %s25
    $region7: #{autoencoder_forward.1} parent=1 // loop_footer_branch
      %24 = sbr.rel target = $region3
    $region8: #{autoencoder_forward.1} parent=1 // loop_exit
      _
    %4565 = vsyncpa [#allocation3], 1
    %s4566 = scalar_lea.sflag [#allocation3], 1
    %4567 = vsyncpa %s4566, 1
    %4568 = vsyncpa [#allocation6], 1
    %4569 = vsyncpa [#allocation9], 1
    %4570 = vsyncpa [#allocation4], 1
    %s4571 = scalar_lea.sflag [#allocation4], 1
    %4572 = vsyncpa %s4571, 1

</llo_original>
